<compile_context>
chip_gen: v6e
topology: v6e:2x2x1
jax: 0.10.0
libtpu: 0.0.40
codegen_flags: <defaults>
</compile_context>

<pallas_src>
import jax
import jax.numpy as jnp
from jax.experimental import pallas as pl
from jax.experimental.pallas import tpu as pltpu

N_EMBED = 384
HIDDEN = 4 * N_EMBED
DROPOUT_P = 0.2            # eval-mode dropout == identity (see TODO in kernel)

TM_MAX = 1024              # max rows per M tile
H_CHUNK = 512              # hidden-dim chunk (multiple of 128 lanes / 8 sublanes)


def ffwd_kernel(x_ref, w1_ref, b1_ref, w2_ref, b2_ref, o_ref):
    # x_ref:  (TM, C)        w1_ref: (C, 4C) bf16   b1_ref: (1, 4C) f32
    # w2_ref: (4C, C) bf16   b2_ref: (1, C)  f32    o_ref:  (TM, C)
    x = x_ref[...].astype(jnp.bfloat16)          # no-op if x already bf16
    H = w1_ref.shape[1]

    # f32 output accumulator for this M tile.
    y = jnp.zeros(o_ref.shape, jnp.float32)

    # Static (unrolled) loop over the hidden dim: keeps the live hidden
    # activation bounded to (TM, H_CHUNK) instead of (TM, 4C).
    for start in range(0, H, H_CHUNK):
        size = min(H_CHUNK, H - start)
        w1c = w1_ref[:, start:start + size]       # (C, size)  bf16, static slice
        b1c = b1_ref[:, start:start + size]       # (1, size)  f32
        w2c = w2_ref[start:start + size, :]       # (size, C)  bf16

        # Linear 1 chunk (bf16 MXU, f32 accumulate) + bias + ReLU (VPU).
        h = jnp.dot(x, w1c, preferred_element_type=jnp.float32)
        h = jnp.maximum(h + b1c, 0.0)

        # Linear 2 chunk contribution (bf16 MXU, f32 accumulate).
        y = y + jnp.dot(h.astype(jnp.bfloat16), w2c,
                        preferred_element_type=jnp.float32)

    y = y + b2_ref[...]

    # TODO(synk): training-mode dropout (p=0.2) would build a keep-mask with
    # pltpu.prng_seed + pltpu.prng_random_bits and scale by 1/(1-p) here;
    # eval-mode nn.Dropout is the identity.
    o_ref[...] = y.astype(o_ref.dtype)


def feed_forward(x, w1, b1, w2, b2, *, tm_max=TM_MAX):
    """x: (B, T, C); w1: (C, 4C), b1: (1, 4C), w2: (4C, C), b2: (1, C).

    Returns (B, T, C) in x.dtype (eval-mode FFN forward).
    """
    B, T, C = x.shape
    H = w1.shape[1]
    M = B * T

    # Balanced M tiling: fewest tiles of size <= tm_max, then prefer an even
    # tile count (v7x megacore split of the "parallel" axis); tiles are
    # multiples of 8 (sublane). M % TM != 0 is handled by Pallas partial
    # trailing blocks (masked stores), so no wrapper-side padding pass.
    num_tiles = pl.cdiv(M, tm_max)
    if num_tiles % 2 == 1 and M > 8:
        num_tiles += 1
    TM = max(8, ((pl.cdiv(M, num_tiles) + 7) // 8) * 8)
    TM = min(TM, tm_max)
    num_tiles = pl.cdiv(M, TM)

    x2d = x.reshape(M, C)

    # bf16 weights: halves weight DMA bytes and feeds the bf16-native MXU.
    w1b = w1.astype(jnp.bfloat16)
    w2b = w2.astype(jnp.bfloat16)

    cost = pl.CostEstimate(
        flops=4 * num_tiles * TM * C * H,          # two matmuls: 2*M*C*H each
        transcendentals=0,
        bytes_accessed=(x2d.size * x2d.dtype.itemsize
                        + w1b.size * 2 + w2b.size * 2
                        + b1.size * 4 + b2.size * 4
                        + M * C * x.dtype.itemsize),
    )

    # Resident operands: constant index_map, single-buffered (reclaims the
    # pointless double-buffer VMEM — mainly for v7x's 64 MiB/TC).
    resident = pl.Buffered(1)

    out2d = pl.pallas_call(
        ffwd_kernel,
        out_shape=jax.ShapeDtypeStruct((M, C), x.dtype),
        grid_spec=pltpu.PrefetchScalarGridSpec(
            num_scalar_prefetch=0,
            grid=(num_tiles,),
            in_specs=[
                pl.BlockSpec((TM, C), lambda i: (i, 0)),   # x tile: streams
                pl.BlockSpec((C, H), lambda i: (0, 0), pipeline_mode=resident),
                pl.BlockSpec((1, H), lambda i: (0, 0), pipeline_mode=resident),
                pl.BlockSpec((H, C), lambda i: (0, 0), pipeline_mode=resident),
                pl.BlockSpec((1, C), lambda i: (0, 0), pipeline_mode=resident),
            ],
            out_specs=pl.BlockSpec((TM, C), lambda i: (i, 0)),
        ),
        compiler_params=pltpu.CompilerParams(
            dimension_semantics=("parallel",),     # megacore split on v7x
            vmem_limit_bytes=48 * 1024 * 1024,     # safe on v7x (64 MiB/TC)
        ),
        cost_estimate=cost,
    )(x2d, w1b, b1, w2b, b2)

    return out2d.reshape(B, T, C)


def init_params(key, n_embed):
    """Deterministic parameter init mimicking nn.Linear's uniform init."""
    k1, k2, k3, k4 = jax.random.split(key, 4)
    hidden = 4 * n_embed
    bound1 = 1.0 / jnp.sqrt(n_embed)
    bound2 = 1.0 / jnp.sqrt(hidden)
    # stored as (in_features, out_features) so the kernel computes x @ W
    w1 = jax.random.uniform(k1, (n_embed, hidden), jnp.float32, -bound1, bound1)
    b1 = jax.random.uniform(k2, (1, hidden), jnp.float32, -bound1, bound1)
    w2 = jax.random.uniform(k3, (hidden, n_embed), jnp.float32, -bound2, bound2)
    b2 = jax.random.uniform(k4, (1, n_embed), jnp.float32, -bound2, bound2)
    return w1, b1, w2, b2


if __name__ == "__main__":
    key = jax.random.PRNGKey(0)
    kx, kp = jax.random.split(key)

    B, T, C = 2, 8, N_EMBED
    x = jax.random.normal(kx, (B, T, C), jnp.float32)
    w1, b1, w2, b2 = init_params(kp, C)

    out = jax.block_until_ready(feed_forward(x, w1, b1, w2, b2))
    assert out.shape == (B, T, C)

    # Reference 1: matched precision (bf16 matmul inputs, f32 accumulation).
    xb = x.reshape(-1, C).astype(jnp.bfloat16)
    h_ref = jnp.maximum(
        jnp.dot(xb, w1.astype(jnp.bfloat16), preferred_element_type=jnp.float32)
        + b1, 0.0)
    ref = jnp.dot(h_ref.astype(jnp.bfloat16), w2.astype(jnp.bfloat16),
                  preferred_element_type=jnp.float32) + b2
    ref = ref.reshape(B, T, C)
    assert jnp.allclose(out, ref, atol=1e-2, rtol=1e-2), (
        float(jnp.max(jnp.abs(out - ref))))

    # Reference 2: full f32 math, loose tolerance (bf16 matmul rounding).
    ref32 = (jnp.maximum(x.reshape(-1, C) @ w1 + b1, 0.0) @ w2 + b2)
    ref32 = ref32.reshape(B, T, C)
    assert jnp.allclose(out, ref32, atol=5e-2, rtol=5e-2), (
        float(jnp.max(jnp.abs(out - ref32))))

    print("KERNEL_OK")
</pallas_src>

<mosaic_0001>
module attributes {stable_mosaic.version = 11 : i64} {
  func.func @ffwd_kernel(%arg0: i32, %arg1: memref<8x384xf32, #tpu.memory_space<vmem>>, %arg2: memref<384x1536xbf16, #tpu.memory_space<vmem>>, %arg3: memref<1x1536xf32, #tpu.memory_space<vmem>>, %arg4: memref<1536x384xbf16, #tpu.memory_space<vmem>>, %arg5: memref<1x384xf32, #tpu.memory_space<vmem>>, %arg6: memref<8x384xf32, #tpu.memory_space<vmem>>) attributes {dimension_semantics = [#tpu.dimension_semantics<parallel>], iteration_bounds = array<i64: 2>, scalar_prefetch = 0 : i64, scratch_operands = 0 : i64, tpu.core_type = #tpu.core_type<tc>, window_params = [{transform_indices = @transform_0, window_bounds = array<i64: 8, 384>}, {pipeline_mode = #tpu.pipeline_mode<synchronous>, transform_indices = @transform_1, window_bounds = array<i64: 384, 1536>}, {pipeline_mode = #tpu.pipeline_mode<synchronous>, transform_indices = @transform_2, window_bounds = array<i64: 1, 1536>}, {pipeline_mode = #tpu.pipeline_mode<synchronous>, transform_indices = @transform_3, window_bounds = array<i64: 1536, 384>}, {pipeline_mode = #tpu.pipeline_mode<synchronous>, transform_indices = @transform_4, window_bounds = array<i64: 1, 384>}, {transform_indices = @transform_5, window_bounds = array<i64: 8, 384>}]} {
    %c0 = arith.constant 0 : index
    %c0_0 = arith.constant 0 : index
    %0 = vector.load %arg1[%c0, %c0_0] : memref<8x384xf32, #tpu.memory_space<vmem>>, vector<8x384xf32>
    %1 = arith.truncf %0 : vector<8x384xf32> to vector<8x384xbf16>
    %cst = arith.constant 0.000000e+00 : f32
    %2 = vector.broadcast %cst : f32 to vector<8x384xf32>
    %c0_1 = arith.constant 0 : index
    %c0_2 = arith.constant 0 : index
    %3 = vector.load %arg2[%c0_1, %c0_2] : memref<384x1536xbf16, #tpu.memory_space<vmem>>, vector<384x512xbf16>
    %c0_3 = arith.constant 0 : index
    %c0_4 = arith.constant 0 : index
    %4 = vector.load %arg3[%c0_3, %c0_4] : memref<1x1536xf32, #tpu.memory_space<vmem>>, vector<1x512xf32>
    %c0_5 = arith.constant 0 : index
    %c0_6 = arith.constant 0 : index
    %5 = vector.load %arg4[%c0_5, %c0_6] : memref<1536x384xbf16, #tpu.memory_space<vmem>>, vector<512x384xbf16>
    %cst_7 = arith.constant dense<0.000000e+00> : vector<8x512xf32>
    %6 = tpu.matmul %1, %3, %cst_7 {dimension_numbers = #tpu.dot_dimension_numbers<[1], [0], [0], [1], [0, 0, 1, 1], [], []>} : vector<8x384xbf16>, vector<384x512xbf16>, vector<8x512xf32> -> vector<8x512xf32>
    %7 = vector.broadcast %4 : vector<1x512xf32> to vector<8x512xf32>
    %8 = arith.addf %6, %7 : vector<8x512xf32>
    %cst_8 = arith.constant 0.000000e+00 : f32
    %9 = vector.broadcast %cst_8 : f32 to vector<8x512xf32>
    %10 = arith.maximumf %8, %9 : vector<8x512xf32>
    %11 = arith.truncf %10 : vector<8x512xf32> to vector<8x512xbf16>
    %cst_9 = arith.constant dense<0.000000e+00> : vector<8x384xf32>
    %12 = tpu.matmul %11, %5, %cst_9 {dimension_numbers = #tpu.dot_dimension_numbers<[1], [0], [0], [1], [0, 0, 1, 1], [], []>} : vector<8x512xbf16>, vector<512x384xbf16>, vector<8x384xf32> -> vector<8x384xf32>
    %13 = arith.addf %2, %12 : vector<8x384xf32>
    %c0_10 = arith.constant 0 : index
    %c512 = arith.constant 512 : index
    %14 = vector.load %arg2[%c0_10, %c512] : memref<384x1536xbf16, #tpu.memory_space<vmem>>, vector<384x512xbf16>
    %c0_11 = arith.constant 0 : index
    %c512_12 = arith.constant 512 : index
    %15 = vector.load %arg3[%c0_11, %c512_12] : memref<1x1536xf32, #tpu.memory_space<vmem>>, vector<1x512xf32>
    %c512_13 = arith.constant 512 : index
    %c0_14 = arith.constant 0 : index
    %16 = vector.load %arg4[%c512_13, %c0_14] : memref<1536x384xbf16, #tpu.memory_space<vmem>>, vector<512x384xbf16>
    %cst_15 = arith.constant dense<0.000000e+00> : vector<8x512xf32>
    %17 = tpu.matmul %1, %14, %cst_15 {dimension_numbers = #tpu.dot_dimension_numbers<[1], [0], [0], [1], [0, 0, 1, 1], [], []>} : vector<8x384xbf16>, vector<384x512xbf16>, vector<8x512xf32> -> vector<8x512xf32>
    %18 = vector.broadcast %15 : vector<1x512xf32> to vector<8x512xf32>
    %19 = arith.addf %17, %18 : vector<8x512xf32>
    %cst_16 = arith.constant 0.000000e+00 : f32
    %20 = vector.broadcast %cst_16 : f32 to vector<8x512xf32>
    %21 = arith.maximumf %19, %20 : vector<8x512xf32>
    %22 = arith.truncf %21 : vector<8x512xf32> to vector<8x512xbf16>
    %cst_17 = arith.constant dense<0.000000e+00> : vector<8x384xf32>
    %23 = tpu.matmul %22, %16, %cst_17 {dimension_numbers = #tpu.dot_dimension_numbers<[1], [0], [0], [1], [0, 0, 1, 1], [], []>} : vector<8x512xbf16>, vector<512x384xbf16>, vector<8x384xf32> -> vector<8x384xf32>
    %24 = arith.addf %13, %23 : vector<8x384xf32>
    %c0_18 = arith.constant 0 : index
    %c1024 = arith.constant 1024 : index
    %25 = vector.load %arg2[%c0_18, %c1024] : memref<384x1536xbf16, #tpu.memory_space<vmem>>, vector<384x512xbf16>
    %c0_19 = arith.constant 0 : index
    %c1024_20 = arith.constant 1024 : index
    %26 = vector.load %arg3[%c0_19, %c1024_20] : memref<1x1536xf32, #tpu.memory_space<vmem>>, vector<1x512xf32>
    %c1024_21 = arith.constant 1024 : index
    %c0_22 = arith.constant 0 : index
    %27 = vector.load %arg4[%c1024_21, %c0_22] : memref<1536x384xbf16, #tpu.memory_space<vmem>>, vector<512x384xbf16>
    %cst_23 = arith.constant dense<0.000000e+00> : vector<8x512xf32>
    %28 = tpu.matmul %1, %25, %cst_23 {dimension_numbers = #tpu.dot_dimension_numbers<[1], [0], [0], [1], [0, 0, 1, 1], [], []>} : vector<8x384xbf16>, vector<384x512xbf16>, vector<8x512xf32> -> vector<8x512xf32>
    %29 = vector.broadcast %26 : vector<1x512xf32> to vector<8x512xf32>
    %30 = arith.addf %28, %29 : vector<8x512xf32>
    %cst_24 = arith.constant 0.000000e+00 : f32
    %31 = vector.broadcast %cst_24 : f32 to vector<8x512xf32>
    %32 = arith.maximumf %30, %31 : vector<8x512xf32>
    %33 = arith.truncf %32 : vector<8x512xf32> to vector<8x512xbf16>
    %cst_25 = arith.constant dense<0.000000e+00> : vector<8x384xf32>
    %34 = tpu.matmul %33, %27, %cst_25 {dimension_numbers = #tpu.dot_dimension_numbers<[1], [0], [0], [1], [0, 0, 1, 1], [], []>} : vector<8x512xbf16>, vector<512x384xbf16>, vector<8x384xf32> -> vector<8x384xf32>
    %35 = arith.addf %24, %34 : vector<8x384xf32>
    %c0_26 = arith.constant 0 : index
    %c0_27 = arith.constant 0 : index
    %36 = vector.load %arg5[%c0_26, %c0_27] : memref<1x384xf32, #tpu.memory_space<vmem>>, vector<1x384xf32>
    %37 = vector.broadcast %36 : vector<1x384xf32> to vector<8x384xf32>
    %38 = arith.addf %35, %37 : vector<8x384xf32>
    %c0_28 = arith.constant 0 : index
    %c0_29 = arith.constant 0 : index
    %39 = vector.load %arg6[%c0_28, %c0_29] : memref<8x384xf32, #tpu.memory_space<vmem>>, vector<8x384xf32>
    tpu.vector_store %arg6[%c0_28, %c0_29], %38 {strides = array<i32>} : memref<8x384xf32, #tpu.memory_space<vmem>>, vector<8x384xf32>,
    return
  }
  func.func @transform_0(%arg0: i32) -> (i32, i32) {
    %c0_i32 = arith.constant 0 : i32
    %c0_i32_0 = arith.constant 0 : i32
    return %arg0, %c0_i32 : i32, i32
  }
  func.func @transform_1(%arg0: i32) -> (i32, i32) {
    %c0_i32 = arith.constant 0 : i32
    %c0_i32_0 = arith.constant 0 : i32
    %c0_i32_1 = arith.constant 0 : i32
    return %c0_i32, %c0_i32_0 : i32, i32
  }
  func.func @transform_2(%arg0: i32) -> (i32, i32) {
    %c0_i32 = arith.constant 0 : i32
    %c0_i32_0 = arith.constant 0 : i32
    %c0_i32_1 = arith.constant 0 : i32
    return %c0_i32, %c0_i32_0 : i32, i32
  }
  func.func @transform_3(%arg0: i32) -> (i32, i32) {
    %c0_i32 = arith.constant 0 : i32
    %c0_i32_0 = arith.constant 0 : i32
    %c0_i32_1 = arith.constant 0 : i32
    return %c0_i32, %c0_i32_0 : i32, i32
  }
  func.func @transform_4(%arg0: i32) -> (i32, i32) {
    %c0_i32 = arith.constant 0 : i32
    %c0_i32_0 = arith.constant 0 : i32
    %c0_i32_1 = arith.constant 0 : i32
    return %c0_i32, %c0_i32_0 : i32, i32
  }
  func.func @transform_5(%arg0: i32) -> (i32, i32) {
    %c0_i32 = arith.constant 0 : i32
    %c0_i32_0 = arith.constant 0 : i32
    return %arg0, %c0_i32 : i32, i32
  }
}

</mosaic_0001>

<llo_original>
// kernel: tpu_custom_call.1
$region0: #{tpu_custom_call.1}
  #allocation0 [shape = 'u32[]', space=smem, size = 0x4, offset = 0x4, fixed_abs, tag = 'smem constant byte address 0x4 - core index']
  #allocation1 [shape = 'u32[144,128]{1,0:T(1,128)}', space=vmem, size = 0x12000, scoped, tag = 'internal scratch']
  %s0 = inlined_call_operand.hbm [shape: f32[16,384], index: 0, kind: input, shape index: {}]
  %s1 = inlined_call_operand.hbm [shape: bf16[384,1536], index: 1, kind: input, shape index: {}]
  %s2 = inlined_call_operand.hbm [shape: f32[1,1536], index: 2, kind: input, shape index: {}]
  %s3 = inlined_call_operand.hbm [shape: bf16[1536,384], index: 3, kind: input, shape index: {}]
  %s4 = inlined_call_operand.hbm [shape: f32[1,384], index: 4, kind: input, shape index: {}]
  %s5 = inlined_call_operand.hbm [shape: f32[16,384], index: 5, kind: output, shape index: {}]
  %s6 = sld [smem:[#allocation0]]
  $region73: #{tpu_custom_call.1} parent=0
    _
  %s8 = ssub.s32 1, %s6
  %s9 = scalar_select 0, %s8, %s6
  $region1: #{tpu_custom_call.1} parent=0
    #allocation2 [shape = 'u8[24576]{0}', space=vmem, size = 0x6000, scoped, tag = 'input window, operand 0']
    #allocation3 [shape = 's32[2]{0}', space=sflag, size = 0x8, scoped, tag = 'scoped memory for tpu_custom_call.1']
    #allocation4 [shape = 's32[2]{0}', space=sflag, size = 0x8, scoped, tag = 'scoped memory for tpu_custom_call.1']
    #allocation5 [shape = 'u8[1179648]{0}', space=vmem, size = 0x120000, scoped, tag = 'input window, operand 1, single buffered']
    #allocation6 [shape = 's32[1]{0}', space=sflag, size = 0x4, scoped, tag = 'scoped memory for tpu_custom_call.1']
    #allocation7 [shape = 'u8[6144]{0}', space=vmem, size = 0x1800, scoped, tag = 'input window, operand 2, single buffered']
    #allocation8 [shape = 'u8[1179648]{0}', space=vmem, size = 0x120000, scoped, tag = 'input window, operand 3, single buffered']
    #allocation9 [shape = 's32[1]{0}', space=sflag, size = 0x4, scoped, tag = 'scoped memory for tpu_custom_call.1']
    #allocation10 [shape = 'u8[1536]{0}', space=vmem, size = 0x800, scoped, tag = 'input window, operand 4, single buffered']
    #allocation11 [shape = 'u8[24576]{0}', space=vmem, size = 0x6000, scoped, tag = 'output window, operand 0']
    %10 = vsyncpa [#allocation3], 0
    %s11 = scalar_lea.sflag [#allocation3], 1
    %12 = vsyncpa %s11, 0
    %13 = vsyncpa [#allocation6], 0
    %14 = vsyncpa [#allocation9], 0
    %15 = vsyncpa [#allocation4], 0
    %s16 = scalar_lea.sflag [#allocation4], 1
    %17 = vsyncpa %s16, 0
    loop: start=0, step=1, limit=4
    $region2: #{tpu_custom_call.1} parent=1 // loop_pre_header
      _
    $region3: #{tpu_custom_call.1} parent=1 // loop_header
      %s19 = sphi 0, %s23
      %p20 = scmp.ge.s32.totalorder %s19, 4
      %s29 = sphi 0, %s31
      %s32 = sphi 0, %s29
      %s33 = sphi 0, %s32
      %s49 = sphi 0, %s33
      %s53 = sphi 0, %s53
      %s55 = sphi 0, %s53
      %s56 = sphi 0, %s55
      %s70 = sphi 0, %s56
      %s74 = sphi 0, %s74
      %s76 = sphi 0, %s74
      %s77 = sphi 0, %s76
      %s91 = sphi 0, %s77
      %s95 = sphi 0, %s95
      %s97 = sphi 0, %s95
      %s98 = sphi 0, %s97
      %s112 = sphi 0, %s98
      %s116 = sphi 0, %s116
      %s118 = sphi 0, %s116
      %s119 = sphi 0, %s118
      %s133 = sphi 0, %s119
      %s139 = sphi 0, %s141
      %s142 = sphi 0, %s139
      %s143 = sphi 0, %s142
      %s159 = sphi 0, %s143
    $region4: #{tpu_custom_call.1} parent=1 // loop_header_branch
      %22 = sbr.rel (%p20) target = $region8
    $region5: #{tpu_custom_call.1} parent=1 // loop_body
      %s24 = ssub.s32 %s19, 1
      %s25 = ssub.s32 %s19, 2
      %s26 = sadd.s32 %s19, 1
      %s27 = ssub.s32 %s19, %s26
      %p28 = scmp.eq.s32.totalorder %s27, 0
      %s30 = sadd.s32 %s29, 1
      %s31 = scalar_select %p28, %s29, %s30
      %p34 = pneg %p28
      %p35 = scmp.eq.s32.totalorder %s19, 1
      %p36 = por %p34, %p35
      %p37 = scmp.ne.s32.totalorder %s29, %s32
      %p38 = scmp.eq.s32.totalorder %s19, 0
      %p39 = por %p37, %p38
      %p40 = scmp.ne.s32.totalorder %s29, %s32
      %p41 = scmp.eq.s32.totalorder %s24, 1
      %p42 = por %p40, %p41
      %p43 = scmp.ne.s32.totalorder %s32, %s33
      %p44 = scmp.eq.s32.totalorder %s24, 0
      %p45 = por %p43, %p44
      %p46 = scmp.ne.s32.totalorder %s32, %s33
      %p47 = scmp.eq.s32.totalorder %s25, 1
      %p48 = por %p46, %p47
      %p50 = scmp.ne.s32.totalorder %s33, %s49
      %p51 = scmp.eq.s32.totalorder %s25, 0
      %p52 = por %p50, %p51
      %s54 = sadd.s32 %s53, 1
      %p57 = scmp.eq.s32.totalorder %s19, 1
      %p58 = scmp.ne.s32.totalorder %s53, %s55
      %p59 = scmp.eq.s32.totalorder %s19, 0
      %p60 = por %p58, %p59
      %p61 = scmp.ne.s32.totalorder %s53, %s55
      %p62 = scmp.eq.s32.totalorder %s24, 1
      %p63 = por %p61, %p62
      %p64 = scmp.ne.s32.totalorder %s55, %s56
      %p65 = scmp.eq.s32.totalorder %s24, 0
      %p66 = por %p64, %p65
      %p67 = scmp.ne.s32.totalorder %s55, %s56
      %p68 = scmp.eq.s32.totalorder %s25, 1
      %p69 = por %p67, %p68
      %p71 = scmp.ne.s32.totalorder %s56, %s70
      %p72 = scmp.eq.s32.totalorder %s25, 0
      %p73 = por %p71, %p72
      %s75 = sadd.s32 %s74, 1
      %p78 = scmp.eq.s32.totalorder %s19, 1
      %p79 = scmp.ne.s32.totalorder %s74, %s76
      %p80 = scmp.eq.s32.totalorder %s19, 0
      %p81 = por %p79, %p80
      %p82 = scmp.ne.s32.totalorder %s74, %s76
      %p83 = scmp.eq.s32.totalorder %s24, 1
      %p84 = por %p82, %p83
      %p85 = scmp.ne.s32.totalorder %s76, %s77
      %p86 = scmp.eq.s32.totalorder %s24, 0
      %p87 = por %p85, %p86
      %p88 = scmp.ne.s32.totalorder %s76, %s77
      %p89 = scmp.eq.s32.totalorder %s25, 1
      %p90 = por %p88, %p89
      %p92 = scmp.ne.s32.totalorder %s77, %s91
      %p93 = scmp.eq.s32.totalorder %s25, 0
      %p94 = por %p92, %p93
      %s96 = sadd.s32 %s95, 1
      %p99 = scmp.eq.s32.totalorder %s19, 1
      %p100 = scmp.ne.s32.totalorder %s95, %s97
      %p101 = scmp.eq.s32.totalorder %s19, 0
      %p102 = por %p100, %p101
      %p103 = scmp.ne.s32.totalorder %s95, %s97
      %p104 = scmp.eq.s32.totalorder %s24, 1
      %p105 = por %p103, %p104
      %p106 = scmp.ne.s32.totalorder %s97, %s98
      %p107 = scmp.eq.s32.totalorder %s24, 0
      %p108 = por %p106, %p107
      %p109 = scmp.ne.s32.totalorder %s97, %s98
      %p110 = scmp.eq.s32.totalorder %s25, 1
      %p111 = por %p109, %p110
      %p113 = scmp.ne.s32.totalorder %s98, %s112
      %p114 = scmp.eq.s32.totalorder %s25, 0
      %p115 = por %p113, %p114
      %s117 = sadd.s32 %s116, 1
      %p120 = scmp.eq.s32.totalorder %s19, 1
      %p121 = scmp.ne.s32.totalorder %s116, %s118
      %p122 = scmp.eq.s32.totalorder %s19, 0
      %p123 = por %p121, %p122
      %p124 = scmp.ne.s32.totalorder %s116, %s118
      %p125 = scmp.eq.s32.totalorder %s24, 1
      %p126 = por %p124, %p125
      %p127 = scmp.ne.s32.totalorder %s118, %s119
      %p128 = scmp.eq.s32.totalorder %s24, 0
      %p129 = por %p127, %p128
      %p130 = scmp.ne.s32.totalorder %s118, %s119
      %p131 = scmp.eq.s32.totalorder %s25, 1
      %p132 = por %p130, %p131
      %p134 = scmp.ne.s32.totalorder %s119, %s133
      %p135 = scmp.eq.s32.totalorder %s25, 0
      %p136 = por %p134, %p135
      %s137 = ssub.s32 %s19, %s26
      %p138 = scmp.eq.s32.totalorder %s137, 0
      %s140 = sadd.s32 %s139, 1
      %s141 = scalar_select %p138, %s139, %s140
      %p144 = pneg %p138
      %p145 = scmp.eq.s32.totalorder %s19, 1
      %p146 = por %p144, %p145
      %p147 = scmp.ne.s32.totalorder %s139, %s142
      %p148 = scmp.eq.s32.totalorder %s19, 0
      %p149 = por %p147, %p148
      %p150 = scmp.ne.s32.totalorder %s139, %s142
      %p151 = scmp.eq.s32.totalorder %s24, 1
      %p152 = por %p150, %p151
      %p153 = scmp.ne.s32.totalorder %s142, %s143
      %p154 = scmp.eq.s32.totalorder %s24, 0
      %p155 = por %p153, %p154
      %p156 = scmp.ne.s32.totalorder %s142, %s143
      %p157 = scmp.eq.s32.totalorder %s25, 1
      %p158 = por %p156, %p157
      %p160 = scmp.ne.s32.totalorder %s143, %s159
      %p161 = scmp.eq.s32.totalorder %s25, 0
      %p162 = por %p160, %p161
      %p163 = scmp.le.s32.totalorder 1, %s19
      %p164 = scmp.lt.s32.totalorder %s19, 3
      %p165 = pnand %p163, %p164
      %p166 = pneg %p165
      // Predicated region
      $region9: #{tpu_custom_call.1} parent=5 // pred_check
        _
      $region10: #{tpu_custom_call.1} parent=5 // pred_check_branch
        %168 = sbr.rel (%p165) target = $region12
      $region11: #{tpu_custom_call.1} parent=5 // pred_region
        %s169 = ssub.s32 %s19, 1
        // Predicated region
        $region13: #{tpu_custom_call.1} parent=11 // pred_check
          %p170 = pneg %p66
        $region14: #{tpu_custom_call.1} parent=11 // pred_check_branch
          %172 = sbr.rel (%p170) target = $region16
        $region15: #{tpu_custom_call.1} parent=11 // pred_region
          %s174 = ssub.s32 36864, 36864
          %175 = vsyncadd [#allocation6], %s174
          %s176 = sshll.u32 [#allocation5], 4
          %s177 = int_to_ptr.vmem [resolvable:$true] %s176
          %182 = dma.hbm_to_vmem [thread:$0]  %s1, 36864, %s177, [#allocation6], 768, 768, 48
        $region16: #{tpu_custom_call.1} parent=11 // pred_fallthru
          _
        // Predicated region
        $region17: #{tpu_custom_call.1} parent=11 // pred_check
          %p183 = pneg %p87
        $region18: #{tpu_custom_call.1} parent=11 // pred_check_branch
          %185 = sbr.rel (%p183) target = $region20
        $region19: #{tpu_custom_call.1} parent=11 // pred_region
          %s187 = ssub.s32 192, 192
          %188 = vsyncadd [#allocation6], %s187
          %s190 = sshll.u32 [#allocation7], 4
          %s191 = int_to_ptr.vmem [resolvable:$true] %s190
          %193 = dma.hbm_to_vmem [thread:$0]  %s2, 192, %s191, [#allocation6]
        $region20: #{tpu_custom_call.1} parent=11 // pred_fallthru
          _
        // Predicated region
        $region21: #{tpu_custom_call.1} parent=11 // pred_check
          %p194 = pneg %p108
        $region22: #{tpu_custom_call.1} parent=11 // pred_check_branch
          %196 = sbr.rel (%p194) target = $region24
        $region23: #{tpu_custom_call.1} parent=11 // pred_region
          %s198 = ssub.s32 36864, 36864
          %199 = vsyncadd [#allocation9], %s198
          %s200 = sshll.u32 [#allocation8], 4
          %s201 = int_to_ptr.vmem [resolvable:$true] %s200
          %206 = dma.hbm_to_vmem [thread:$0]  %s3, 36864, %s201, [#allocation9], 192, 192, 12
        $region24: #{tpu_custom_call.1} parent=11 // pred_fallthru
          _
        // Predicated region
        $region25: #{tpu_custom_call.1} parent=11 // pred_check
          %p207 = pneg %p129
        $region26: #{tpu_custom_call.1} parent=11 // pred_check_branch
          %209 = sbr.rel (%p207) target = $region28
        $region27: #{tpu_custom_call.1} parent=11 // pred_region
          %s211 = ssub.s32 48, 48
          %212 = vsyncadd [#allocation9], %s211
          %s214 = sshll.u32 [#allocation10], 4
          %s215 = int_to_ptr.vmem [resolvable:$true] %s214
          %217 = dma.hbm_to_vmem [thread:$0]  %s4, 48, %s215, [#allocation9]
        $region28: #{tpu_custom_call.1} parent=11 // pred_fallthru
          _
      $region12: #{tpu_custom_call.1} parent=5 // pred_fallthru
        _
      %p218 = scmp.lt.s32.totalorder %s19, 2
      // Predicated region
      $region29: #{tpu_custom_call.1} parent=5 // pred_check
        %p219 = pneg %p218
      $region30: #{tpu_custom_call.1} parent=5 // pred_check_branch
        %221 = sbr.rel (%p219) target = $region32
      $region31: #{tpu_custom_call.1} parent=5 // pred_region
        // Predicated region
        $region33: #{tpu_custom_call.1} parent=31 // pred_check
          %p222 = pneg %p39
        $region34: #{tpu_custom_call.1} parent=31 // pred_check_branch
          %224 = sbr.rel (%p222) target = $region36
        $region35: #{tpu_custom_call.1} parent=31 // pred_region
          %s225 = sand.u32 %s29, 1
          %s226 = scalar_lea.sflag [#allocation3], %s225
          %s227 = sand.u32 %s29, 1
          %s228 = smul.addr %s227, 24
          %s229 = scalar_lea.vmem [#allocation2], %s228
          %s231 = ssub.s32 384, 384
          %232 = vsyncadd %s226, %s231
          %s233 = smul.addr %s19, 3
          %s234 = smul.addr %s233, 128
          %s235 = scalar_lea.hbm %s0, %s234
          %s237 = sshll.u32 %s229, 4
          %s238 = int_to_ptr.vmem [resolvable:$true] %s237
          %240 = dma.hbm_to_vmem [thread:$0]  %s235, 384, %s238, %s226
        $region36: #{tpu_custom_call.1} parent=31 // pred_fallthru
          _
      $region32: #{tpu_custom_call.1} parent=5 // pred_fallthru
        _
      %p241 = scmp.le.s32.totalorder 1, %s19
      %p242 = scmp.lt.s32.totalorder %s19, 3
      %p243 = pnand %p241, %p242
      %p244 = pneg %p243
      // Predicated region
      $region37: #{tpu_custom_call.1} parent=5 // pred_check
        _
      $region38: #{tpu_custom_call.1} parent=5 // pred_check_branch
        %246 = sbr.rel (%p243) target = $region40
      $region39: #{tpu_custom_call.1} parent=5 // pred_region
        %s247 = ssub.s32 %s19, 1
        %s248 = sand.u32 %s32, 1
        %s249 = scalar_lea.sflag [#allocation3], %s248
        %s250 = sand.u32 %s32, 1
        %s251 = smul.addr %s250, 24
        %s252 = scalar_lea.vmem [#allocation2], %s251
        // Predicated region
        $region41: #{tpu_custom_call.1} parent=39 // pred_check
          %p253 = pneg %p45
        $region42: #{tpu_custom_call.1} parent=39 // pred_check_branch
          %255 = sbr.rel (%p253) target = $region44
        $region43: #{tpu_custom_call.1} parent=39 // pred_region
          %256 = dma.done %s249, 384
        $region44: #{tpu_custom_call.1} parent=39 // pred_fallthru
          _
        // Predicated region
        $region45: #{tpu_custom_call.1} parent=39 // pred_check
          %p257 = pneg %p66
        $region46: #{tpu_custom_call.1} parent=39 // pred_check_branch
          %259 = sbr.rel (%p257) target = $region48
        $region47: #{tpu_custom_call.1} parent=39 // pred_region
          %260 = dma.done [#allocation6], 36864
        $region48: #{tpu_custom_call.1} parent=39 // pred_fallthru
          _
        // Predicated region
        $region49: #{tpu_custom_call.1} parent=39 // pred_check
          %p261 = pneg %p87
        $region50: #{tpu_custom_call.1} parent=39 // pred_check_branch
          %263 = sbr.rel (%p261) target = $region52
        $region51: #{tpu_custom_call.1} parent=39 // pred_region
          %264 = dma.done [#allocation6], 192
        $region52: #{tpu_custom_call.1} parent=39 // pred_fallthru
          _
        // Predicated region
        $region53: #{tpu_custom_call.1} parent=39 // pred_check
          %p265 = pneg %p108
        $region54: #{tpu_custom_call.1} parent=39 // pred_check_branch
          %267 = sbr.rel (%p265) target = $region56
        $region55: #{tpu_custom_call.1} parent=39 // pred_region
          %268 = dma.done [#allocation9], 36864
        $region56: #{tpu_custom_call.1} parent=39 // pred_fallthru
          _
        // Predicated region
        $region57: #{tpu_custom_call.1} parent=39 // pred_check
          %p269 = pneg %p129
        $region58: #{tpu_custom_call.1} parent=39 // pred_check_branch
          %271 = sbr.rel (%p269) target = $region60
        $region59: #{tpu_custom_call.1} parent=39 // pred_region
          %272 = dma.done [#allocation9], 48
        $region60: #{tpu_custom_call.1} parent=39 // pred_fallthru
          _
        %s273 = sand.u32 %s32, 1
        %s274 = scalar_lea.sflag [#allocation3], %s273
        %s275 = sand.u32 %s32, 1
        %s276 = smul.addr %s275, 24
        %s277 = scalar_lea.vmem [#allocation2], %s276
        %p278 = pneg %p45
        %p279 = pneg %p42
        %p280 = pneg %p66
        %p281 = pneg %p63
        %p282 = pneg %p87
        %p283 = pneg %p84
        %p284 = pneg %p108
        %p285 = pneg %p105
        %p286 = pneg %p129
        %p287 = pneg %p126
        %p288 = pneg %p155
        %p289 = pneg %p152
        %s290 = sand.u32 %s142, 1
        %s291 = scalar_lea.sflag [#allocation4], %s290
        %s292 = sand.u32 %s142, 1
        %s293 = smul.addr %s292, 24
        %s294 = scalar_lea.vmem [#allocation11], %s293
        %v296 = vld [vmem:[%s252] sm:$0xff]
        %v297 = vld [vmem:[%s252 + $0x8] sm:$0xff]
        %v298 = vld [vmem:[%s252 + $0x10] sm:$0xff]
        %v299 = vpack.c.bf16 %v296, %v296
        %v300 = vpack.c.bf16 %v297, %v297
        %v301 = vpack.c.bf16 %v298, %v298
        %v302 = vld [vmem:[#allocation5] sm:$0xff]
        %v303 = vld [vmem:[#allocation5 + $0x8] sm:$0xff]
        %v304 = vld [vmem:[#allocation5 + $0x30] sm:$0xff]
        %v305 = vld [vmem:[#allocation5 + $0x38] sm:$0xff]
        %v306 = vld [vmem:[#allocation5 + $0x60] sm:$0xff]
        %v307 = vld [vmem:[#allocation5 + $0x68] sm:$0xff]
        %v308 = vld [vmem:[#allocation5 + $0x90] sm:$0xff]
        %v309 = vld [vmem:[#allocation5 + $0x98] sm:$0xff]
        %v310 = vld [vmem:[#allocation5 + $0xc0] sm:$0xff]
        %v311 = vld [vmem:[#allocation5 + $0xc8] sm:$0xff]
        %v312 = vld [vmem:[#allocation5 + $0xf0] sm:$0xff]
        %v313 = vld [vmem:[#allocation5 + $0xf8] sm:$0xff]
        %v314 = vld [vmem:[#allocation5 + $0x120] sm:$0xff]
        %v315 = vld [vmem:[#allocation5 + $0x128] sm:$0xff]
        %v316 = vld [vmem:[#allocation5 + $0x150] sm:$0xff]
        %v317 = vld [vmem:[#allocation5 + $0x158] sm:$0xff]
        %v318 = vld [vmem:[#allocation5 + $0x180] sm:$0xff]
        %v319 = vld [vmem:[#allocation5 + $0x188] sm:$0xff]
        %v320 = vld [vmem:[#allocation5 + $0x1b0] sm:$0xff]
        %v321 = vld [vmem:[#allocation5 + $0x1b8] sm:$0xff]
        %v322 = vld [vmem:[#allocation5 + $0x1e0] sm:$0xff]
        %v323 = vld [vmem:[#allocation5 + $0x1e8] sm:$0xff]
        %v324 = vld [vmem:[#allocation5 + $0x210] sm:$0xff]
        %v325 = vld [vmem:[#allocation5 + $0x218] sm:$0xff]
        %v326 = vld [vmem:[#allocation5 + $0x240] sm:$0xff]
        %v327 = vld [vmem:[#allocation5 + $0x248] sm:$0xff]
        %v328 = vld [vmem:[#allocation5 + $0x270] sm:$0xff]
        %v329 = vld [vmem:[#allocation5 + $0x278] sm:$0xff]
        %v330 = vld [vmem:[#allocation5 + $0x2a0] sm:$0xff]
        %v331 = vld [vmem:[#allocation5 + $0x2a8] sm:$0xff]
        %v332 = vld [vmem:[#allocation5 + $0x2d0] sm:$0xff]
        %v333 = vld [vmem:[#allocation5 + $0x2d8] sm:$0xff]
        %v334 = vld [vmem:[#allocation5 + $0x300] sm:$0xff]
        %v335 = vld [vmem:[#allocation5 + $0x308] sm:$0xff]
        %v336 = vld [vmem:[#allocation5 + $0x330] sm:$0xff]
        %v337 = vld [vmem:[#allocation5 + $0x338] sm:$0xff]
        %v338 = vld [vmem:[#allocation5 + $0x360] sm:$0xff]
        %v339 = vld [vmem:[#allocation5 + $0x368] sm:$0xff]
        %v340 = vld [vmem:[#allocation5 + $0x390] sm:$0xff]
        %v341 = vld [vmem:[#allocation5 + $0x398] sm:$0xff]
        %v342 = vld [vmem:[#allocation5 + $0x3c0] sm:$0xff]
        %v343 = vld [vmem:[#allocation5 + $0x3c8] sm:$0xff]
        %v344 = vld [vmem:[#allocation5 + $0x3f0] sm:$0xff]
        %v345 = vld [vmem:[#allocation5 + $0x3f8] sm:$0xff]
        %v346 = vld [vmem:[#allocation5 + $0x420] sm:$0xff]
        %v347 = vld [vmem:[#allocation5 + $0x428] sm:$0xff]
        %v348 = vld [vmem:[#allocation5 + $0x450] sm:$0xff]
        %v349 = vld [vmem:[#allocation5 + $0x458] sm:$0xff]
        %v350 = vld [vmem:[#allocation5 + $0x480] sm:$0xff]
        %v351 = vld [vmem:[#allocation5 + $0x488] sm:$0xff]
        %v352 = vld [vmem:[#allocation5 + $0x4b0] sm:$0xff]
        %v353 = vld [vmem:[#allocation5 + $0x4b8] sm:$0xff]
        %v354 = vld [vmem:[#allocation5 + $0x4e0] sm:$0xff]
        %v355 = vld [vmem:[#allocation5 + $0x4e8] sm:$0xff]
        %v356 = vld [vmem:[#allocation5 + $0x510] sm:$0xff]
        %v357 = vld [vmem:[#allocation5 + $0x518] sm:$0xff]
        %v358 = vld [vmem:[#allocation5 + $0x540] sm:$0xff]
        %v359 = vld [vmem:[#allocation5 + $0x548] sm:$0xff]
        %v360 = vld [vmem:[#allocation5 + $0x570] sm:$0xff]
        %v361 = vld [vmem:[#allocation5 + $0x578] sm:$0xff]
        %v362 = vld [vmem:[#allocation5 + $0x5a0] sm:$0xff]
        %v363 = vld [vmem:[#allocation5 + $0x5a8] sm:$0xff]
        %v364 = vld [vmem:[#allocation5 + $0x5d0] sm:$0xff]
        %v365 = vld [vmem:[#allocation5 + $0x5d8] sm:$0xff]
        %v366 = vld [vmem:[#allocation5 + $0x600] sm:$0xff]
        %v367 = vld [vmem:[#allocation5 + $0x608] sm:$0xff]
        %v368 = vld [vmem:[#allocation5 + $0x630] sm:$0xff]
        %v369 = vld [vmem:[#allocation5 + $0x638] sm:$0xff]
        %v370 = vld [vmem:[#allocation5 + $0x660] sm:$0xff]
        %v371 = vld [vmem:[#allocation5 + $0x668] sm:$0xff]
        %v372 = vld [vmem:[#allocation5 + $0x690] sm:$0xff]
        %v373 = vld [vmem:[#allocation5 + $0x698] sm:$0xff]
        %v374 = vld [vmem:[#allocation5 + $0x6c0] sm:$0xff]
        %v375 = vld [vmem:[#allocation5 + $0x6c8] sm:$0xff]
        %v376 = vld [vmem:[#allocation5 + $0x6f0] sm:$0xff]
        %v377 = vld [vmem:[#allocation5 + $0x6f8] sm:$0xff]
        %v378 = vld [vmem:[#allocation5 + $0x720] sm:$0xff]
        %v379 = vld [vmem:[#allocation5 + $0x728] sm:$0xff]
        %v380 = vld [vmem:[#allocation5 + $0x750] sm:$0xff]
        %v381 = vld [vmem:[#allocation5 + $0x758] sm:$0xff]
        %v382 = vld [vmem:[#allocation5 + $0x780] sm:$0xff]
        %v383 = vld [vmem:[#allocation5 + $0x788] sm:$0xff]
        %v384 = vld [vmem:[#allocation5 + $0x7b0] sm:$0xff]
        %v385 = vld [vmem:[#allocation5 + $0x7b8] sm:$0xff]
        %v386 = vld [vmem:[#allocation5 + $0x7e0] sm:$0xff]
        %v387 = vld [vmem:[#allocation5 + $0x7e8] sm:$0xff]
        %v388 = vld [vmem:[#allocation5 + $0x810] sm:$0xff]
        %v389 = vld [vmem:[#allocation5 + $0x818] sm:$0xff]
        %v390 = vld [vmem:[#allocation5 + $0x840] sm:$0xff]
        %v391 = vld [vmem:[#allocation5 + $0x848] sm:$0xff]
        %v392 = vld [vmem:[#allocation5 + $0x870] sm:$0xff]
        %v393 = vld [vmem:[#allocation5 + $0x878] sm:$0xff]
        %v394 = vld [vmem:[#allocation5 + $0x8a0] sm:$0xff]
        %v395 = vld [vmem:[#allocation5 + $0x8a8] sm:$0xff]
        %v396 = vld [vmem:[#allocation5 + $0x8d0] sm:$0xff]
        %v397 = vld [vmem:[#allocation5 + $0x8d8] sm:$0xff]
        %v398 = vld [vmem:[#allocation7] sm:$0xf]
        %v399 = vld [vmem:[#allocation8] sm:$0xff]
        %v400 = vld [vmem:[#allocation8 + $0x8] sm:$0xf]
        %v401 = vld [vmem:[#allocation8 + $0xc] sm:$0xff]
        %v402 = vld [vmem:[#allocation8 + $0x14] sm:$0xf]
        %v403 = vld [vmem:[#allocation8 + $0x18] sm:$0xff]
        %v404 = vld [vmem:[#allocation8 + $0x20] sm:$0xf]
        %v405 = vld [vmem:[#allocation8 + $0x24] sm:$0xff]
        %v406 = vld [vmem:[#allocation8 + $0x2c] sm:$0xf]
        %v407 = vld [vmem:[#allocation8 + $0x30] sm:$0xff]
        %v408 = vld [vmem:[#allocation8 + $0x38] sm:$0xf]
        %v409 = vld [vmem:[#allocation8 + $0x3c] sm:$0xff]
        %v410 = vld [vmem:[#allocation8 + $0x44] sm:$0xf]
        %v411 = vld [vmem:[#allocation8 + $0x48] sm:$0xff]
        %v412 = vld [vmem:[#allocation8 + $0x50] sm:$0xf]
        %v413 = vld [vmem:[#allocation8 + $0x54] sm:$0xff]
        %v414 = vld [vmem:[#allocation8 + $0x5c] sm:$0xf]
        %v415 = vld [vmem:[#allocation8 + $0x60] sm:$0xff]
        %v416 = vld [vmem:[#allocation8 + $0x68] sm:$0xf]
        %v417 = vld [vmem:[#allocation8 + $0x6c] sm:$0xff]
        %v418 = vld [vmem:[#allocation8 + $0x74] sm:$0xf]
        %v419 = vld [vmem:[#allocation8 + $0x78] sm:$0xff]
        %v420 = vld [vmem:[#allocation8 + $0x80] sm:$0xf]
        %v421 = vld [vmem:[#allocation8 + $0x84] sm:$0xff]
        %v422 = vld [vmem:[#allocation8 + $0x8c] sm:$0xf]
        %v423 = vld [vmem:[#allocation8 + $0x90] sm:$0xff]
        %v424 = vld [vmem:[#allocation8 + $0x98] sm:$0xf]
        %v425 = vld [vmem:[#allocation8 + $0x9c] sm:$0xff]
        %v426 = vld [vmem:[#allocation8 + $0xa4] sm:$0xf]
        %v427 = vld [vmem:[#allocation8 + $0xa8] sm:$0xff]
        %v428 = vld [vmem:[#allocation8 + $0xb0] sm:$0xf]
        %v429 = vld [vmem:[#allocation8 + $0xb4] sm:$0xff]
        %v430 = vld [vmem:[#allocation8 + $0xbc] sm:$0xf]
        %v431 = vld [vmem:[#allocation8 + $0xc0] sm:$0xff]
        %v432 = vld [vmem:[#allocation8 + $0xc8] sm:$0xf]
        %v433 = vld [vmem:[#allocation8 + $0xcc] sm:$0xff]
        %v434 = vld [vmem:[#allocation8 + $0xd4] sm:$0xf]
        %v435 = vld [vmem:[#allocation8 + $0xd8] sm:$0xff]
        %v436 = vld [vmem:[#allocation8 + $0xe0] sm:$0xf]
        %v437 = vld [vmem:[#allocation8 + $0xe4] sm:$0xff]
        %v438 = vld [vmem:[#allocation8 + $0xec] sm:$0xf]
        %v439 = vld [vmem:[#allocation8 + $0xf0] sm:$0xff]
        %v440 = vld [vmem:[#allocation8 + $0xf8] sm:$0xf]
        %v441 = vld [vmem:[#allocation8 + $0xfc] sm:$0xff]
        %v442 = vld [vmem:[#allocation8 + $0x104] sm:$0xf]
        %v443 = vld [vmem:[#allocation8 + $0x108] sm:$0xff]
        %v444 = vld [vmem:[#allocation8 + $0x110] sm:$0xf]
        %v445 = vld [vmem:[#allocation8 + $0x114] sm:$0xff]
        %v446 = vld [vmem:[#allocation8 + $0x11c] sm:$0xf]
        %v447 = vld [vmem:[#allocation8 + $0x120] sm:$0xff]
        %v448 = vld [vmem:[#allocation8 + $0x128] sm:$0xf]
        %v449 = vld [vmem:[#allocation8 + $0x12c] sm:$0xff]
        %v450 = vld [vmem:[#allocation8 + $0x134] sm:$0xf]
        %v451 = vld [vmem:[#allocation8 + $0x138] sm:$0xff]
        %v452 = vld [vmem:[#allocation8 + $0x140] sm:$0xf]
        %v453 = vld [vmem:[#allocation8 + $0x144] sm:$0xff]
        %v454 = vld [vmem:[#allocation8 + $0x14c] sm:$0xf]
        %v455 = vld [vmem:[#allocation8 + $0x150] sm:$0xff]
        %v456 = vld [vmem:[#allocation8 + $0x158] sm:$0xf]
        %v457 = vld [vmem:[#allocation8 + $0x15c] sm:$0xff]
        %v458 = vld [vmem:[#allocation8 + $0x164] sm:$0xf]
        %v459 = vld [vmem:[#allocation8 + $0x168] sm:$0xff]
        %v460 = vld [vmem:[#allocation8 + $0x170] sm:$0xf]
        %v461 = vld [vmem:[#allocation8 + $0x174] sm:$0xff]
        %v462 = vld [vmem:[#allocation8 + $0x17c] sm:$0xf]
        %v463 = vld [vmem:[#allocation8 + $0x180] sm:$0xff]
        %v464 = vld [vmem:[#allocation8 + $0x188] sm:$0xf]
        %v465 = vld [vmem:[#allocation8 + $0x18c] sm:$0xff]
        %v466 = vld [vmem:[#allocation8 + $0x194] sm:$0xf]
        %v467 = vld [vmem:[#allocation8 + $0x198] sm:$0xff]
        %v468 = vld [vmem:[#allocation8 + $0x1a0] sm:$0xf]
        %v469 = vld [vmem:[#allocation8 + $0x1a4] sm:$0xff]
        %v470 = vld [vmem:[#allocation8 + $0x1ac] sm:$0xf]
        %v471 = vld [vmem:[#allocation8 + $0x1b0] sm:$0xff]
        %v472 = vld [vmem:[#allocation8 + $0x1b8] sm:$0xf]
        %v473 = vld [vmem:[#allocation8 + $0x1bc] sm:$0xff]
        %v474 = vld [vmem:[#allocation8 + $0x1c4] sm:$0xf]
        %v475 = vld [vmem:[#allocation8 + $0x1c8] sm:$0xff]
        %v476 = vld [vmem:[#allocation8 + $0x1d0] sm:$0xf]
        %v477 = vld [vmem:[#allocation8 + $0x1d4] sm:$0xff]
        %v478 = vld [vmem:[#allocation8 + $0x1dc] sm:$0xf]
        %v479 = vld [vmem:[#allocation8 + $0x1e0] sm:$0xff]
        %v480 = vld [vmem:[#allocation8 + $0x1e8] sm:$0xf]
        %v481 = vld [vmem:[#allocation8 + $0x1ec] sm:$0xff]
        %v482 = vld [vmem:[#allocation8 + $0x1f4] sm:$0xf]
        %v483 = vld [vmem:[#allocation8 + $0x1f8] sm:$0xff]
        %v484 = vld [vmem:[#allocation8 + $0x200] sm:$0xf]
        %v485 = vld [vmem:[#allocation8 + $0x204] sm:$0xff]
        %v486 = vld [vmem:[#allocation8 + $0x20c] sm:$0xf]
        %v487 = vld [vmem:[#allocation8 + $0x210] sm:$0xff]
        %v488 = vld [vmem:[#allocation8 + $0x218] sm:$0xf]
        %v489 = vld [vmem:[#allocation8 + $0x21c] sm:$0xff]
        %v490 = vld [vmem:[#allocation8 + $0x224] sm:$0xf]
        %v491 = vld [vmem:[#allocation8 + $0x228] sm:$0xff]
        %v492 = vld [vmem:[#allocation8 + $0x230] sm:$0xf]
        %v493 = vld [vmem:[#allocation8 + $0x234] sm:$0xff]
        %v494 = vld [vmem:[#allocation8 + $0x23c] sm:$0xf]
        %v495 = vld [vmem:[#allocation8 + $0x240] sm:$0xff]
        %v496 = vld [vmem:[#allocation8 + $0x248] sm:$0xf]
        %v497 = vld [vmem:[#allocation8 + $0x24c] sm:$0xff]
        %v498 = vld [vmem:[#allocation8 + $0x254] sm:$0xf]
        %v499 = vld [vmem:[#allocation8 + $0x258] sm:$0xff]
        %v500 = vld [vmem:[#allocation8 + $0x260] sm:$0xf]
        %v501 = vld [vmem:[#allocation8 + $0x264] sm:$0xff]
        %v502 = vld [vmem:[#allocation8 + $0x26c] sm:$0xf]
        %v503 = vld [vmem:[#allocation8 + $0x270] sm:$0xff]
        %v504 = vld [vmem:[#allocation8 + $0x278] sm:$0xf]
        %v505 = vld [vmem:[#allocation8 + $0x27c] sm:$0xff]
        %v506 = vld [vmem:[#allocation8 + $0x284] sm:$0xf]
        %v507 = vld [vmem:[#allocation8 + $0x288] sm:$0xff]
        %v508 = vld [vmem:[#allocation8 + $0x290] sm:$0xf]
        %v509 = vld [vmem:[#allocation8 + $0x294] sm:$0xff]
        %v510 = vld [vmem:[#allocation8 + $0x29c] sm:$0xf]
        %v511 = vld [vmem:[#allocation8 + $0x2a0] sm:$0xff]
        %v512 = vld [vmem:[#allocation8 + $0x2a8] sm:$0xf]
        %v513 = vld [vmem:[#allocation8 + $0x2ac] sm:$0xff]
        %v514 = vld [vmem:[#allocation8 + $0x2b4] sm:$0xf]
        %v515 = vld [vmem:[#allocation8 + $0x2b8] sm:$0xff]
        %v516 = vld [vmem:[#allocation8 + $0x2c0] sm:$0xf]
        %v517 = vld [vmem:[#allocation8 + $0x2c4] sm:$0xff]
        %v518 = vld [vmem:[#allocation8 + $0x2cc] sm:$0xf]
        %v519 = vld [vmem:[#allocation8 + $0x2d0] sm:$0xff]
        %v520 = vld [vmem:[#allocation8 + $0x2d8] sm:$0xf]
        %v521 = vld [vmem:[#allocation8 + $0x2dc] sm:$0xff]
        %v522 = vld [vmem:[#allocation8 + $0x2e4] sm:$0xf]
        %v523 = vld [vmem:[#allocation8 + $0x2e8] sm:$0xff]
        %v524 = vld [vmem:[#allocation8 + $0x2f0] sm:$0xf]
        %v525 = vld [vmem:[#allocation8 + $0x2f4] sm:$0xff]
        %v526 = vld [vmem:[#allocation8 + $0x2fc] sm:$0xf]
        %v528 = vlaneseq
        %v529 = vshrl.u32 %v528, 7
        %v530 = vsub.s32 0, %v529
        %v531 = vrot.slane %v398, %v530
        %v532 = vlaneseq
        %v533 = vshrl.u32 %v532, 7
        %v534 = vsub.s32 1, %v533
        %v535 = vrot.slane %v398, %v534
        %v536 = vlaneseq
        %v537 = vshrl.u32 %v536, 7
        %v538 = vsub.s32 2, %v537
        %v539 = vrot.slane %v398, %v538
        %v540 = vlaneseq
        %v541 = vshrl.u32 %v540, 7
        %v542 = vsub.s32 3, %v541
        %v543 = vrot.slane %v398, %v542
        %v644 = vunpack.c.l.b16 %v302
        %v645 = vunpack.c.h.b16 %v302
        %v646 = vunpack.c.l.b16 %v303
        %v647 = vunpack.c.h.b16 %v303
        %v648 = vunpack.c.l.b16 %v304
        %v649 = vunpack.c.h.b16 %v304
        %v650 = vunpack.c.l.b16 %v305
        %v651 = vunpack.c.h.b16 %v305
        %v652 = vunpack.c.l.b16 %v306
        %v653 = vunpack.c.h.b16 %v306
        %v654 = vunpack.c.l.b16 %v307
        %v655 = vunpack.c.h.b16 %v307
        %v656 = vunpack.c.l.b16 %v308
        %v657 = vunpack.c.h.b16 %v308
        %v658 = vunpack.c.l.b16 %v309
        %v659 = vunpack.c.h.b16 %v309
        %v660 = vunpack.c.l.b16 %v310
        %v661 = vunpack.c.h.b16 %v310
        %v662 = vunpack.c.l.b16 %v311
        %v663 = vunpack.c.h.b16 %v311
        %v664 = vunpack.c.l.b16 %v312
        %v665 = vunpack.c.h.b16 %v312
        %v666 = vunpack.c.l.b16 %v313
        %v667 = vunpack.c.h.b16 %v313
        %v668 = vunpack.c.l.b16 %v314
        %v669 = vunpack.c.h.b16 %v314
        %v670 = vunpack.c.l.b16 %v315
        %v671 = vunpack.c.h.b16 %v315
        %v672 = vunpack.c.l.b16 %v316
        %v673 = vunpack.c.h.b16 %v316
        %v674 = vunpack.c.l.b16 %v317
        %v675 = vunpack.c.h.b16 %v317
        %v676 = vunpack.c.l.b16 %v318
        %v677 = vunpack.c.h.b16 %v318
        %v678 = vunpack.c.l.b16 %v319
        %v679 = vunpack.c.h.b16 %v319
        %v680 = vunpack.c.l.b16 %v320
        %v681 = vunpack.c.h.b16 %v320
        %v682 = vunpack.c.l.b16 %v321
        %v683 = vunpack.c.h.b16 %v321
        %v684 = vunpack.c.l.b16 %v322
        %v685 = vunpack.c.h.b16 %v322
        %v686 = vunpack.c.l.b16 %v323
        %v687 = vunpack.c.h.b16 %v323
        %v688 = vunpack.c.l.b16 %v324
        %v689 = vunpack.c.h.b16 %v324
        %v690 = vunpack.c.l.b16 %v325
        %v691 = vunpack.c.h.b16 %v325
        %v692 = vunpack.c.l.b16 %v326
        %v693 = vunpack.c.h.b16 %v326
        %v694 = vunpack.c.l.b16 %v327
        %v695 = vunpack.c.h.b16 %v327
        %v696 = vunpack.c.l.b16 %v328
        %v697 = vunpack.c.h.b16 %v328
        %v698 = vunpack.c.l.b16 %v329
        %v699 = vunpack.c.h.b16 %v329
        %v700 = vunpack.c.l.b16 %v330
        %v701 = vunpack.c.h.b16 %v330
        %v702 = vunpack.c.l.b16 %v331
        %v703 = vunpack.c.h.b16 %v331
        %v704 = vunpack.c.l.b16 %v332
        %v705 = vunpack.c.h.b16 %v332
        %v706 = vunpack.c.l.b16 %v333
        %v707 = vunpack.c.h.b16 %v333
        %v708 = vunpack.c.l.b16 %v334
        %v709 = vunpack.c.h.b16 %v334
        %v710 = vunpack.c.l.b16 %v335
        %v711 = vunpack.c.h.b16 %v335
        %v712 = vunpack.c.l.b16 %v336
        %v713 = vunpack.c.h.b16 %v336
        %v714 = vunpack.c.l.b16 %v337
        %v715 = vunpack.c.h.b16 %v337
        %v716 = vunpack.c.l.b16 %v338
        %v717 = vunpack.c.h.b16 %v338
        %v718 = vunpack.c.l.b16 %v339
        %v719 = vunpack.c.h.b16 %v339
        %v720 = vunpack.c.l.b16 %v340
        %v721 = vunpack.c.h.b16 %v340
        %v722 = vunpack.c.l.b16 %v341
        %v723 = vunpack.c.h.b16 %v341
        %v724 = vunpack.c.l.b16 %v342
        %v725 = vunpack.c.h.b16 %v342
        %v726 = vunpack.c.l.b16 %v343
        %v727 = vunpack.c.h.b16 %v343
        %v728 = vunpack.c.l.b16 %v344
        %v729 = vunpack.c.h.b16 %v344
        %v730 = vunpack.c.l.b16 %v345
        %v731 = vunpack.c.h.b16 %v345
        %v732 = vunpack.c.l.b16 %v346
        %v733 = vunpack.c.h.b16 %v346
        %v734 = vunpack.c.l.b16 %v347
        %v735 = vunpack.c.h.b16 %v347
        %v736 = vunpack.c.l.b16 %v348
        %v737 = vunpack.c.h.b16 %v348
        %v738 = vunpack.c.l.b16 %v349
        %v739 = vunpack.c.h.b16 %v349
        %v740 = vunpack.c.l.b16 %v350
        %v741 = vunpack.c.h.b16 %v350
        %v742 = vunpack.c.l.b16 %v351
        %v743 = vunpack.c.h.b16 %v351
        %v744 = vunpack.c.l.b16 %v352
        %v745 = vunpack.c.h.b16 %v352
        %v746 = vunpack.c.l.b16 %v353
        %v747 = vunpack.c.h.b16 %v353
        %v748 = vunpack.c.l.b16 %v354
        %v749 = vunpack.c.h.b16 %v354
        %v750 = vunpack.c.l.b16 %v355
        %v751 = vunpack.c.h.b16 %v355
        %v752 = vunpack.c.l.b16 %v356
        %v753 = vunpack.c.h.b16 %v356
        %v754 = vunpack.c.l.b16 %v357
        %v755 = vunpack.c.h.b16 %v357
        %v756 = vunpack.c.l.b16 %v358
        %v757 = vunpack.c.h.b16 %v358
        %v758 = vunpack.c.l.b16 %v359
        %v759 = vunpack.c.h.b16 %v359
        %v760 = vunpack.c.l.b16 %v360
        %v761 = vunpack.c.h.b16 %v360
        %v762 = vunpack.c.l.b16 %v361
        %v763 = vunpack.c.h.b16 %v361
        %v764 = vunpack.c.l.b16 %v362
        %v765 = vunpack.c.h.b16 %v362
        %v766 = vunpack.c.l.b16 %v363
        %v767 = vunpack.c.h.b16 %v363
        %v768 = vunpack.c.l.b16 %v364
        %v769 = vunpack.c.h.b16 %v364
        %v770 = vunpack.c.l.b16 %v365
        %v771 = vunpack.c.h.b16 %v365
        %v772 = vunpack.c.l.b16 %v366
        %v773 = vunpack.c.h.b16 %v366
        %v774 = vunpack.c.l.b16 %v367
        %v775 = vunpack.c.h.b16 %v367
        %v776 = vunpack.c.l.b16 %v368
        %v777 = vunpack.c.h.b16 %v368
        %v778 = vunpack.c.l.b16 %v369
        %v779 = vunpack.c.h.b16 %v369
        %v780 = vunpack.c.l.b16 %v370
        %v781 = vunpack.c.h.b16 %v370
        %v782 = vunpack.c.l.b16 %v371
        %v783 = vunpack.c.h.b16 %v371
        %v784 = vunpack.c.l.b16 %v372
        %v785 = vunpack.c.h.b16 %v372
        %v786 = vunpack.c.l.b16 %v373
        %v787 = vunpack.c.h.b16 %v373
        %v788 = vunpack.c.l.b16 %v374
        %v789 = vunpack.c.h.b16 %v374
        %v790 = vunpack.c.l.b16 %v375
        %v791 = vunpack.c.h.b16 %v375
        %v792 = vunpack.c.l.b16 %v376
        %v793 = vunpack.c.h.b16 %v376
        %v794 = vunpack.c.l.b16 %v377
        %v795 = vunpack.c.h.b16 %v377
        %v796 = vunpack.c.l.b16 %v378
        %v797 = vunpack.c.h.b16 %v378
        %v798 = vunpack.c.l.b16 %v379
        %v799 = vunpack.c.h.b16 %v379
        %v800 = vunpack.c.l.b16 %v380
        %v801 = vunpack.c.h.b16 %v380
        %v802 = vunpack.c.l.b16 %v381
        %v803 = vunpack.c.h.b16 %v381
        %v804 = vunpack.c.l.b16 %v382
        %v805 = vunpack.c.h.b16 %v382
        %v806 = vunpack.c.l.b16 %v383
        %v807 = vunpack.c.h.b16 %v383
        %v808 = vunpack.c.l.b16 %v384
        %v809 = vunpack.c.h.b16 %v384
        %v810 = vunpack.c.l.b16 %v385
        %v811 = vunpack.c.h.b16 %v385
        %v812 = vunpack.c.l.b16 %v386
        %v813 = vunpack.c.h.b16 %v386
        %v814 = vunpack.c.l.b16 %v387
        %v815 = vunpack.c.h.b16 %v387
        %v816 = vunpack.c.l.b16 %v388
        %v817 = vunpack.c.h.b16 %v388
        %v818 = vunpack.c.l.b16 %v389
        %v819 = vunpack.c.h.b16 %v389
        %v820 = vunpack.c.l.b16 %v390
        %v821 = vunpack.c.h.b16 %v390
        %v822 = vunpack.c.l.b16 %v391
        %v823 = vunpack.c.h.b16 %v391
        %v824 = vunpack.c.l.b16 %v392
        %v825 = vunpack.c.h.b16 %v392
        %v826 = vunpack.c.l.b16 %v393
        %v827 = vunpack.c.h.b16 %v393
        %v828 = vunpack.c.l.b16 %v394
        %v829 = vunpack.c.h.b16 %v394
        %v830 = vunpack.c.l.b16 %v395
        %v831 = vunpack.c.h.b16 %v395
        %v832 = vunpack.c.l.b16 %v396
        %v833 = vunpack.c.h.b16 %v396
        %v834 = vunpack.c.l.b16 %v397
        %v835 = vunpack.c.h.b16 %v397
        %v836 = vpack.c.b16 %v648, %v644
        %v837 = vpack.c.b16 %v649, %v645
        %v838 = vpack.c.b16 %v650, %v646
        %v839 = vpack.c.b16 %v651, %v647
        %v840 = vpack.c.b16 %v656, %v652
        %v841 = vpack.c.b16 %v657, %v653
        %v842 = vpack.c.b16 %v658, %v654
        %v843 = vpack.c.b16 %v659, %v655
        %v844 = vpack.c.b16 %v664, %v660
        %v845 = vpack.c.b16 %v665, %v661
        %v846 = vpack.c.b16 %v666, %v662
        %v847 = vpack.c.b16 %v667, %v663
        %v848 = vpack.c.b16 %v672, %v668
        %v849 = vpack.c.b16 %v673, %v669
        %v850 = vpack.c.b16 %v674, %v670
        %v851 = vpack.c.b16 %v675, %v671
        %v852 = vpack.c.b16 %v680, %v676
        %v853 = vpack.c.b16 %v681, %v677
        %v854 = vpack.c.b16 %v682, %v678
        %v855 = vpack.c.b16 %v683, %v679
        %v856 = vpack.c.b16 %v688, %v684
        %v857 = vpack.c.b16 %v689, %v685
        %v858 = vpack.c.b16 %v690, %v686
        %v859 = vpack.c.b16 %v691, %v687
        %v860 = vpack.c.b16 %v696, %v692
        %v861 = vpack.c.b16 %v697, %v693
        %v862 = vpack.c.b16 %v698, %v694
        %v863 = vpack.c.b16 %v699, %v695
        %v864 = vpack.c.b16 %v704, %v700
        %v865 = vpack.c.b16 %v705, %v701
        %v866 = vpack.c.b16 %v706, %v702
        %v867 = vpack.c.b16 %v707, %v703
        %v868 = vpack.c.b16 %v712, %v708
        %v869 = vpack.c.b16 %v713, %v709
        %v870 = vpack.c.b16 %v714, %v710
        %v871 = vpack.c.b16 %v715, %v711
        %v872 = vpack.c.b16 %v720, %v716
        %v873 = vpack.c.b16 %v721, %v717
        %v874 = vpack.c.b16 %v722, %v718
        %v875 = vpack.c.b16 %v723, %v719
        %v876 = vpack.c.b16 %v728, %v724
        %v877 = vpack.c.b16 %v729, %v725
        %v878 = vpack.c.b16 %v730, %v726
        %v879 = vpack.c.b16 %v731, %v727
        %v880 = vpack.c.b16 %v736, %v732
        %v881 = vpack.c.b16 %v737, %v733
        %v882 = vpack.c.b16 %v738, %v734
        %v883 = vpack.c.b16 %v739, %v735
        %v884 = vpack.c.b16 %v744, %v740
        %v885 = vpack.c.b16 %v745, %v741
        %v886 = vpack.c.b16 %v746, %v742
        %v887 = vpack.c.b16 %v747, %v743
        %v888 = vpack.c.b16 %v752, %v748
        %v889 = vpack.c.b16 %v753, %v749
        %v890 = vpack.c.b16 %v754, %v750
        %v891 = vpack.c.b16 %v755, %v751
        %v892 = vpack.c.b16 %v760, %v756
        %v893 = vpack.c.b16 %v761, %v757
        %v894 = vpack.c.b16 %v762, %v758
        %v895 = vpack.c.b16 %v763, %v759
        %v896 = vpack.c.b16 %v768, %v764
        %v897 = vpack.c.b16 %v769, %v765
        %v898 = vpack.c.b16 %v770, %v766
        %v899 = vpack.c.b16 %v771, %v767
        %v900 = vpack.c.b16 %v776, %v772
        %v901 = vpack.c.b16 %v777, %v773
        %v902 = vpack.c.b16 %v778, %v774
        %v903 = vpack.c.b16 %v779, %v775
        %v904 = vpack.c.b16 %v784, %v780
        %v905 = vpack.c.b16 %v785, %v781
        %v906 = vpack.c.b16 %v786, %v782
        %v907 = vpack.c.b16 %v787, %v783
        %v908 = vpack.c.b16 %v792, %v788
        %v909 = vpack.c.b16 %v793, %v789
        %v910 = vpack.c.b16 %v794, %v790
        %v911 = vpack.c.b16 %v795, %v791
        %v912 = vpack.c.b16 %v800, %v796
        %v913 = vpack.c.b16 %v801, %v797
        %v914 = vpack.c.b16 %v802, %v798
        %v915 = vpack.c.b16 %v803, %v799
        %v916 = vpack.c.b16 %v808, %v804
        %v917 = vpack.c.b16 %v809, %v805
        %v918 = vpack.c.b16 %v810, %v806
        %v919 = vpack.c.b16 %v811, %v807
        %v920 = vpack.c.b16 %v816, %v812
        %v921 = vpack.c.b16 %v817, %v813
        %v922 = vpack.c.b16 %v818, %v814
        %v923 = vpack.c.b16 %v819, %v815
        %v924 = vpack.c.b16 %v824, %v820
        %v925 = vpack.c.b16 %v825, %v821
        %v926 = vpack.c.b16 %v826, %v822
        %v927 = vpack.c.b16 %v827, %v823
        %v928 = vpack.c.b16 %v832, %v828
        %v929 = vpack.c.b16 %v833, %v829
        %v930 = vpack.c.b16 %v834, %v830
        %v931 = vpack.c.b16 %v835, %v831
        %1028 = vmatprep.subr.bf16.mxu0 %v865
        %1029 = vmatpush1.bf16.msra.mxu0 %v864
        %1030 = vmatprep.subr.bf16.mxu0 %v861
        %1031 = vmatpush1.bf16.msra.mxu0 %v860
        %1032 = vmatprep.subr.bf16.mxu0 %v857
        %1033 = vmatpush1.bf16.msra.mxu0 %v856
        %1034 = vmatprep.subr.bf16.mxu0 %v853
        %1035 = vmatpush1.bf16.msra.mxu0 %v852
        %1036 = vmatprep.subr.bf16.mxu0 %v849
        %1037 = vmatpush1.bf16.msra.mxu0 %v848
        %1038 = vmatprep.subr.bf16.mxu0 %v845
        %1039 = vmatpush1.bf16.msra.mxu0 %v844
        %1040 = vmatprep.subr.bf16.mxu0 %v841
        %1041 = vmatpush1.bf16.msra.mxu0 %v840
        %1042 = vmatprep.subr.bf16.mxu0 %v837
        %1043 = vmatpush1.bf16.msra.mxu0 %v836
        %1044 = vmatprep.subr.bf16.mxu0 %v897
        %1045 = vmatpush2.bf16.msra.mxu0 %v896
        %1046 = vmatprep.subr.bf16.mxu0 %v893
        %1047 = vmatpush2.bf16.msra.mxu0 %v892
        %1048 = vmatprep.subr.bf16.mxu0 %v889
        %1049 = vmatpush2.bf16.msra.mxu0 %v888
        %1050 = vmatprep.subr.bf16.mxu0 %v885
        %1051 = vmatpush2.bf16.msra.mxu0 %v884
        %1052 = vmatprep.subr.bf16.mxu0 %v881
        %1053 = vmatpush2.bf16.msra.mxu0 %v880
        %1054 = vmatprep.subr.bf16.mxu0 %v877
        %1055 = vmatpush2.bf16.msra.mxu0 %v876
        %1056 = vmatprep.subr.bf16.mxu0 %v873
        %1057 = vmatpush2.bf16.msra.mxu0 %v872
        %1058 = vmatprep.subr.bf16.mxu0 %v869
        %1059 = vmatpush2.bf16.msra.mxu0 %v868
        %1060 = vmatprep.mubr.bf16.mxu0 %v300
        %1061 = vmatmul.mubr.bf16.gmra.mxu0 %v299
        %v1062 = vpop.f32.mrf.mxu0
        %v1063 = vadd.f32 %v531, %v1062
        %v1064 = vpop.f32.mrf.mxu0
        %v1065 = vadd.f32 %v535, %v1064
        %v1066 = vpop.f32.mrf.mxu0
        %v1067 = vpop.f32.mrf.mxu0
        %1068 = vdwg.mxu0
        %1069 = vmatprep.subr.bf16.mxu0 %v929
        %1070 = vmatpush1.bf16.msra.mxu0 %v928
        %1071 = vmatprep.subr.bf16.mxu0 %v925
        %1072 = vmatpush1.bf16.msra.mxu0 %v924
        %1073 = vmatprep.subr.bf16.mxu0 %v921
        %1074 = vmatpush1.bf16.msra.mxu0 %v920
        %1075 = vmatprep.subr.bf16.mxu0 %v917
        %1076 = vmatpush1.bf16.msra.mxu0 %v916
        %1077 = vmatprep.subr.bf16.mxu0 %v913
        %1078 = vmatpush1.bf16.msra.mxu0 %v912
        %1079 = vmatprep.subr.bf16.mxu0 %v909
        %1080 = vmatpush1.bf16.msra.mxu0 %v908
        %1081 = vmatprep.subr.bf16.mxu0 %v905
        %1082 = vmatpush1.bf16.msra.mxu0 %v904
        %1083 = vmatprep.subr.bf16.mxu0 %v901
        %1084 = vmatpush1.bf16.msra.mxu0 %v900
        %1085 = vmatprep.subr.bf16.mxu0 0
        %1086 = vmatpush2.bf16.msra.mxu0 0
        %1087 = vmatprep.subr.bf16.mxu0 0
        %1088 = vmatpush2.bf16.msra.mxu0 0
        %1089 = vmatprep.subr.bf16.mxu0 0
        %1090 = vmatpush2.bf16.msra.mxu0 0
        %1091 = vmatprep.subr.bf16.mxu0 0
        %1092 = vmatpush2.bf16.msra.mxu0 0
        %1093 = vmatprep.subr.bf16.mxu0 0
        %1094 = vmatpush2.bf16.msra.mxu0 0
        %1095 = vmatprep.subr.bf16.mxu0 0
        %1096 = vmatpush2.bf16.msra.mxu0 0
        %1097 = vmatprep.subr.bf16.mxu0 0
        %1098 = vmatpush2.bf16.msra.mxu0 0
        %1099 = vmatprep.subr.bf16.mxu0 0
        %1100 = vmatpush2.bf16.msra.mxu0 0
        %1101 = vmatprep.mubr.bf16.mxu0 0
        %1102 = vmatmul.mubr.bf16.gmra.mxu0 %v301
        %v1103 = vpop.f32.mrf.mxu0
        %v1104 = vadd.f32 %v1063, %v1103
        %v1105 = vpop.f32.mrf.mxu0
        %v1106 = vadd.f32 %v1065, %v1105
        %v1107 = vpop.f32.mrf.mxu0
        %v1108 = vpop.f32.mrf.mxu0
        %1109 = vdwg.mxu0
        %1110 = vmatprep.subr.bf16.mxu0 %v867
        %1111 = vmatpush1.bf16.msra.mxu0 %v866
        %1112 = vmatprep.subr.bf16.mxu0 %v863
        %1113 = vmatpush1.bf16.msra.mxu0 %v862
        %1114 = vmatprep.subr.bf16.mxu0 %v859
        %1115 = vmatpush1.bf16.msra.mxu0 %v858
        %1116 = vmatprep.subr.bf16.mxu0 %v855
        %1117 = vmatpush1.bf16.msra.mxu0 %v854
        %1118 = vmatprep.subr.bf16.mxu0 %v851
        %1119 = vmatpush1.bf16.msra.mxu0 %v850
        %1120 = vmatprep.subr.bf16.mxu0 %v847
        %1121 = vmatpush1.bf16.msra.mxu0 %v846
        %1122 = vmatprep.subr.bf16.mxu0 %v843
        %1123 = vmatpush1.bf16.msra.mxu0 %v842
        %1124 = vmatprep.subr.bf16.mxu0 %v839
        %1125 = vmatpush1.bf16.msra.mxu0 %v838
        %1126 = vmatprep.subr.bf16.mxu0 %v899
        %1127 = vmatpush2.bf16.msra.mxu0 %v898
        %1128 = vmatprep.subr.bf16.mxu0 %v895
        %1129 = vmatpush2.bf16.msra.mxu0 %v894
        %1130 = vmatprep.subr.bf16.mxu0 %v891
        %1131 = vmatpush2.bf16.msra.mxu0 %v890
        %1132 = vmatprep.subr.bf16.mxu0 %v887
        %1133 = vmatpush2.bf16.msra.mxu0 %v886
        %1134 = vmatprep.subr.bf16.mxu0 %v883
        %1135 = vmatpush2.bf16.msra.mxu0 %v882
        %1136 = vmatprep.subr.bf16.mxu0 %v879
        %1137 = vmatpush2.bf16.msra.mxu0 %v878
        %1138 = vmatprep.subr.bf16.mxu0 %v875
        %1139 = vmatpush2.bf16.msra.mxu0 %v874
        %1140 = vmatprep.subr.bf16.mxu0 %v871
        %1141 = vmatpush2.bf16.msra.mxu0 %v870
        %1142 = vmatprep.mubr.bf16.mxu0 %v300
        %1143 = vmatmul.mubr.bf16.gmra.mxu0 %v299
        %v1144 = vpop.f32.mrf.mxu0
        %v1145 = vadd.f32 %v539, %v1144
        %v1146 = vpop.f32.mrf.mxu0
        %v1147 = vadd.f32 %v543, %v1146
        %v1148 = vpop.f32.mrf.mxu0
        %v1149 = vpop.f32.mrf.mxu0
        %1150 = vdwg.mxu0
        %1151 = vmatprep.subr.bf16.mxu0 %v931
        %1152 = vmatpush1.bf16.msra.mxu0 %v930
        %1153 = vmatprep.subr.bf16.mxu0 %v927
        %1154 = vmatpush1.bf16.msra.mxu0 %v926
        %1155 = vmatprep.subr.bf16.mxu0 %v923
        %1156 = vmatpush1.bf16.msra.mxu0 %v922
        %1157 = vmatprep.subr.bf16.mxu0 %v919
        %1158 = vmatpush1.bf16.msra.mxu0 %v918
        %1159 = vmatprep.subr.bf16.mxu0 %v915
        %1160 = vmatpush1.bf16.msra.mxu0 %v914
        %1161 = vmatprep.subr.bf16.mxu0 %v911
        %1162 = vmatpush1.bf16.msra.mxu0 %v910
        %1163 = vmatprep.subr.bf16.mxu0 %v907
        %1164 = vmatpush1.bf16.msra.mxu0 %v906
        %1165 = vmatprep.subr.bf16.mxu0 %v903
        %1166 = vmatpush1.bf16.msra.mxu0 %v902
        %1167 = vmatprep.subr.bf16.mxu0 0
        %1168 = vmatpush2.bf16.msra.mxu0 0
        %1169 = vmatprep.subr.bf16.mxu0 0
        %1170 = vmatpush2.bf16.msra.mxu0 0
        %1171 = vmatprep.subr.bf16.mxu0 0
        %1172 = vmatpush2.bf16.msra.mxu0 0
        %1173 = vmatprep.subr.bf16.mxu0 0
        %1174 = vmatpush2.bf16.msra.mxu0 0
        %1175 = vmatprep.subr.bf16.mxu0 0
        %1176 = vmatpush2.bf16.msra.mxu0 0
        %1177 = vmatprep.subr.bf16.mxu0 0
        %1178 = vmatpush2.bf16.msra.mxu0 0
        %1179 = vmatprep.subr.bf16.mxu0 0
        %1180 = vmatpush2.bf16.msra.mxu0 0
        %1181 = vmatprep.subr.bf16.mxu0 0
        %1182 = vmatpush2.bf16.msra.mxu0 0
        %1183 = vmatprep.mubr.bf16.mxu0 0
        %1184 = vmatmul.mubr.bf16.gmra.mxu0 %v301
        %v1185 = vpop.f32.mrf.mxu0
        %v1186 = vadd.f32 %v1145, %v1185
        %v1187 = vpop.f32.mrf.mxu0
        %v1188 = vadd.f32 %v1147, %v1187
        %v1189 = vpop.f32.mrf.mxu0
        %v1190 = vpop.f32.mrf.mxu0
        %1191 = vdwg.mxu0
        %v1192 = vmax.f32 %v1104, 0.0
        %v1193 = vmax.f32 %v1106, 0.0
        %v1194 = vmax.f32 %v1186, 0.0
        %v1195 = vmax.f32 %v1188, 0.0
        %v1196 = vpack.c.bf16 %v1192, %v1192
        %v1197 = vpack.c.bf16 %v1193, %v1193
        %v1198 = vpack.c.bf16 %v1194, %v1194
        %v1199 = vpack.c.bf16 %v1195, %v1195
        %v1200 = vld [vmem:[#allocation5 + $0x10] sm:$0xff]
        %v1201 = vld [vmem:[#allocation5 + $0x18] sm:$0xff]
        %v1202 = vld [vmem:[#allocation5 + $0x40] sm:$0xff]
        %v1203 = vld [vmem:[#allocation5 + $0x48] sm:$0xff]
        %v1204 = vld [vmem:[#allocation5 + $0x70] sm:$0xff]
        %v1205 = vld [vmem:[#allocation5 + $0x78] sm:$0xff]
        %v1206 = vld [vmem:[#allocation5 + $0xa0] sm:$0xff]
        %v1207 = vld [vmem:[#allocation5 + $0xa8] sm:$0xff]
        %v1208 = vld [vmem:[#allocation5 + $0xd0] sm:$0xff]
        %v1209 = vld [vmem:[#allocation5 + $0xd8] sm:$0xff]
        %v1210 = vld [vmem:[#allocation5 + $0x100] sm:$0xff]
        %v1211 = vld [vmem:[#allocation5 + $0x108] sm:$0xff]
        %v1212 = vld [vmem:[#allocation5 + $0x130] sm:$0xff]
        %v1213 = vld [vmem:[#allocation5 + $0x138] sm:$0xff]
        %v1214 = vld [vmem:[#allocation5 + $0x160] sm:$0xff]
        %v1215 = vld [vmem:[#allocation5 + $0x168] sm:$0xff]
        %v1216 = vld [vmem:[#allocation5 + $0x190] sm:$0xff]
        %v1217 = vld [vmem:[#allocation5 + $0x198] sm:$0xff]
        %v1218 = vld [vmem:[#allocation5 + $0x1c0] sm:$0xff]
        %v1219 = vld [vmem:[#allocation5 + $0x1c8] sm:$0xff]
        %v1220 = vld [vmem:[#allocation5 + $0x1f0] sm:$0xff]
        %v1221 = vld [vmem:[#allocation5 + $0x1f8] sm:$0xff]
        %v1222 = vld [vmem:[#allocation5 + $0x220] sm:$0xff]
        %v1223 = vld [vmem:[#allocation5 + $0x228] sm:$0xff]
        %v1224 = vld [vmem:[#allocation5 + $0x250] sm:$0xff]
        %v1225 = vld [vmem:[#allocation5 + $0x258] sm:$0xff]
        %v1226 = vld [vmem:[#allocation5 + $0x280] sm:$0xff]
        %v1227 = vld [vmem:[#allocation5 + $0x288] sm:$0xff]
        %v1228 = vld [vmem:[#allocation5 + $0x2b0] sm:$0xff]
        %v1229 = vld [vmem:[#allocation5 + $0x2b8] sm:$0xff]
        %v1230 = vld [vmem:[#allocation5 + $0x2e0] sm:$0xff]
        %v1231 = vld [vmem:[#allocation5 + $0x2e8] sm:$0xff]
        %v1232 = vld [vmem:[#allocation5 + $0x310] sm:$0xff]
        %v1233 = vld [vmem:[#allocation5 + $0x318] sm:$0xff]
        %v1234 = vld [vmem:[#allocation5 + $0x340] sm:$0xff]
        %v1235 = vld [vmem:[#allocation5 + $0x348] sm:$0xff]
        %v1236 = vld [vmem:[#allocation5 + $0x370] sm:$0xff]
        %v1237 = vld [vmem:[#allocation5 + $0x378] sm:$0xff]
        %v1238 = vld [vmem:[#allocation5 + $0x3a0] sm:$0xff]
        %v1239 = vld [vmem:[#allocation5 + $0x3a8] sm:$0xff]
        %v1240 = vld [vmem:[#allocation5 + $0x3d0] sm:$0xff]
        %v1241 = vld [vmem:[#allocation5 + $0x3d8] sm:$0xff]
        %v1242 = vld [vmem:[#allocation5 + $0x400] sm:$0xff]
        %v1243 = vld [vmem:[#allocation5 + $0x408] sm:$0xff]
        %v1244 = vld [vmem:[#allocation5 + $0x430] sm:$0xff]
        %v1245 = vld [vmem:[#allocation5 + $0x438] sm:$0xff]
        %v1246 = vld [vmem:[#allocation5 + $0x460] sm:$0xff]
        %v1247 = vld [vmem:[#allocation5 + $0x468] sm:$0xff]
        %v1248 = vld [vmem:[#allocation5 + $0x490] sm:$0xff]
        %v1249 = vld [vmem:[#allocation5 + $0x498] sm:$0xff]
        %v1250 = vld [vmem:[#allocation5 + $0x4c0] sm:$0xff]
        %v1251 = vld [vmem:[#allocation5 + $0x4c8] sm:$0xff]
        %v1252 = vld [vmem:[#allocation5 + $0x4f0] sm:$0xff]
        %v1253 = vld [vmem:[#allocation5 + $0x4f8] sm:$0xff]
        %v1254 = vld [vmem:[#allocation5 + $0x520] sm:$0xff]
        %v1255 = vld [vmem:[#allocation5 + $0x528] sm:$0xff]
        %v1256 = vld [vmem:[#allocation5 + $0x550] sm:$0xff]
        %v1257 = vld [vmem:[#allocation5 + $0x558] sm:$0xff]
        %v1258 = vld [vmem:[#allocation5 + $0x580] sm:$0xff]
        %v1259 = vld [vmem:[#allocation5 + $0x588] sm:$0xff]
        %v1260 = vld [vmem:[#allocation5 + $0x5b0] sm:$0xff]
        %v1261 = vld [vmem:[#allocation5 + $0x5b8] sm:$0xff]
        %v1262 = vld [vmem:[#allocation5 + $0x5e0] sm:$0xff]
        %v1263 = vld [vmem:[#allocation5 + $0x5e8] sm:$0xff]
        %v1264 = vld [vmem:[#allocation5 + $0x610] sm:$0xff]
        %v1265 = vld [vmem:[#allocation5 + $0x618] sm:$0xff]
        %v1266 = vld [vmem:[#allocation5 + $0x640] sm:$0xff]
        %v1267 = vld [vmem:[#allocation5 + $0x648] sm:$0xff]
        %v1268 = vld [vmem:[#allocation5 + $0x670] sm:$0xff]
        %v1269 = vld [vmem:[#allocation5 + $0x678] sm:$0xff]
        %v1270 = vld [vmem:[#allocation5 + $0x6a0] sm:$0xff]
        %v1271 = vld [vmem:[#allocation5 + $0x6a8] sm:$0xff]
        %v1272 = vld [vmem:[#allocation5 + $0x6d0] sm:$0xff]
        %v1273 = vld [vmem:[#allocation5 + $0x6d8] sm:$0xff]
        %v1274 = vld [vmem:[#allocation5 + $0x700] sm:$0xff]
        %v1275 = vld [vmem:[#allocation5 + $0x708] sm:$0xff]
        %v1276 = vld [vmem:[#allocation5 + $0x730] sm:$0xff]
        %v1277 = vld [vmem:[#allocation5 + $0x738] sm:$0xff]
        %v1278 = vld [vmem:[#allocation5 + $0x760] sm:$0xff]
        %v1279 = vld [vmem:[#allocation5 + $0x768] sm:$0xff]
        %v1280 = vld [vmem:[#allocation5 + $0x790] sm:$0xff]
        %v1281 = vld [vmem:[#allocation5 + $0x798] sm:$0xff]
        %v1282 = vld [vmem:[#allocation5 + $0x7c0] sm:$0xff]
        %v1283 = vld [vmem:[#allocation5 + $0x7c8] sm:$0xff]
        %v1284 = vld [vmem:[#allocation5 + $0x7f0] sm:$0xff]
        %v1285 = vld [vmem:[#allocation5 + $0x7f8] sm:$0xff]
        %v1286 = vld [vmem:[#allocation5 + $0x820] sm:$0xff]
        %v1287 = vld [vmem:[#allocation5 + $0x828] sm:$0xff]
        %v1288 = vld [vmem:[#allocation5 + $0x850] sm:$0xff]
        %v1289 = vld [vmem:[#allocation5 + $0x858] sm:$0xff]
        %v1290 = vld [vmem:[#allocation5 + $0x880] sm:$0xff]
        %v1291 = vld [vmem:[#allocation5 + $0x888] sm:$0xff]
        %v1292 = vld [vmem:[#allocation5 + $0x8b0] sm:$0xff]
        %v1293 = vld [vmem:[#allocation5 + $0x8b8] sm:$0xff]
        %v1294 = vld [vmem:[#allocation5 + $0x8e0] sm:$0xff]
        %v1295 = vld [vmem:[#allocation5 + $0x8e8] sm:$0xff]
        %v1296 = vld [vmem:[#allocation7 + $0x4] sm:$0xf]
        %v1297 = vld [vmem:[#allocation8 + $0x300] sm:$0xff]
        %v1298 = vld [vmem:[#allocation8 + $0x308] sm:$0xf]
        %v1299 = vld [vmem:[#allocation8 + $0x30c] sm:$0xff]
        %v1300 = vld [vmem:[#allocation8 + $0x314] sm:$0xf]
        %v1301 = vld [vmem:[#allocation8 + $0x318] sm:$0xff]
        %v1302 = vld [vmem:[#allocation8 + $0x320] sm:$0xf]
        %v1303 = vld [vmem:[#allocation8 + $0x324] sm:$0xff]
        %v1304 = vld [vmem:[#allocation8 + $0x32c] sm:$0xf]
        %v1305 = vld [vmem:[#allocation8 + $0x330] sm:$0xff]
        %v1306 = vld [vmem:[#allocation8 + $0x338] sm:$0xf]
        %v1307 = vld [vmem:[#allocation8 + $0x33c] sm:$0xff]
        %v1308 = vld [vmem:[#allocation8 + $0x344] sm:$0xf]
        %v1309 = vld [vmem:[#allocation8 + $0x348] sm:$0xff]
        %v1310 = vld [vmem:[#allocation8 + $0x350] sm:$0xf]
        %v1311 = vld [vmem:[#allocation8 + $0x354] sm:$0xff]
        %v1312 = vld [vmem:[#allocation8 + $0x35c] sm:$0xf]
        %v1313 = vld [vmem:[#allocation8 + $0x360] sm:$0xff]
        %v1314 = vld [vmem:[#allocation8 + $0x368] sm:$0xf]
        %v1315 = vld [vmem:[#allocation8 + $0x36c] sm:$0xff]
        %v1316 = vld [vmem:[#allocation8 + $0x374] sm:$0xf]
        %v1317 = vld [vmem:[#allocation8 + $0x378] sm:$0xff]
        %v1318 = vld [vmem:[#allocation8 + $0x380] sm:$0xf]
        %v1319 = vld [vmem:[#allocation8 + $0x384] sm:$0xff]
        %v1320 = vld [vmem:[#allocation8 + $0x38c] sm:$0xf]
        %v1321 = vld [vmem:[#allocation8 + $0x390] sm:$0xff]
        %v1322 = vld [vmem:[#allocation8 + $0x398] sm:$0xf]
        %v1323 = vld [vmem:[#allocation8 + $0x39c] sm:$0xff]
        %v1324 = vld [vmem:[#allocation8 + $0x3a4] sm:$0xf]
        %v1325 = vld [vmem:[#allocation8 + $0x3a8] sm:$0xff]
        %v1326 = vld [vmem:[#allocation8 + $0x3b0] sm:$0xf]
        %v1327 = vld [vmem:[#allocation8 + $0x3b4] sm:$0xff]
        %v1328 = vld [vmem:[#allocation8 + $0x3bc] sm:$0xf]
        %v1329 = vld [vmem:[#allocation8 + $0x3c0] sm:$0xff]
        %v1330 = vld [vmem:[#allocation8 + $0x3c8] sm:$0xf]
        %v1331 = vld [vmem:[#allocation8 + $0x3cc] sm:$0xff]
        %v1332 = vld [vmem:[#allocation8 + $0x3d4] sm:$0xf]
        %v1333 = vld [vmem:[#allocation8 + $0x3d8] sm:$0xff]
        %v1334 = vld [vmem:[#allocation8 + $0x3e0] sm:$0xf]
        %v1335 = vld [vmem:[#allocation8 + $0x3e4] sm:$0xff]
        %v1336 = vld [vmem:[#allocation8 + $0x3ec] sm:$0xf]
        %v1337 = vld [vmem:[#allocation8 + $0x3f0] sm:$0xff]
        %v1338 = vld [vmem:[#allocation8 + $0x3f8] sm:$0xf]
        %v1339 = vld [vmem:[#allocation8 + $0x3fc] sm:$0xff]
        %v1340 = vld [vmem:[#allocation8 + $0x404] sm:$0xf]
        %v1341 = vld [vmem:[#allocation8 + $0x408] sm:$0xff]
        %v1342 = vld [vmem:[#allocation8 + $0x410] sm:$0xf]
        %v1343 = vld [vmem:[#allocation8 + $0x414] sm:$0xff]
        %v1344 = vld [vmem:[#allocation8 + $0x41c] sm:$0xf]
        %v1345 = vld [vmem:[#allocation8 + $0x420] sm:$0xff]
        %v1346 = vld [vmem:[#allocation8 + $0x428] sm:$0xf]
        %v1347 = vld [vmem:[#allocation8 + $0x42c] sm:$0xff]
        %v1348 = vld [vmem:[#allocation8 + $0x434] sm:$0xf]
        %v1349 = vld [vmem:[#allocation8 + $0x438] sm:$0xff]
        %v1350 = vld [vmem:[#allocation8 + $0x440] sm:$0xf]
        %v1351 = vld [vmem:[#allocation8 + $0x444] sm:$0xff]
        %v1352 = vld [vmem:[#allocation8 + $0x44c] sm:$0xf]
        %v1353 = vld [vmem:[#allocation8 + $0x450] sm:$0xff]
        %v1354 = vld [vmem:[#allocation8 + $0x458] sm:$0xf]
        %v1355 = vld [vmem:[#allocation8 + $0x45c] sm:$0xff]
        %v1356 = vld [vmem:[#allocation8 + $0x464] sm:$0xf]
        %v1357 = vld [vmem:[#allocation8 + $0x468] sm:$0xff]
        %v1358 = vld [vmem:[#allocation8 + $0x470] sm:$0xf]
        %v1359 = vld [vmem:[#allocation8 + $0x474] sm:$0xff]
        %v1360 = vld [vmem:[#allocation8 + $0x47c] sm:$0xf]
        %v1361 = vld [vmem:[#allocation8 + $0x480] sm:$0xff]
        %v1362 = vld [vmem:[#allocation8 + $0x488] sm:$0xf]
        %v1363 = vld [vmem:[#allocation8 + $0x48c] sm:$0xff]
        %v1364 = vld [vmem:[#allocation8 + $0x494] sm:$0xf]
        %v1365 = vld [vmem:[#allocation8 + $0x498] sm:$0xff]
        %v1366 = vld [vmem:[#allocation8 + $0x4a0] sm:$0xf]
        %v1367 = vld [vmem:[#allocation8 + $0x4a4] sm:$0xff]
        %v1368 = vld [vmem:[#allocation8 + $0x4ac] sm:$0xf]
        %v1369 = vld [vmem:[#allocation8 + $0x4b0] sm:$0xff]
        %v1370 = vld [vmem:[#allocation8 + $0x4b8] sm:$0xf]
        %v1371 = vld [vmem:[#allocation8 + $0x4bc] sm:$0xff]
        %v1372 = vld [vmem:[#allocation8 + $0x4c4] sm:$0xf]
        %v1373 = vld [vmem:[#allocation8 + $0x4c8] sm:$0xff]
        %v1374 = vld [vmem:[#allocation8 + $0x4d0] sm:$0xf]
        %v1375 = vld [vmem:[#allocation8 + $0x4d4] sm:$0xff]
        %v1376 = vld [vmem:[#allocation8 + $0x4dc] sm:$0xf]
        %v1377 = vld [vmem:[#allocation8 + $0x4e0] sm:$0xff]
        %v1378 = vld [vmem:[#allocation8 + $0x4e8] sm:$0xf]
        %v1379 = vld [vmem:[#allocation8 + $0x4ec] sm:$0xff]
        %v1380 = vld [vmem:[#allocation8 + $0x4f4] sm:$0xf]
        %v1381 = vld [vmem:[#allocation8 + $0x4f8] sm:$0xff]
        %v1382 = vld [vmem:[#allocation8 + $0x500] sm:$0xf]
        %v1383 = vld [vmem:[#allocation8 + $0x504] sm:$0xff]
        %v1384 = vld [vmem:[#allocation8 + $0x50c] sm:$0xf]
        %v1385 = vld [vmem:[#allocation8 + $0x510] sm:$0xff]
        %v1386 = vld [vmem:[#allocation8 + $0x518] sm:$0xf]
        %v1387 = vld [vmem:[#allocation8 + $0x51c] sm:$0xff]
        %v1388 = vld [vmem:[#allocation8 + $0x524] sm:$0xf]
        %v1389 = vld [vmem:[#allocation8 + $0x528] sm:$0xff]
        %v1390 = vld [vmem:[#allocation8 + $0x530] sm:$0xf]
        %v1391 = vld [vmem:[#allocation8 + $0x534] sm:$0xff]
        %v1392 = vld [vmem:[#allocation8 + $0x53c] sm:$0xf]
        %v1393 = vld [vmem:[#allocation8 + $0x540] sm:$0xff]
        %v1394 = vld [vmem:[#allocation8 + $0x548] sm:$0xf]
        %v1395 = vld [vmem:[#allocation8 + $0x54c] sm:$0xff]
        %v1396 = vld [vmem:[#allocation8 + $0x554] sm:$0xf]
        %v1397 = vld [vmem:[#allocation8 + $0x558] sm:$0xff]
        %v1398 = vld [vmem:[#allocation8 + $0x560] sm:$0xf]
        %v1399 = vld [vmem:[#allocation8 + $0x564] sm:$0xff]
        %v1400 = vld [vmem:[#allocation8 + $0x56c] sm:$0xf]
        %v1401 = vld [vmem:[#allocation8 + $0x570] sm:$0xff]
        %v1402 = vld [vmem:[#allocation8 + $0x578] sm:$0xf]
        %v1403 = vld [vmem:[#allocation8 + $0x57c] sm:$0xff]
        %v1404 = vld [vmem:[#allocation8 + $0x584] sm:$0xf]
        %v1405 = vld [vmem:[#allocation8 + $0x588] sm:$0xff]
        %v1406 = vld [vmem:[#allocation8 + $0x590] sm:$0xf]
        %v1407 = vld [vmem:[#allocation8 + $0x594] sm:$0xff]
        %v1408 = vld [vmem:[#allocation8 + $0x59c] sm:$0xf]
        %v1409 = vld [vmem:[#allocation8 + $0x5a0] sm:$0xff]
        %v1410 = vld [vmem:[#allocation8 + $0x5a8] sm:$0xf]
        %v1411 = vld [vmem:[#allocation8 + $0x5ac] sm:$0xff]
        %v1412 = vld [vmem:[#allocation8 + $0x5b4] sm:$0xf]
        %v1413 = vld [vmem:[#allocation8 + $0x5b8] sm:$0xff]
        %v1414 = vld [vmem:[#allocation8 + $0x5c0] sm:$0xf]
        %v1415 = vld [vmem:[#allocation8 + $0x5c4] sm:$0xff]
        %v1416 = vld [vmem:[#allocation8 + $0x5cc] sm:$0xf]
        %v1417 = vld [vmem:[#allocation8 + $0x5d0] sm:$0xff]
        %v1418 = vld [vmem:[#allocation8 + $0x5d8] sm:$0xf]
        %v1419 = vld [vmem:[#allocation8 + $0x5dc] sm:$0xff]
        %v1420 = vld [vmem:[#allocation8 + $0x5e4] sm:$0xf]
        %v1421 = vld [vmem:[#allocation8 + $0x5e8] sm:$0xff]
        %v1422 = vld [vmem:[#allocation8 + $0x5f0] sm:$0xf]
        %v1423 = vld [vmem:[#allocation8 + $0x5f4] sm:$0xff]
        %v1424 = vld [vmem:[#allocation8 + $0x5fc] sm:$0xf]
        %v1426 = vlaneseq
        %v1427 = vshrl.u32 %v1426, 7
        %v1428 = vsub.s32 0, %v1427
        %v1429 = vrot.slane %v1296, %v1428
        %v1430 = vlaneseq
        %v1431 = vshrl.u32 %v1430, 7
        %v1432 = vsub.s32 1, %v1431
        %v1433 = vrot.slane %v1296, %v1432
        %v1434 = vlaneseq
        %v1435 = vshrl.u32 %v1434, 7
        %v1436 = vsub.s32 2, %v1435
        %v1437 = vrot.slane %v1296, %v1436
        %v1438 = vlaneseq
        %v1439 = vshrl.u32 %v1438, 7
        %v1440 = vsub.s32 3, %v1439
        %v1441 = vrot.slane %v1296, %v1440
        %v1542 = vunpack.c.l.b16 %v1200
        %v1543 = vunpack.c.h.b16 %v1200
        %v1544 = vunpack.c.l.b16 %v1201
        %v1545 = vunpack.c.h.b16 %v1201
        %v1546 = vunpack.c.l.b16 %v1202
        %v1547 = vunpack.c.h.b16 %v1202
        %v1548 = vunpack.c.l.b16 %v1203
        %v1549 = vunpack.c.h.b16 %v1203
        %v1550 = vunpack.c.l.b16 %v1204
        %v1551 = vunpack.c.h.b16 %v1204
        %v1552 = vunpack.c.l.b16 %v1205
        %v1553 = vunpack.c.h.b16 %v1205
        %v1554 = vunpack.c.l.b16 %v1206
        %v1555 = vunpack.c.h.b16 %v1206
        %v1556 = vunpack.c.l.b16 %v1207
        %v1557 = vunpack.c.h.b16 %v1207
        %v1558 = vunpack.c.l.b16 %v1208
        %v1559 = vunpack.c.h.b16 %v1208
        %v1560 = vunpack.c.l.b16 %v1209
        %v1561 = vunpack.c.h.b16 %v1209
        %v1562 = vunpack.c.l.b16 %v1210
        %v1563 = vunpack.c.h.b16 %v1210
        %v1564 = vunpack.c.l.b16 %v1211
        %v1565 = vunpack.c.h.b16 %v1211
        %v1566 = vunpack.c.l.b16 %v1212
        %v1567 = vunpack.c.h.b16 %v1212
        %v1568 = vunpack.c.l.b16 %v1213
        %v1569 = vunpack.c.h.b16 %v1213
        %v1570 = vunpack.c.l.b16 %v1214
        %v1571 = vunpack.c.h.b16 %v1214
        %v1572 = vunpack.c.l.b16 %v1215
        %v1573 = vunpack.c.h.b16 %v1215
        %v1574 = vunpack.c.l.b16 %v1216
        %v1575 = vunpack.c.h.b16 %v1216
        %v1576 = vunpack.c.l.b16 %v1217
        %v1577 = vunpack.c.h.b16 %v1217
        %v1578 = vunpack.c.l.b16 %v1218
        %v1579 = vunpack.c.h.b16 %v1218
        %v1580 = vunpack.c.l.b16 %v1219
        %v1581 = vunpack.c.h.b16 %v1219
        %v1582 = vunpack.c.l.b16 %v1220
        %v1583 = vunpack.c.h.b16 %v1220
        %v1584 = vunpack.c.l.b16 %v1221
        %v1585 = vunpack.c.h.b16 %v1221
        %v1586 = vunpack.c.l.b16 %v1222
        %v1587 = vunpack.c.h.b16 %v1222
        %v1588 = vunpack.c.l.b16 %v1223
        %v1589 = vunpack.c.h.b16 %v1223
        %v1590 = vunpack.c.l.b16 %v1224
        %v1591 = vunpack.c.h.b16 %v1224
        %v1592 = vunpack.c.l.b16 %v1225
        %v1593 = vunpack.c.h.b16 %v1225
        %v1594 = vunpack.c.l.b16 %v1226
        %v1595 = vunpack.c.h.b16 %v1226
        %v1596 = vunpack.c.l.b16 %v1227
        %v1597 = vunpack.c.h.b16 %v1227
        %v1598 = vunpack.c.l.b16 %v1228
        %v1599 = vunpack.c.h.b16 %v1228
        %v1600 = vunpack.c.l.b16 %v1229
        %v1601 = vunpack.c.h.b16 %v1229
        %v1602 = vunpack.c.l.b16 %v1230
        %v1603 = vunpack.c.h.b16 %v1230
        %v1604 = vunpack.c.l.b16 %v1231
        %v1605 = vunpack.c.h.b16 %v1231
        %v1606 = vunpack.c.l.b16 %v1232
        %v1607 = vunpack.c.h.b16 %v1232
        %v1608 = vunpack.c.l.b16 %v1233
        %v1609 = vunpack.c.h.b16 %v1233
        %v1610 = vunpack.c.l.b16 %v1234
        %v1611 = vunpack.c.h.b16 %v1234
        %v1612 = vunpack.c.l.b16 %v1235
        %v1613 = vunpack.c.h.b16 %v1235
        %v1614 = vunpack.c.l.b16 %v1236
        %v1615 = vunpack.c.h.b16 %v1236
        %v1616 = vunpack.c.l.b16 %v1237
        %v1617 = vunpack.c.h.b16 %v1237
        %v1618 = vunpack.c.l.b16 %v1238
        %v1619 = vunpack.c.h.b16 %v1238
        %v1620 = vunpack.c.l.b16 %v1239
        %v1621 = vunpack.c.h.b16 %v1239
        %v1622 = vunpack.c.l.b16 %v1240
        %v1623 = vunpack.c.h.b16 %v1240
        %v1624 = vunpack.c.l.b16 %v1241
        %v1625 = vunpack.c.h.b16 %v1241
        %v1626 = vunpack.c.l.b16 %v1242
        %v1627 = vunpack.c.h.b16 %v1242
        %v1628 = vunpack.c.l.b16 %v1243
        %v1629 = vunpack.c.h.b16 %v1243
        %v1630 = vunpack.c.l.b16 %v1244
        %v1631 = vunpack.c.h.b16 %v1244
        %v1632 = vunpack.c.l.b16 %v1245
        %v1633 = vunpack.c.h.b16 %v1245
        %v1634 = vunpack.c.l.b16 %v1246
        %v1635 = vunpack.c.h.b16 %v1246
        %v1636 = vunpack.c.l.b16 %v1247
        %v1637 = vunpack.c.h.b16 %v1247
        %v1638 = vunpack.c.l.b16 %v1248
        %v1639 = vunpack.c.h.b16 %v1248
        %v1640 = vunpack.c.l.b16 %v1249
        %v1641 = vunpack.c.h.b16 %v1249
        %v1642 = vunpack.c.l.b16 %v1250
        %v1643 = vunpack.c.h.b16 %v1250
        %v1644 = vunpack.c.l.b16 %v1251
        %v1645 = vunpack.c.h.b16 %v1251
        %v1646 = vunpack.c.l.b16 %v1252
        %v1647 = vunpack.c.h.b16 %v1252
        %v1648 = vunpack.c.l.b16 %v1253
        %v1649 = vunpack.c.h.b16 %v1253
        %v1650 = vunpack.c.l.b16 %v1254
        %v1651 = vunpack.c.h.b16 %v1254
        %v1652 = vunpack.c.l.b16 %v1255
        %v1653 = vunpack.c.h.b16 %v1255
        %v1654 = vunpack.c.l.b16 %v1256
        %v1655 = vunpack.c.h.b16 %v1256
        %v1656 = vunpack.c.l.b16 %v1257
        %v1657 = vunpack.c.h.b16 %v1257
        %v1658 = vunpack.c.l.b16 %v1258
        %v1659 = vunpack.c.h.b16 %v1258
        %v1660 = vunpack.c.l.b16 %v1259
        %v1661 = vunpack.c.h.b16 %v1259
        %v1662 = vunpack.c.l.b16 %v1260
        %v1663 = vunpack.c.h.b16 %v1260
        %v1664 = vunpack.c.l.b16 %v1261
        %v1665 = vunpack.c.h.b16 %v1261
        %v1666 = vunpack.c.l.b16 %v1262
        %v1667 = vunpack.c.h.b16 %v1262
        %v1668 = vunpack.c.l.b16 %v1263
        %v1669 = vunpack.c.h.b16 %v1263
        %v1670 = vunpack.c.l.b16 %v1264
        %v1671 = vunpack.c.h.b16 %v1264
        %v1672 = vunpack.c.l.b16 %v1265
        %v1673 = vunpack.c.h.b16 %v1265
        %v1674 = vunpack.c.l.b16 %v1266
        %v1675 = vunpack.c.h.b16 %v1266
        %v1676 = vunpack.c.l.b16 %v1267
        %v1677 = vunpack.c.h.b16 %v1267
        %v1678 = vunpack.c.l.b16 %v1268
        %v1679 = vunpack.c.h.b16 %v1268
        %v1680 = vunpack.c.l.b16 %v1269
        %v1681 = vunpack.c.h.b16 %v1269
        %v1682 = vunpack.c.l.b16 %v1270
        %v1683 = vunpack.c.h.b16 %v1270
        %v1684 = vunpack.c.l.b16 %v1271
        %v1685 = vunpack.c.h.b16 %v1271
        %v1686 = vunpack.c.l.b16 %v1272
        %v1687 = vunpack.c.h.b16 %v1272
        %v1688 = vunpack.c.l.b16 %v1273
        %v1689 = vunpack.c.h.b16 %v1273
        %v1690 = vunpack.c.l.b16 %v1274
        %v1691 = vunpack.c.h.b16 %v1274
        %v1692 = vunpack.c.l.b16 %v1275
        %v1693 = vunpack.c.h.b16 %v1275
        %v1694 = vunpack.c.l.b16 %v1276
        %v1695 = vunpack.c.h.b16 %v1276
        %v1696 = vunpack.c.l.b16 %v1277
        %v1697 = vunpack.c.h.b16 %v1277
        %v1698 = vunpack.c.l.b16 %v1278
        %v1699 = vunpack.c.h.b16 %v1278
        %v1700 = vunpack.c.l.b16 %v1279
        %v1701 = vunpack.c.h.b16 %v1279
        %v1702 = vunpack.c.l.b16 %v1280
        %v1703 = vunpack.c.h.b16 %v1280
        %v1704 = vunpack.c.l.b16 %v1281
        %v1705 = vunpack.c.h.b16 %v1281
        %v1706 = vunpack.c.l.b16 %v1282
        %v1707 = vunpack.c.h.b16 %v1282
        %v1708 = vunpack.c.l.b16 %v1283
        %v1709 = vunpack.c.h.b16 %v1283
        %v1710 = vunpack.c.l.b16 %v1284
        %v1711 = vunpack.c.h.b16 %v1284
        %v1712 = vunpack.c.l.b16 %v1285
        %v1713 = vunpack.c.h.b16 %v1285
        %v1714 = vunpack.c.l.b16 %v1286
        %v1715 = vunpack.c.h.b16 %v1286
        %v1716 = vunpack.c.l.b16 %v1287
        %v1717 = vunpack.c.h.b16 %v1287
        %v1718 = vunpack.c.l.b16 %v1288
        %v1719 = vunpack.c.h.b16 %v1288
        %v1720 = vunpack.c.l.b16 %v1289
        %v1721 = vunpack.c.h.b16 %v1289
        %v1722 = vunpack.c.l.b16 %v1290
        %v1723 = vunpack.c.h.b16 %v1290
        %v1724 = vunpack.c.l.b16 %v1291
        %v1725 = vunpack.c.h.b16 %v1291
        %v1726 = vunpack.c.l.b16 %v1292
        %v1727 = vunpack.c.h.b16 %v1292
        %v1728 = vunpack.c.l.b16 %v1293
        %v1729 = vunpack.c.h.b16 %v1293
        %v1730 = vunpack.c.l.b16 %v1294
        %v1731 = vunpack.c.h.b16 %v1294
        %v1732 = vunpack.c.l.b16 %v1295
        %v1733 = vunpack.c.h.b16 %v1295
        %v1734 = vpack.c.b16 %v1546, %v1542
        %v1735 = vpack.c.b16 %v1547, %v1543
        %v1736 = vpack.c.b16 %v1548, %v1544
        %v1737 = vpack.c.b16 %v1549, %v1545
        %v1738 = vpack.c.b16 %v1554, %v1550
        %v1739 = vpack.c.b16 %v1555, %v1551
        %v1740 = vpack.c.b16 %v1556, %v1552
        %v1741 = vpack.c.b16 %v1557, %v1553
        %v1742 = vpack.c.b16 %v1562, %v1558
        %v1743 = vpack.c.b16 %v1563, %v1559
        %v1744 = vpack.c.b16 %v1564, %v1560
        %v1745 = vpack.c.b16 %v1565, %v1561
        %v1746 = vpack.c.b16 %v1570, %v1566
        %v1747 = vpack.c.b16 %v1571, %v1567
        %v1748 = vpack.c.b16 %v1572, %v1568
        %v1749 = vpack.c.b16 %v1573, %v1569
        %v1750 = vpack.c.b16 %v1578, %v1574
        %v1751 = vpack.c.b16 %v1579, %v1575
        %v1752 = vpack.c.b16 %v1580, %v1576
        %v1753 = vpack.c.b16 %v1581, %v1577
        %v1754 = vpack.c.b16 %v1586, %v1582
        %v1755 = vpack.c.b16 %v1587, %v1583
        %v1756 = vpack.c.b16 %v1588, %v1584
        %v1757 = vpack.c.b16 %v1589, %v1585
        %v1758 = vpack.c.b16 %v1594, %v1590
        %v1759 = vpack.c.b16 %v1595, %v1591
        %v1760 = vpack.c.b16 %v1596, %v1592
        %v1761 = vpack.c.b16 %v1597, %v1593
        %v1762 = vpack.c.b16 %v1602, %v1598
        %v1763 = vpack.c.b16 %v1603, %v1599
        %v1764 = vpack.c.b16 %v1604, %v1600
        %v1765 = vpack.c.b16 %v1605, %v1601
        %v1766 = vpack.c.b16 %v1610, %v1606
        %v1767 = vpack.c.b16 %v1611, %v1607
        %v1768 = vpack.c.b16 %v1612, %v1608
        %v1769 = vpack.c.b16 %v1613, %v1609
        %v1770 = vpack.c.b16 %v1618, %v1614
        %v1771 = vpack.c.b16 %v1619, %v1615
        %v1772 = vpack.c.b16 %v1620, %v1616
        %v1773 = vpack.c.b16 %v1621, %v1617
        %v1774 = vpack.c.b16 %v1626, %v1622
        %v1775 = vpack.c.b16 %v1627, %v1623
        %v1776 = vpack.c.b16 %v1628, %v1624
        %v1777 = vpack.c.b16 %v1629, %v1625
        %v1778 = vpack.c.b16 %v1634, %v1630
        %v1779 = vpack.c.b16 %v1635, %v1631
        %v1780 = vpack.c.b16 %v1636, %v1632
        %v1781 = vpack.c.b16 %v1637, %v1633
        %v1782 = vpack.c.b16 %v1642, %v1638
        %v1783 = vpack.c.b16 %v1643, %v1639
        %v1784 = vpack.c.b16 %v1644, %v1640
        %v1785 = vpack.c.b16 %v1645, %v1641
        %v1786 = vpack.c.b16 %v1650, %v1646
        %v1787 = vpack.c.b16 %v1651, %v1647
        %v1788 = vpack.c.b16 %v1652, %v1648
        %v1789 = vpack.c.b16 %v1653, %v1649
        %v1790 = vpack.c.b16 %v1658, %v1654
        %v1791 = vpack.c.b16 %v1659, %v1655
        %v1792 = vpack.c.b16 %v1660, %v1656
        %v1793 = vpack.c.b16 %v1661, %v1657
        %v1794 = vpack.c.b16 %v1666, %v1662
        %v1795 = vpack.c.b16 %v1667, %v1663
        %v1796 = vpack.c.b16 %v1668, %v1664
        %v1797 = vpack.c.b16 %v1669, %v1665
        %v1798 = vpack.c.b16 %v1674, %v1670
        %v1799 = vpack.c.b16 %v1675, %v1671
        %v1800 = vpack.c.b16 %v1676, %v1672
        %v1801 = vpack.c.b16 %v1677, %v1673
        %v1802 = vpack.c.b16 %v1682, %v1678
        %v1803 = vpack.c.b16 %v1683, %v1679
        %v1804 = vpack.c.b16 %v1684, %v1680
        %v1805 = vpack.c.b16 %v1685, %v1681
        %v1806 = vpack.c.b16 %v1690, %v1686
        %v1807 = vpack.c.b16 %v1691, %v1687
        %v1808 = vpack.c.b16 %v1692, %v1688
        %v1809 = vpack.c.b16 %v1693, %v1689
        %v1810 = vpack.c.b16 %v1698, %v1694
        %v1811 = vpack.c.b16 %v1699, %v1695
        %v1812 = vpack.c.b16 %v1700, %v1696
        %v1813 = vpack.c.b16 %v1701, %v1697
        %v1814 = vpack.c.b16 %v1706, %v1702
        %v1815 = vpack.c.b16 %v1707, %v1703
        %v1816 = vpack.c.b16 %v1708, %v1704
        %v1817 = vpack.c.b16 %v1709, %v1705
        %v1818 = vpack.c.b16 %v1714, %v1710
        %v1819 = vpack.c.b16 %v1715, %v1711
        %v1820 = vpack.c.b16 %v1716, %v1712
        %v1821 = vpack.c.b16 %v1717, %v1713
        %v1822 = vpack.c.b16 %v1722, %v1718
        %v1823 = vpack.c.b16 %v1723, %v1719
        %v1824 = vpack.c.b16 %v1724, %v1720
        %v1825 = vpack.c.b16 %v1725, %v1721
        %v1826 = vpack.c.b16 %v1730, %v1726
        %v1827 = vpack.c.b16 %v1731, %v1727
        %v1828 = vpack.c.b16 %v1732, %v1728
        %v1829 = vpack.c.b16 %v1733, %v1729
        %1926 = vmatprep.subr.bf16.mxu0 %v1763
        %1927 = vmatpush1.bf16.msra.mxu0 %v1762
        %1928 = vmatprep.subr.bf16.mxu0 %v1759
        %1929 = vmatpush1.bf16.msra.mxu0 %v1758
        %1930 = vmatprep.subr.bf16.mxu0 %v1755
        %1931 = vmatpush1.bf16.msra.mxu0 %v1754
        %1932 = vmatprep.subr.bf16.mxu0 %v1751
        %1933 = vmatpush1.bf16.msra.mxu0 %v1750
        %1934 = vmatprep.subr.bf16.mxu0 %v1747
        %1935 = vmatpush1.bf16.msra.mxu0 %v1746
        %1936 = vmatprep.subr.bf16.mxu0 %v1743
        %1937 = vmatpush1.bf16.msra.mxu0 %v1742
        %1938 = vmatprep.subr.bf16.mxu0 %v1739
        %1939 = vmatpush1.bf16.msra.mxu0 %v1738
        %1940 = vmatprep.subr.bf16.mxu0 %v1735
        %1941 = vmatpush1.bf16.msra.mxu0 %v1734
        %1942 = vmatprep.subr.bf16.mxu0 %v1795
        %1943 = vmatpush2.bf16.msra.mxu0 %v1794
        %1944 = vmatprep.subr.bf16.mxu0 %v1791
        %1945 = vmatpush2.bf16.msra.mxu0 %v1790
        %1946 = vmatprep.subr.bf16.mxu0 %v1787
        %1947 = vmatpush2.bf16.msra.mxu0 %v1786
        %1948 = vmatprep.subr.bf16.mxu0 %v1783
        %1949 = vmatpush2.bf16.msra.mxu0 %v1782
        %1950 = vmatprep.subr.bf16.mxu0 %v1779
        %1951 = vmatpush2.bf16.msra.mxu0 %v1778
        %1952 = vmatprep.subr.bf16.mxu0 %v1775
        %1953 = vmatpush2.bf16.msra.mxu0 %v1774
        %1954 = vmatprep.subr.bf16.mxu0 %v1771
        %1955 = vmatpush2.bf16.msra.mxu0 %v1770
        %1956 = vmatprep.subr.bf16.mxu0 %v1767
        %1957 = vmatpush2.bf16.msra.mxu0 %v1766
        %1958 = vmatprep.mubr.bf16.mxu0 %v300
        %1959 = vmatmul.mubr.bf16.gmra.mxu0 %v299
        %v1960 = vpop.f32.mrf.mxu0
        %v1961 = vadd.f32 %v1429, %v1960
        %v1962 = vpop.f32.mrf.mxu0
        %v1963 = vadd.f32 %v1433, %v1962
        %v1964 = vpop.f32.mrf.mxu0
        %v1965 = vpop.f32.mrf.mxu0
        %1966 = vdwg.mxu0
        %1967 = vmatprep.subr.bf16.mxu0 %v1827
        %1968 = vmatpush1.bf16.msra.mxu0 %v1826
        %1969 = vmatprep.subr.bf16.mxu0 %v1823
        %1970 = vmatpush1.bf16.msra.mxu0 %v1822
        %1971 = vmatprep.subr.bf16.mxu0 %v1819
        %1972 = vmatpush1.bf16.msra.mxu0 %v1818
        %1973 = vmatprep.subr.bf16.mxu0 %v1815
        %1974 = vmatpush1.bf16.msra.mxu0 %v1814
        %1975 = vmatprep.subr.bf16.mxu0 %v1811
        %1976 = vmatpush1.bf16.msra.mxu0 %v1810
        %1977 = vmatprep.subr.bf16.mxu0 %v1807
        %1978 = vmatpush1.bf16.msra.mxu0 %v1806
        %1979 = vmatprep.subr.bf16.mxu0 %v1803
        %1980 = vmatpush1.bf16.msra.mxu0 %v1802
        %1981 = vmatprep.subr.bf16.mxu0 %v1799
        %1982 = vmatpush1.bf16.msra.mxu0 %v1798
        %1983 = vmatprep.subr.bf16.mxu0 0
        %1984 = vmatpush2.bf16.msra.mxu0 0
        %1985 = vmatprep.subr.bf16.mxu0 0
        %1986 = vmatpush2.bf16.msra.mxu0 0
        %1987 = vmatprep.subr.bf16.mxu0 0
        %1988 = vmatpush2.bf16.msra.mxu0 0
        %1989 = vmatprep.subr.bf16.mxu0 0
        %1990 = vmatpush2.bf16.msra.mxu0 0
        %1991 = vmatprep.subr.bf16.mxu0 0
        %1992 = vmatpush2.bf16.msra.mxu0 0
        %1993 = vmatprep.subr.bf16.mxu0 0
        %1994 = vmatpush2.bf16.msra.mxu0 0
        %1995 = vmatprep.subr.bf16.mxu0 0
        %1996 = vmatpush2.bf16.msra.mxu0 0
        %1997 = vmatprep.subr.bf16.mxu0 0
        %1998 = vmatpush2.bf16.msra.mxu0 0
        %1999 = vmatprep.mubr.bf16.mxu0 0
        %2000 = vmatmul.mubr.bf16.gmra.mxu0 %v301
        %v2001 = vpop.f32.mrf.mxu0
        %v2002 = vadd.f32 %v1961, %v2001
        %v2003 = vpop.f32.mrf.mxu0
        %v2004 = vadd.f32 %v1963, %v2003
        %v2005 = vpop.f32.mrf.mxu0
        %v2006 = vpop.f32.mrf.mxu0
        %2007 = vdwg.mxu0
        %2008 = vmatprep.subr.bf16.mxu0 %v1765
        %2009 = vmatpush1.bf16.msra.mxu0 %v1764
        %2010 = vmatprep.subr.bf16.mxu0 %v1761
        %2011 = vmatpush1.bf16.msra.mxu0 %v1760
        %2012 = vmatprep.subr.bf16.mxu0 %v1757
        %2013 = vmatpush1.bf16.msra.mxu0 %v1756
        %2014 = vmatprep.subr.bf16.mxu0 %v1753
        %2015 = vmatpush1.bf16.msra.mxu0 %v1752
        %2016 = vmatprep.subr.bf16.mxu0 %v1749
        %2017 = vmatpush1.bf16.msra.mxu0 %v1748
        %2018 = vmatprep.subr.bf16.mxu0 %v1745
        %2019 = vmatpush1.bf16.msra.mxu0 %v1744
        %2020 = vmatprep.subr.bf16.mxu0 %v1741
        %2021 = vmatpush1.bf16.msra.mxu0 %v1740
        %2022 = vmatprep.subr.bf16.mxu0 %v1737
        %2023 = vmatpush1.bf16.msra.mxu0 %v1736
        %2024 = vmatprep.subr.bf16.mxu0 %v1797
        %2025 = vmatpush2.bf16.msra.mxu0 %v1796
        %2026 = vmatprep.subr.bf16.mxu0 %v1793
        %2027 = vmatpush2.bf16.msra.mxu0 %v1792
        %2028 = vmatprep.subr.bf16.mxu0 %v1789
        %2029 = vmatpush2.bf16.msra.mxu0 %v1788
        %2030 = vmatprep.subr.bf16.mxu0 %v1785
        %2031 = vmatpush2.bf16.msra.mxu0 %v1784
        %2032 = vmatprep.subr.bf16.mxu0 %v1781
        %2033 = vmatpush2.bf16.msra.mxu0 %v1780
        %2034 = vmatprep.subr.bf16.mxu0 %v1777
        %2035 = vmatpush2.bf16.msra.mxu0 %v1776
        %2036 = vmatprep.subr.bf16.mxu0 %v1773
        %2037 = vmatpush2.bf16.msra.mxu0 %v1772
        %2038 = vmatprep.subr.bf16.mxu0 %v1769
        %2039 = vmatpush2.bf16.msra.mxu0 %v1768
        %2040 = vmatprep.mubr.bf16.mxu0 %v300
        %2041 = vmatmul.mubr.bf16.gmra.mxu0 %v299
        %v2042 = vpop.f32.mrf.mxu0
        %v2043 = vadd.f32 %v1437, %v2042
        %v2044 = vpop.f32.mrf.mxu0
        %v2045 = vadd.f32 %v1441, %v2044
        %v2046 = vpop.f32.mrf.mxu0
        %v2047 = vpop.f32.mrf.mxu0
        %2048 = vdwg.mxu0
        %2049 = vmatprep.subr.bf16.mxu0 %v1829
        %2050 = vmatpush1.bf16.msra.mxu0 %v1828
        %2051 = vmatprep.subr.bf16.mxu0 %v1825
        %2052 = vmatpush1.bf16.msra.mxu0 %v1824
        %2053 = vmatprep.subr.bf16.mxu0 %v1821
        %2054 = vmatpush1.bf16.msra.mxu0 %v1820
        %2055 = vmatprep.subr.bf16.mxu0 %v1817
        %2056 = vmatpush1.bf16.msra.mxu0 %v1816
        %2057 = vmatprep.subr.bf16.mxu0 %v1813
        %2058 = vmatpush1.bf16.msra.mxu0 %v1812
        %2059 = vmatprep.subr.bf16.mxu0 %v1809
        %2060 = vmatpush1.bf16.msra.mxu0 %v1808
        %2061 = vmatprep.subr.bf16.mxu0 %v1805
        %2062 = vmatpush1.bf16.msra.mxu0 %v1804
        %2063 = vmatprep.subr.bf16.mxu0 %v1801
        %2064 = vmatpush1.bf16.msra.mxu0 %v1800
        %2065 = vmatprep.subr.bf16.mxu0 0
        %2066 = vmatpush2.bf16.msra.mxu0 0
        %2067 = vmatprep.subr.bf16.mxu0 0
        %2068 = vmatpush2.bf16.msra.mxu0 0
        %2069 = vmatprep.subr.bf16.mxu0 0
        %2070 = vmatpush2.bf16.msra.mxu0 0
        %2071 = vmatprep.subr.bf16.mxu0 0
        %2072 = vmatpush2.bf16.msra.mxu0 0
        %2073 = vmatprep.subr.bf16.mxu0 0
        %2074 = vmatpush2.bf16.msra.mxu0 0
        %2075 = vmatprep.subr.bf16.mxu0 0
        %2076 = vmatpush2.bf16.msra.mxu0 0
        %2077 = vmatprep.subr.bf16.mxu0 0
        %2078 = vmatpush2.bf16.msra.mxu0 0
        %2079 = vmatprep.subr.bf16.mxu0 0
        %2080 = vmatpush2.bf16.msra.mxu0 0
        %2081 = vmatprep.mubr.bf16.mxu0 0
        %2082 = vmatmul.mubr.bf16.gmra.mxu0 %v301
        %v2083 = vpop.f32.mrf.mxu0
        %v2084 = vadd.f32 %v2043, %v2083
        %v2085 = vpop.f32.mrf.mxu0
        %v2086 = vadd.f32 %v2045, %v2085
        %v2087 = vpop.f32.mrf.mxu0
        %v2088 = vpop.f32.mrf.mxu0
        %2089 = vdwg.mxu0
        %v2090 = vmax.f32 %v2002, 0.0
        %v2091 = vmax.f32 %v2004, 0.0
        %v2092 = vmax.f32 %v2084, 0.0
        %v2093 = vmax.f32 %v2086, 0.0
        %v2094 = vpack.c.bf16 %v2090, %v2090
        %v2095 = vpack.c.bf16 %v2091, %v2091
        %v2096 = vpack.c.bf16 %v2092, %v2092
        %v2097 = vpack.c.bf16 %v2093, %v2093
        %v2226 = vunpack.c.l.b16 %v1297
        %v2227 = vunpack.c.h.b16 %v1297
        %v2228 = vunpack.c.l.b16 %v1298
        %v2229 = vunpack.c.l.b16 %v1299
        %v2230 = vunpack.c.h.b16 %v1299
        %v2231 = vunpack.c.l.b16 %v1300
        %v2232 = vunpack.c.l.b16 %v1301
        %v2233 = vunpack.c.h.b16 %v1301
        %v2234 = vunpack.c.l.b16 %v1302
        %v2235 = vunpack.c.l.b16 %v1303
        %v2236 = vunpack.c.h.b16 %v1303
        %v2237 = vunpack.c.l.b16 %v1304
        %v2238 = vunpack.c.l.b16 %v1305
        %v2239 = vunpack.c.h.b16 %v1305
        %v2240 = vunpack.c.l.b16 %v1306
        %v2241 = vunpack.c.l.b16 %v1307
        %v2242 = vunpack.c.h.b16 %v1307
        %v2243 = vunpack.c.l.b16 %v1308
        %v2244 = vunpack.c.l.b16 %v1309
        %v2245 = vunpack.c.h.b16 %v1309
        %v2246 = vunpack.c.l.b16 %v1310
        %v2247 = vunpack.c.l.b16 %v1311
        %v2248 = vunpack.c.h.b16 %v1311
        %v2249 = vunpack.c.l.b16 %v1312
        %v2250 = vunpack.c.l.b16 %v1313
        %v2251 = vunpack.c.h.b16 %v1313
        %v2252 = vunpack.c.l.b16 %v1314
        %v2253 = vunpack.c.l.b16 %v1315
        %v2254 = vunpack.c.h.b16 %v1315
        %v2255 = vunpack.c.l.b16 %v1316
        %v2256 = vunpack.c.l.b16 %v1317
        %v2257 = vunpack.c.h.b16 %v1317
        %v2258 = vunpack.c.l.b16 %v1318
        %v2259 = vunpack.c.l.b16 %v1319
        %v2260 = vunpack.c.h.b16 %v1319
        %v2261 = vunpack.c.l.b16 %v1320
        %v2262 = vunpack.c.l.b16 %v1321
        %v2263 = vunpack.c.h.b16 %v1321
        %v2264 = vunpack.c.l.b16 %v1322
        %v2265 = vunpack.c.l.b16 %v1323
        %v2266 = vunpack.c.h.b16 %v1323
        %v2267 = vunpack.c.l.b16 %v1324
        %v2268 = vunpack.c.l.b16 %v1325
        %v2269 = vunpack.c.h.b16 %v1325
        %v2270 = vunpack.c.l.b16 %v1326
        %v2271 = vunpack.c.l.b16 %v1327
        %v2272 = vunpack.c.h.b16 %v1327
        %v2273 = vunpack.c.l.b16 %v1328
        %v2274 = vunpack.c.l.b16 %v1329
        %v2275 = vunpack.c.h.b16 %v1329
        %v2276 = vunpack.c.l.b16 %v1330
        %v2277 = vunpack.c.l.b16 %v1331
        %v2278 = vunpack.c.h.b16 %v1331
        %v2279 = vunpack.c.l.b16 %v1332
        %v2280 = vunpack.c.l.b16 %v1333
        %v2281 = vunpack.c.h.b16 %v1333
        %v2282 = vunpack.c.l.b16 %v1334
        %v2283 = vunpack.c.l.b16 %v1335
        %v2284 = vunpack.c.h.b16 %v1335
        %v2285 = vunpack.c.l.b16 %v1336
        %v2286 = vunpack.c.l.b16 %v1337
        %v2287 = vunpack.c.h.b16 %v1337
        %v2288 = vunpack.c.l.b16 %v1338
        %v2289 = vunpack.c.l.b16 %v1339
        %v2290 = vunpack.c.h.b16 %v1339
        %v2291 = vunpack.c.l.b16 %v1340
        %v2292 = vunpack.c.l.b16 %v1341
        %v2293 = vunpack.c.h.b16 %v1341
        %v2294 = vunpack.c.l.b16 %v1342
        %v2295 = vunpack.c.l.b16 %v1343
        %v2296 = vunpack.c.h.b16 %v1343
        %v2297 = vunpack.c.l.b16 %v1344
        %v2298 = vunpack.c.l.b16 %v1345
        %v2299 = vunpack.c.h.b16 %v1345
        %v2300 = vunpack.c.l.b16 %v1346
        %v2301 = vunpack.c.l.b16 %v1347
        %v2302 = vunpack.c.h.b16 %v1347
        %v2303 = vunpack.c.l.b16 %v1348
        %v2304 = vunpack.c.l.b16 %v1349
        %v2305 = vunpack.c.h.b16 %v1349
        %v2306 = vunpack.c.l.b16 %v1350
        %v2307 = vunpack.c.l.b16 %v1351
        %v2308 = vunpack.c.h.b16 %v1351
        %v2309 = vunpack.c.l.b16 %v1352
        %v2310 = vunpack.c.l.b16 %v1353
        %v2311 = vunpack.c.h.b16 %v1353
        %v2312 = vunpack.c.l.b16 %v1354
        %v2313 = vunpack.c.l.b16 %v1355
        %v2314 = vunpack.c.h.b16 %v1355
        %v2315 = vunpack.c.l.b16 %v1356
        %v2316 = vunpack.c.l.b16 %v1357
        %v2317 = vunpack.c.h.b16 %v1357
        %v2318 = vunpack.c.l.b16 %v1358
        %v2319 = vunpack.c.l.b16 %v1359
        %v2320 = vunpack.c.h.b16 %v1359
        %v2321 = vunpack.c.l.b16 %v1360
        %v2322 = vunpack.c.l.b16 %v1361
        %v2323 = vunpack.c.h.b16 %v1361
        %v2324 = vunpack.c.l.b16 %v1362
        %v2325 = vunpack.c.l.b16 %v1363
        %v2326 = vunpack.c.h.b16 %v1363
        %v2327 = vunpack.c.l.b16 %v1364
        %v2328 = vunpack.c.l.b16 %v1365
        %v2329 = vunpack.c.h.b16 %v1365
        %v2330 = vunpack.c.l.b16 %v1366
        %v2331 = vunpack.c.l.b16 %v1367
        %v2332 = vunpack.c.h.b16 %v1367
        %v2333 = vunpack.c.l.b16 %v1368
        %v2334 = vunpack.c.l.b16 %v1369
        %v2335 = vunpack.c.h.b16 %v1369
        %v2336 = vunpack.c.l.b16 %v1370
        %v2337 = vunpack.c.l.b16 %v1371
        %v2338 = vunpack.c.h.b16 %v1371
        %v2339 = vunpack.c.l.b16 %v1372
        %v2340 = vunpack.c.l.b16 %v1373
        %v2341 = vunpack.c.h.b16 %v1373
        %v2342 = vunpack.c.l.b16 %v1374
        %v2343 = vunpack.c.l.b16 %v1375
        %v2344 = vunpack.c.h.b16 %v1375
        %v2345 = vunpack.c.l.b16 %v1376
        %v2346 = vunpack.c.l.b16 %v1377
        %v2347 = vunpack.c.h.b16 %v1377
        %v2348 = vunpack.c.l.b16 %v1378
        %v2349 = vunpack.c.l.b16 %v1379
        %v2350 = vunpack.c.h.b16 %v1379
        %v2351 = vunpack.c.l.b16 %v1380
        %v2352 = vunpack.c.l.b16 %v1381
        %v2353 = vunpack.c.h.b16 %v1381
        %v2354 = vunpack.c.l.b16 %v1382
        %v2355 = vunpack.c.l.b16 %v1383
        %v2356 = vunpack.c.h.b16 %v1383
        %v2357 = vunpack.c.l.b16 %v1384
        %v2358 = vunpack.c.l.b16 %v1385
        %v2359 = vunpack.c.h.b16 %v1385
        %v2360 = vunpack.c.l.b16 %v1386
        %v2361 = vunpack.c.l.b16 %v1387
        %v2362 = vunpack.c.h.b16 %v1387
        %v2363 = vunpack.c.l.b16 %v1388
        %v2364 = vunpack.c.l.b16 %v1389
        %v2365 = vunpack.c.h.b16 %v1389
        %v2366 = vunpack.c.l.b16 %v1390
        %v2367 = vunpack.c.l.b16 %v1391
        %v2368 = vunpack.c.h.b16 %v1391
        %v2369 = vunpack.c.l.b16 %v1392
        %v2370 = vunpack.c.l.b16 %v1393
        %v2371 = vunpack.c.h.b16 %v1393
        %v2372 = vunpack.c.l.b16 %v1394
        %v2373 = vunpack.c.l.b16 %v1395
        %v2374 = vunpack.c.h.b16 %v1395
        %v2375 = vunpack.c.l.b16 %v1396
        %v2376 = vunpack.c.l.b16 %v1397
        %v2377 = vunpack.c.h.b16 %v1397
        %v2378 = vunpack.c.l.b16 %v1398
        %v2379 = vunpack.c.l.b16 %v1399
        %v2380 = vunpack.c.h.b16 %v1399
        %v2381 = vunpack.c.l.b16 %v1400
        %v2382 = vunpack.c.l.b16 %v1401
        %v2383 = vunpack.c.h.b16 %v1401
        %v2384 = vunpack.c.l.b16 %v1402
        %v2385 = vunpack.c.l.b16 %v1403
        %v2386 = vunpack.c.h.b16 %v1403
        %v2387 = vunpack.c.l.b16 %v1404
        %v2388 = vunpack.c.l.b16 %v1405
        %v2389 = vunpack.c.h.b16 %v1405
        %v2390 = vunpack.c.l.b16 %v1406
        %v2391 = vunpack.c.l.b16 %v1407
        %v2392 = vunpack.c.h.b16 %v1407
        %v2393 = vunpack.c.l.b16 %v1408
        %v2394 = vunpack.c.l.b16 %v1409
        %v2395 = vunpack.c.h.b16 %v1409
        %v2396 = vunpack.c.l.b16 %v1410
        %v2397 = vunpack.c.l.b16 %v1411
        %v2398 = vunpack.c.h.b16 %v1411
        %v2399 = vunpack.c.l.b16 %v1412
        %v2400 = vunpack.c.l.b16 %v1413
        %v2401 = vunpack.c.h.b16 %v1413
        %v2402 = vunpack.c.l.b16 %v1414
        %v2403 = vunpack.c.l.b16 %v1415
        %v2404 = vunpack.c.h.b16 %v1415
        %v2405 = vunpack.c.l.b16 %v1416
        %v2406 = vunpack.c.l.b16 %v1417
        %v2407 = vunpack.c.h.b16 %v1417
        %v2408 = vunpack.c.l.b16 %v1418
        %v2409 = vunpack.c.l.b16 %v1419
        %v2410 = vunpack.c.h.b16 %v1419
        %v2411 = vunpack.c.l.b16 %v1420
        %v2412 = vunpack.c.l.b16 %v1421
        %v2413 = vunpack.c.h.b16 %v1421
        %v2414 = vunpack.c.l.b16 %v1422
        %v2415 = vunpack.c.l.b16 %v1423
        %v2416 = vunpack.c.h.b16 %v1423
        %v2417 = vunpack.c.l.b16 %v1424
        %v2418 = vpack.c.b16 %v2229, %v2226
        %v2419 = vpack.c.b16 %v2230, %v2227
        %v2420 = vpack.c.b16 %v2231, %v2228
        %v2421 = vpack.c.b16 %v2235, %v2232
        %v2422 = vpack.c.b16 %v2236, %v2233
        %v2423 = vpack.c.b16 %v2237, %v2234
        %v2424 = vpack.c.b16 %v2241, %v2238
        %v2425 = vpack.c.b16 %v2242, %v2239
        %v2426 = vpack.c.b16 %v2243, %v2240
        %v2427 = vpack.c.b16 %v2247, %v2244
        %v2428 = vpack.c.b16 %v2248, %v2245
        %v2429 = vpack.c.b16 %v2249, %v2246
        %v2430 = vpack.c.b16 %v2253, %v2250
        %v2431 = vpack.c.b16 %v2254, %v2251
        %v2432 = vpack.c.b16 %v2255, %v2252
        %v2433 = vpack.c.b16 %v2259, %v2256
        %v2434 = vpack.c.b16 %v2260, %v2257
        %v2435 = vpack.c.b16 %v2261, %v2258
        %v2436 = vpack.c.b16 %v2265, %v2262
        %v2437 = vpack.c.b16 %v2266, %v2263
        %v2438 = vpack.c.b16 %v2267, %v2264
        %v2439 = vpack.c.b16 %v2271, %v2268
        %v2440 = vpack.c.b16 %v2272, %v2269
        %v2441 = vpack.c.b16 %v2273, %v2270
        %v2442 = vpack.c.b16 %v2277, %v2274
        %v2443 = vpack.c.b16 %v2278, %v2275
        %v2444 = vpack.c.b16 %v2279, %v2276
        %v2445 = vpack.c.b16 %v2283, %v2280
        %v2446 = vpack.c.b16 %v2284, %v2281
        %v2447 = vpack.c.b16 %v2285, %v2282
        %v2448 = vpack.c.b16 %v2289, %v2286
        %v2449 = vpack.c.b16 %v2290, %v2287
        %v2450 = vpack.c.b16 %v2291, %v2288
        %v2451 = vpack.c.b16 %v2295, %v2292
        %v2452 = vpack.c.b16 %v2296, %v2293
        %v2453 = vpack.c.b16 %v2297, %v2294
        %v2454 = vpack.c.b16 %v2301, %v2298
        %v2455 = vpack.c.b16 %v2302, %v2299
        %v2456 = vpack.c.b16 %v2303, %v2300
        %v2457 = vpack.c.b16 %v2307, %v2304
        %v2458 = vpack.c.b16 %v2308, %v2305
        %v2459 = vpack.c.b16 %v2309, %v2306
        %v2460 = vpack.c.b16 %v2313, %v2310
        %v2461 = vpack.c.b16 %v2314, %v2311
        %v2462 = vpack.c.b16 %v2315, %v2312
        %v2463 = vpack.c.b16 %v2319, %v2316
        %v2464 = vpack.c.b16 %v2320, %v2317
        %v2465 = vpack.c.b16 %v2321, %v2318
        %v2466 = vpack.c.b16 %v2325, %v2322
        %v2467 = vpack.c.b16 %v2326, %v2323
        %v2468 = vpack.c.b16 %v2327, %v2324
        %v2469 = vpack.c.b16 %v2331, %v2328
        %v2470 = vpack.c.b16 %v2332, %v2329
        %v2471 = vpack.c.b16 %v2333, %v2330
        %v2472 = vpack.c.b16 %v2337, %v2334
        %v2473 = vpack.c.b16 %v2338, %v2335
        %v2474 = vpack.c.b16 %v2339, %v2336
        %v2475 = vpack.c.b16 %v2343, %v2340
        %v2476 = vpack.c.b16 %v2344, %v2341
        %v2477 = vpack.c.b16 %v2345, %v2342
        %v2478 = vpack.c.b16 %v2349, %v2346
        %v2479 = vpack.c.b16 %v2350, %v2347
        %v2480 = vpack.c.b16 %v2351, %v2348
        %v2481 = vpack.c.b16 %v2355, %v2352
        %v2482 = vpack.c.b16 %v2356, %v2353
        %v2483 = vpack.c.b16 %v2357, %v2354
        %v2484 = vpack.c.b16 %v2361, %v2358
        %v2485 = vpack.c.b16 %v2362, %v2359
        %v2486 = vpack.c.b16 %v2363, %v2360
        %v2487 = vpack.c.b16 %v2367, %v2364
        %v2488 = vpack.c.b16 %v2368, %v2365
        %v2489 = vpack.c.b16 %v2369, %v2366
        %v2490 = vpack.c.b16 %v2373, %v2370
        %v2491 = vpack.c.b16 %v2374, %v2371
        %v2492 = vpack.c.b16 %v2375, %v2372
        %v2493 = vpack.c.b16 %v2379, %v2376
        %v2494 = vpack.c.b16 %v2380, %v2377
        %v2495 = vpack.c.b16 %v2381, %v2378
        %v2496 = vpack.c.b16 %v2385, %v2382
        %v2497 = vpack.c.b16 %v2386, %v2383
        %v2498 = vpack.c.b16 %v2387, %v2384
        %v2499 = vpack.c.b16 %v2391, %v2388
        %v2500 = vpack.c.b16 %v2392, %v2389
        %v2501 = vpack.c.b16 %v2393, %v2390
        %v2502 = vpack.c.b16 %v2397, %v2394
        %v2503 = vpack.c.b16 %v2398, %v2395
        %v2504 = vpack.c.b16 %v2399, %v2396
        %v2505 = vpack.c.b16 %v2403, %v2400
        %v2506 = vpack.c.b16 %v2404, %v2401
        %v2507 = vpack.c.b16 %v2405, %v2402
        %v2508 = vpack.c.b16 %v2409, %v2406
        %v2509 = vpack.c.b16 %v2410, %v2407
        %v2510 = vpack.c.b16 %v2411, %v2408
        %v2511 = vpack.c.b16 %v2415, %v2412
        %v2512 = vpack.c.b16 %v2416, %v2413
        %v2513 = vpack.c.b16 %v2417, %v2414
        %2610 = vmatprep.subr.bf16.mxu0 %v2440
        %2611 = vmatpush1.bf16.msra.mxu0 %v2439
        %2612 = vmatprep.subr.bf16.mxu0 %v2437
        %2613 = vmatpush1.bf16.msra.mxu0 %v2436
        %2614 = vmatprep.subr.bf16.mxu0 %v2434
        %2615 = vmatpush1.bf16.msra.mxu0 %v2433
        %2616 = vmatprep.subr.bf16.mxu0 %v2431
        %2617 = vmatpush1.bf16.msra.mxu0 %v2430
        %2618 = vmatprep.subr.bf16.mxu0 %v2428
        %2619 = vmatpush1.bf16.msra.mxu0 %v2427
        %2620 = vmatprep.subr.bf16.mxu0 %v2425
        %2621 = vmatpush1.bf16.msra.mxu0 %v2424
        %2622 = vmatprep.subr.bf16.mxu0 %v2422
        %2623 = vmatpush1.bf16.msra.mxu0 %v2421
        %2624 = vmatprep.subr.bf16.mxu0 %v2419
        %2625 = vmatpush1.bf16.msra.mxu0 %v2418
        %2626 = vmatprep.subr.bf16.mxu0 %v2464
        %2627 = vmatpush2.bf16.msra.mxu0 %v2463
        %2628 = vmatprep.subr.bf16.mxu0 %v2461
        %2629 = vmatpush2.bf16.msra.mxu0 %v2460
        %2630 = vmatprep.subr.bf16.mxu0 %v2458
        %2631 = vmatpush2.bf16.msra.mxu0 %v2457
        %2632 = vmatprep.subr.bf16.mxu0 %v2455
        %2633 = vmatpush2.bf16.msra.mxu0 %v2454
        %2634 = vmatprep.subr.bf16.mxu0 %v2452
        %2635 = vmatpush2.bf16.msra.mxu0 %v2451
        %2636 = vmatprep.subr.bf16.mxu0 %v2449
        %2637 = vmatpush2.bf16.msra.mxu0 %v2448
        %2638 = vmatprep.subr.bf16.mxu0 %v2446
        %2639 = vmatpush2.bf16.msra.mxu0 %v2445
        %2640 = vmatprep.subr.bf16.mxu0 %v2443
        %2641 = vmatpush2.bf16.msra.mxu0 %v2442
        %2642 = vmatprep.mubr.bf16.mxu0 %v2095
        %2643 = vmatmul.mubr.bf16.gmra.mxu0 %v2094
        %v2644 = vpop.f32.mrf.mxu0
        %v2645 = vadd.f32 0.0, %v2644
        %v2646 = vpop.f32.mrf.mxu0
        %v2647 = vadd.f32 0.0, %v2646
        %v2648 = vpop.f32.mrf.mxu0
        %v2649 = vpop.f32.mrf.mxu0
        %2650 = vdwg.mxu0
        %2651 = vmatprep.subr.bf16.mxu0 %v2488
        %2652 = vmatpush1.bf16.msra.mxu0 %v2487
        %2653 = vmatprep.subr.bf16.mxu0 %v2485
        %2654 = vmatpush1.bf16.msra.mxu0 %v2484
        %2655 = vmatprep.subr.bf16.mxu0 %v2482
        %2656 = vmatpush1.bf16.msra.mxu0 %v2481
        %2657 = vmatprep.subr.bf16.mxu0 %v2479
        %2658 = vmatpush1.bf16.msra.mxu0 %v2478
        %2659 = vmatprep.subr.bf16.mxu0 %v2476
        %2660 = vmatpush1.bf16.msra.mxu0 %v2475
        %2661 = vmatprep.subr.bf16.mxu0 %v2473
        %2662 = vmatpush1.bf16.msra.mxu0 %v2472
        %2663 = vmatprep.subr.bf16.mxu0 %v2470
        %2664 = vmatpush1.bf16.msra.mxu0 %v2469
        %2665 = vmatprep.subr.bf16.mxu0 %v2467
        %2666 = vmatpush1.bf16.msra.mxu0 %v2466
        %2667 = vmatprep.subr.bf16.mxu0 %v2512
        %2668 = vmatpush2.bf16.msra.mxu0 %v2511
        %2669 = vmatprep.subr.bf16.mxu0 %v2509
        %2670 = vmatpush2.bf16.msra.mxu0 %v2508
        %2671 = vmatprep.subr.bf16.mxu0 %v2506
        %2672 = vmatpush2.bf16.msra.mxu0 %v2505
        %2673 = vmatprep.subr.bf16.mxu0 %v2503
        %2674 = vmatpush2.bf16.msra.mxu0 %v2502
        %2675 = vmatprep.subr.bf16.mxu0 %v2500
        %2676 = vmatpush2.bf16.msra.mxu0 %v2499
        %2677 = vmatprep.subr.bf16.mxu0 %v2497
        %2678 = vmatpush2.bf16.msra.mxu0 %v2496
        %2679 = vmatprep.subr.bf16.mxu0 %v2494
        %2680 = vmatpush2.bf16.msra.mxu0 %v2493
        %2681 = vmatprep.subr.bf16.mxu0 %v2491
        %2682 = vmatpush2.bf16.msra.mxu0 %v2490
        %2683 = vmatprep.mubr.bf16.mxu0 %v2097
        %2684 = vmatmul.mubr.bf16.gmra.mxu0 %v2096
        %v2685 = vpop.f32.mrf.mxu0
        %v2686 = vadd.f32 %v2645, %v2685
        %v2687 = vpop.f32.mrf.mxu0
        %v2688 = vadd.f32 %v2647, %v2687
        %v2689 = vpop.f32.mrf.mxu0
        %v2690 = vpop.f32.mrf.mxu0
        %2691 = vdwg.mxu0
        %2692 = vmatprep.subr.bf16.mxu0 0
        %2693 = vmatpush1.bf16.msra.mxu0 %v2441
        %2694 = vmatprep.subr.bf16.mxu0 0
        %2695 = vmatpush1.bf16.msra.mxu0 %v2438
        %2696 = vmatprep.subr.bf16.mxu0 0
        %2697 = vmatpush1.bf16.msra.mxu0 %v2435
        %2698 = vmatprep.subr.bf16.mxu0 0
        %2699 = vmatpush1.bf16.msra.mxu0 %v2432
        %2700 = vmatprep.subr.bf16.mxu0 0
        %2701 = vmatpush1.bf16.msra.mxu0 %v2429
        %2702 = vmatprep.subr.bf16.mxu0 0
        %2703 = vmatpush1.bf16.msra.mxu0 %v2426
        %2704 = vmatprep.subr.bf16.mxu0 0
        %2705 = vmatpush1.bf16.msra.mxu0 %v2423
        %2706 = vmatprep.subr.bf16.mxu0 0
        %2707 = vmatpush1.bf16.msra.mxu0 %v2420
        %2708 = vmatprep.subr.bf16.mxu0 0
        %2709 = vmatpush2.bf16.msra.mxu0 %v2465
        %2710 = vmatprep.subr.bf16.mxu0 0
        %2711 = vmatpush2.bf16.msra.mxu0 %v2462
        %2712 = vmatprep.subr.bf16.mxu0 0
        %2713 = vmatpush2.bf16.msra.mxu0 %v2459
        %2714 = vmatprep.subr.bf16.mxu0 0
        %2715 = vmatpush2.bf16.msra.mxu0 %v2456
        %2716 = vmatprep.subr.bf16.mxu0 0
        %2717 = vmatpush2.bf16.msra.mxu0 %v2453
        %2718 = vmatprep.subr.bf16.mxu0 0
        %2719 = vmatpush2.bf16.msra.mxu0 %v2450
        %2720 = vmatprep.subr.bf16.mxu0 0
        %2721 = vmatpush2.bf16.msra.mxu0 %v2447
        %2722 = vmatprep.subr.bf16.mxu0 0
        %2723 = vmatpush2.bf16.msra.mxu0 %v2444
        %2724 = vmatprep.mubr.bf16.mxu0 %v2095
        %2725 = vmatmul.mubr.bf16.gmra.mxu0 %v2094
        %v2726 = vpop.f32.mrf.mxu0
        %v2727 = vadd.f32 0.0, %v2726
        %v2728 = vpop.f32.mrf.mxu0
        %v2729 = vpop.f32.mrf.mxu0
        %v2730 = vpop.f32.mrf.mxu0
        %2731 = vdwg.mxu0
        %2732 = vmatprep.subr.bf16.mxu0 0
        %2733 = vmatpush1.bf16.msra.mxu0 %v2489
        %2734 = vmatprep.subr.bf16.mxu0 0
        %2735 = vmatpush1.bf16.msra.mxu0 %v2486
        %2736 = vmatprep.subr.bf16.mxu0 0
        %2737 = vmatpush1.bf16.msra.mxu0 %v2483
        %2738 = vmatprep.subr.bf16.mxu0 0
        %2739 = vmatpush1.bf16.msra.mxu0 %v2480
        %2740 = vmatprep.subr.bf16.mxu0 0
        %2741 = vmatpush1.bf16.msra.mxu0 %v2477
        %2742 = vmatprep.subr.bf16.mxu0 0
        %2743 = vmatpush1.bf16.msra.mxu0 %v2474
        %2744 = vmatprep.subr.bf16.mxu0 0
        %2745 = vmatpush1.bf16.msra.mxu0 %v2471
        %2746 = vmatprep.subr.bf16.mxu0 0
        %2747 = vmatpush1.bf16.msra.mxu0 %v2468
        %2748 = vmatprep.subr.bf16.mxu0 0
        %2749 = vmatpush2.bf16.msra.mxu0 %v2513
        %2750 = vmatprep.subr.bf16.mxu0 0
        %2751 = vmatpush2.bf16.msra.mxu0 %v2510
        %2752 = vmatprep.subr.bf16.mxu0 0
        %2753 = vmatpush2.bf16.msra.mxu0 %v2507
        %2754 = vmatprep.subr.bf16.mxu0 0
        %2755 = vmatpush2.bf16.msra.mxu0 %v2504
        %2756 = vmatprep.subr.bf16.mxu0 0
        %2757 = vmatpush2.bf16.msra.mxu0 %v2501
        %2758 = vmatprep.subr.bf16.mxu0 0
        %2759 = vmatpush2.bf16.msra.mxu0 %v2498
        %2760 = vmatprep.subr.bf16.mxu0 0
        %2761 = vmatpush2.bf16.msra.mxu0 %v2495
        %2762 = vmatprep.subr.bf16.mxu0 0
        %2763 = vmatpush2.bf16.msra.mxu0 %v2492
        %2764 = vmatprep.mubr.bf16.mxu0 %v2097
        %2765 = vmatmul.mubr.bf16.gmra.mxu0 %v2096
        %v2766 = vpop.f32.mrf.mxu0
        %v2767 = vadd.f32 %v2727, %v2766
        %v2768 = vpop.f32.mrf.mxu0
        %v2769 = vpop.f32.mrf.mxu0
        %v2770 = vpop.f32.mrf.mxu0
        %2771 = vdwg.mxu0
        %v2900 = vunpack.c.l.b16 %v399
        %v2901 = vunpack.c.h.b16 %v399
        %v2902 = vunpack.c.l.b16 %v400
        %v2903 = vunpack.c.l.b16 %v401
        %v2904 = vunpack.c.h.b16 %v401
        %v2905 = vunpack.c.l.b16 %v402
        %v2906 = vunpack.c.l.b16 %v403
        %v2907 = vunpack.c.h.b16 %v403
        %v2908 = vunpack.c.l.b16 %v404
        %v2909 = vunpack.c.l.b16 %v405
        %v2910 = vunpack.c.h.b16 %v405
        %v2911 = vunpack.c.l.b16 %v406
        %v2912 = vunpack.c.l.b16 %v407
        %v2913 = vunpack.c.h.b16 %v407
        %v2914 = vunpack.c.l.b16 %v408
        %v2915 = vunpack.c.l.b16 %v409
        %v2916 = vunpack.c.h.b16 %v409
        %v2917 = vunpack.c.l.b16 %v410
        %v2918 = vunpack.c.l.b16 %v411
        %v2919 = vunpack.c.h.b16 %v411
        %v2920 = vunpack.c.l.b16 %v412
        %v2921 = vunpack.c.l.b16 %v413
        %v2922 = vunpack.c.h.b16 %v413
        %v2923 = vunpack.c.l.b16 %v414
        %v2924 = vunpack.c.l.b16 %v415
        %v2925 = vunpack.c.h.b16 %v415
        %v2926 = vunpack.c.l.b16 %v416
        %v2927 = vunpack.c.l.b16 %v417
        %v2928 = vunpack.c.h.b16 %v417
        %v2929 = vunpack.c.l.b16 %v418
        %v2930 = vunpack.c.l.b16 %v419
        %v2931 = vunpack.c.h.b16 %v419
        %v2932 = vunpack.c.l.b16 %v420
        %v2933 = vunpack.c.l.b16 %v421
        %v2934 = vunpack.c.h.b16 %v421
        %v2935 = vunpack.c.l.b16 %v422
        %v2936 = vunpack.c.l.b16 %v423
        %v2937 = vunpack.c.h.b16 %v423
        %v2938 = vunpack.c.l.b16 %v424
        %v2939 = vunpack.c.l.b16 %v425
        %v2940 = vunpack.c.h.b16 %v425
        %v2941 = vunpack.c.l.b16 %v426
        %v2942 = vunpack.c.l.b16 %v427
        %v2943 = vunpack.c.h.b16 %v427
        %v2944 = vunpack.c.l.b16 %v428
        %v2945 = vunpack.c.l.b16 %v429
        %v2946 = vunpack.c.h.b16 %v429
        %v2947 = vunpack.c.l.b16 %v430
        %v2948 = vunpack.c.l.b16 %v431
        %v2949 = vunpack.c.h.b16 %v431
        %v2950 = vunpack.c.l.b16 %v432
        %v2951 = vunpack.c.l.b16 %v433
        %v2952 = vunpack.c.h.b16 %v433
        %v2953 = vunpack.c.l.b16 %v434
        %v2954 = vunpack.c.l.b16 %v435
        %v2955 = vunpack.c.h.b16 %v435
        %v2956 = vunpack.c.l.b16 %v436
        %v2957 = vunpack.c.l.b16 %v437
        %v2958 = vunpack.c.h.b16 %v437
        %v2959 = vunpack.c.l.b16 %v438
        %v2960 = vunpack.c.l.b16 %v439
        %v2961 = vunpack.c.h.b16 %v439
        %v2962 = vunpack.c.l.b16 %v440
        %v2963 = vunpack.c.l.b16 %v441
        %v2964 = vunpack.c.h.b16 %v441
        %v2965 = vunpack.c.l.b16 %v442
        %v2966 = vunpack.c.l.b16 %v443
        %v2967 = vunpack.c.h.b16 %v443
        %v2968 = vunpack.c.l.b16 %v444
        %v2969 = vunpack.c.l.b16 %v445
        %v2970 = vunpack.c.h.b16 %v445
        %v2971 = vunpack.c.l.b16 %v446
        %v2972 = vunpack.c.l.b16 %v447
        %v2973 = vunpack.c.h.b16 %v447
        %v2974 = vunpack.c.l.b16 %v448
        %v2975 = vunpack.c.l.b16 %v449
        %v2976 = vunpack.c.h.b16 %v449
        %v2977 = vunpack.c.l.b16 %v450
        %v2978 = vunpack.c.l.b16 %v451
        %v2979 = vunpack.c.h.b16 %v451
        %v2980 = vunpack.c.l.b16 %v452
        %v2981 = vunpack.c.l.b16 %v453
        %v2982 = vunpack.c.h.b16 %v453
        %v2983 = vunpack.c.l.b16 %v454
        %v2984 = vunpack.c.l.b16 %v455
        %v2985 = vunpack.c.h.b16 %v455
        %v2986 = vunpack.c.l.b16 %v456
        %v2987 = vunpack.c.l.b16 %v457
        %v2988 = vunpack.c.h.b16 %v457
        %v2989 = vunpack.c.l.b16 %v458
        %v2990 = vunpack.c.l.b16 %v459
        %v2991 = vunpack.c.h.b16 %v459
        %v2992 = vunpack.c.l.b16 %v460
        %v2993 = vunpack.c.l.b16 %v461
        %v2994 = vunpack.c.h.b16 %v461
        %v2995 = vunpack.c.l.b16 %v462
        %v2996 = vunpack.c.l.b16 %v463
        %v2997 = vunpack.c.h.b16 %v463
        %v2998 = vunpack.c.l.b16 %v464
        %v2999 = vunpack.c.l.b16 %v465
        %v3000 = vunpack.c.h.b16 %v465
        %v3001 = vunpack.c.l.b16 %v466
        %v3002 = vunpack.c.l.b16 %v467
        %v3003 = vunpack.c.h.b16 %v467
        %v3004 = vunpack.c.l.b16 %v468
        %v3005 = vunpack.c.l.b16 %v469
        %v3006 = vunpack.c.h.b16 %v469
        %v3007 = vunpack.c.l.b16 %v470
        %v3008 = vunpack.c.l.b16 %v471
        %v3009 = vunpack.c.h.b16 %v471
        %v3010 = vunpack.c.l.b16 %v472
        %v3011 = vunpack.c.l.b16 %v473
        %v3012 = vunpack.c.h.b16 %v473
        %v3013 = vunpack.c.l.b16 %v474
        %v3014 = vunpack.c.l.b16 %v475
        %v3015 = vunpack.c.h.b16 %v475
        %v3016 = vunpack.c.l.b16 %v476
        %v3017 = vunpack.c.l.b16 %v477
        %v3018 = vunpack.c.h.b16 %v477
        %v3019 = vunpack.c.l.b16 %v478
        %v3020 = vunpack.c.l.b16 %v479
        %v3021 = vunpack.c.h.b16 %v479
        %v3022 = vunpack.c.l.b16 %v480
        %v3023 = vunpack.c.l.b16 %v481
        %v3024 = vunpack.c.h.b16 %v481
        %v3025 = vunpack.c.l.b16 %v482
        %v3026 = vunpack.c.l.b16 %v483
        %v3027 = vunpack.c.h.b16 %v483
        %v3028 = vunpack.c.l.b16 %v484
        %v3029 = vunpack.c.l.b16 %v485
        %v3030 = vunpack.c.h.b16 %v485
        %v3031 = vunpack.c.l.b16 %v486
        %v3032 = vunpack.c.l.b16 %v487
        %v3033 = vunpack.c.h.b16 %v487
        %v3034 = vunpack.c.l.b16 %v488
        %v3035 = vunpack.c.l.b16 %v489
        %v3036 = vunpack.c.h.b16 %v489
        %v3037 = vunpack.c.l.b16 %v490
        %v3038 = vunpack.c.l.b16 %v491
        %v3039 = vunpack.c.h.b16 %v491
        %v3040 = vunpack.c.l.b16 %v492
        %v3041 = vunpack.c.l.b16 %v493
        %v3042 = vunpack.c.h.b16 %v493
        %v3043 = vunpack.c.l.b16 %v494
        %v3044 = vunpack.c.l.b16 %v495
        %v3045 = vunpack.c.h.b16 %v495
        %v3046 = vunpack.c.l.b16 %v496
        %v3047 = vunpack.c.l.b16 %v497
        %v3048 = vunpack.c.h.b16 %v497
        %v3049 = vunpack.c.l.b16 %v498
        %v3050 = vunpack.c.l.b16 %v499
        %v3051 = vunpack.c.h.b16 %v499
        %v3052 = vunpack.c.l.b16 %v500
        %v3053 = vunpack.c.l.b16 %v501
        %v3054 = vunpack.c.h.b16 %v501
        %v3055 = vunpack.c.l.b16 %v502
        %v3056 = vunpack.c.l.b16 %v503
        %v3057 = vunpack.c.h.b16 %v503
        %v3058 = vunpack.c.l.b16 %v504
        %v3059 = vunpack.c.l.b16 %v505
        %v3060 = vunpack.c.h.b16 %v505
        %v3061 = vunpack.c.l.b16 %v506
        %v3062 = vunpack.c.l.b16 %v507
        %v3063 = vunpack.c.h.b16 %v507
        %v3064 = vunpack.c.l.b16 %v508
        %v3065 = vunpack.c.l.b16 %v509
        %v3066 = vunpack.c.h.b16 %v509
        %v3067 = vunpack.c.l.b16 %v510
        %v3068 = vunpack.c.l.b16 %v511
        %v3069 = vunpack.c.h.b16 %v511
        %v3070 = vunpack.c.l.b16 %v512
        %v3071 = vunpack.c.l.b16 %v513
        %v3072 = vunpack.c.h.b16 %v513
        %v3073 = vunpack.c.l.b16 %v514
        %v3074 = vunpack.c.l.b16 %v515
        %v3075 = vunpack.c.h.b16 %v515
        %v3076 = vunpack.c.l.b16 %v516
        %v3077 = vunpack.c.l.b16 %v517
        %v3078 = vunpack.c.h.b16 %v517
        %v3079 = vunpack.c.l.b16 %v518
        %v3080 = vunpack.c.l.b16 %v519
        %v3081 = vunpack.c.h.b16 %v519
        %v3082 = vunpack.c.l.b16 %v520
        %v3083 = vunpack.c.l.b16 %v521
        %v3084 = vunpack.c.h.b16 %v521
        %v3085 = vunpack.c.l.b16 %v522
        %v3086 = vunpack.c.l.b16 %v523
        %v3087 = vunpack.c.h.b16 %v523
        %v3088 = vunpack.c.l.b16 %v524
        %v3089 = vunpack.c.l.b16 %v525
        %v3090 = vunpack.c.h.b16 %v525
        %v3091 = vunpack.c.l.b16 %v526
        %v3092 = vpack.c.b16 %v2903, %v2900
        %v3093 = vpack.c.b16 %v2904, %v2901
        %v3094 = vpack.c.b16 %v2905, %v2902
        %v3095 = vpack.c.b16 %v2909, %v2906
        %v3096 = vpack.c.b16 %v2910, %v2907
        %v3097 = vpack.c.b16 %v2911, %v2908
        %v3098 = vpack.c.b16 %v2915, %v2912
        %v3099 = vpack.c.b16 %v2916, %v2913
        %v3100 = vpack.c.b16 %v2917, %v2914
        %v3101 = vpack.c.b16 %v2921, %v2918
        %v3102 = vpack.c.b16 %v2922, %v2919
        %v3103 = vpack.c.b16 %v2923, %v2920
        %v3104 = vpack.c.b16 %v2927, %v2924
        %v3105 = vpack.c.b16 %v2928, %v2925
        %v3106 = vpack.c.b16 %v2929, %v2926
        %v3107 = vpack.c.b16 %v2933, %v2930
        %v3108 = vpack.c.b16 %v2934, %v2931
        %v3109 = vpack.c.b16 %v2935, %v2932
        %v3110 = vpack.c.b16 %v2939, %v2936
        %v3111 = vpack.c.b16 %v2940, %v2937
        %v3112 = vpack.c.b16 %v2941, %v2938
        %v3113 = vpack.c.b16 %v2945, %v2942
        %v3114 = vpack.c.b16 %v2946, %v2943
        %v3115 = vpack.c.b16 %v2947, %v2944
        %v3116 = vpack.c.b16 %v2951, %v2948
        %v3117 = vpack.c.b16 %v2952, %v2949
        %v3118 = vpack.c.b16 %v2953, %v2950
        %v3119 = vpack.c.b16 %v2957, %v2954
        %v3120 = vpack.c.b16 %v2958, %v2955
        %v3121 = vpack.c.b16 %v2959, %v2956
        %v3122 = vpack.c.b16 %v2963, %v2960
        %v3123 = vpack.c.b16 %v2964, %v2961
        %v3124 = vpack.c.b16 %v2965, %v2962
        %v3125 = vpack.c.b16 %v2969, %v2966
        %v3126 = vpack.c.b16 %v2970, %v2967
        %v3127 = vpack.c.b16 %v2971, %v2968
        %v3128 = vpack.c.b16 %v2975, %v2972
        %v3129 = vpack.c.b16 %v2976, %v2973
        %v3130 = vpack.c.b16 %v2977, %v2974
        %v3131 = vpack.c.b16 %v2981, %v2978
        %v3132 = vpack.c.b16 %v2982, %v2979
        %v3133 = vpack.c.b16 %v2983, %v2980
        %v3134 = vpack.c.b16 %v2987, %v2984
        %v3135 = vpack.c.b16 %v2988, %v2985
        %v3136 = vpack.c.b16 %v2989, %v2986
        %v3137 = vpack.c.b16 %v2993, %v2990
        %v3138 = vpack.c.b16 %v2994, %v2991
        %v3139 = vpack.c.b16 %v2995, %v2992
        %v3140 = vpack.c.b16 %v2999, %v2996
        %v3141 = vpack.c.b16 %v3000, %v2997
        %v3142 = vpack.c.b16 %v3001, %v2998
        %v3143 = vpack.c.b16 %v3005, %v3002
        %v3144 = vpack.c.b16 %v3006, %v3003
        %v3145 = vpack.c.b16 %v3007, %v3004
        %v3146 = vpack.c.b16 %v3011, %v3008
        %v3147 = vpack.c.b16 %v3012, %v3009
        %v3148 = vpack.c.b16 %v3013, %v3010
        %v3149 = vpack.c.b16 %v3017, %v3014
        %v3150 = vpack.c.b16 %v3018, %v3015
        %v3151 = vpack.c.b16 %v3019, %v3016
        %v3152 = vpack.c.b16 %v3023, %v3020
        %v3153 = vpack.c.b16 %v3024, %v3021
        %v3154 = vpack.c.b16 %v3025, %v3022
        %v3155 = vpack.c.b16 %v3029, %v3026
        %v3156 = vpack.c.b16 %v3030, %v3027
        %v3157 = vpack.c.b16 %v3031, %v3028
        %v3158 = vpack.c.b16 %v3035, %v3032
        %v3159 = vpack.c.b16 %v3036, %v3033
        %v3160 = vpack.c.b16 %v3037, %v3034
        %v3161 = vpack.c.b16 %v3041, %v3038
        %v3162 = vpack.c.b16 %v3042, %v3039
        %v3163 = vpack.c.b16 %v3043, %v3040
        %v3164 = vpack.c.b16 %v3047, %v3044
        %v3165 = vpack.c.b16 %v3048, %v3045
        %v3166 = vpack.c.b16 %v3049, %v3046
        %v3167 = vpack.c.b16 %v3053, %v3050
        %v3168 = vpack.c.b16 %v3054, %v3051
        %v3169 = vpack.c.b16 %v3055, %v3052
        %v3170 = vpack.c.b16 %v3059, %v3056
        %v3171 = vpack.c.b16 %v3060, %v3057
        %v3172 = vpack.c.b16 %v3061, %v3058
        %v3173 = vpack.c.b16 %v3065, %v3062
        %v3174 = vpack.c.b16 %v3066, %v3063
        %v3175 = vpack.c.b16 %v3067, %v3064
        %v3176 = vpack.c.b16 %v3071, %v3068
        %v3177 = vpack.c.b16 %v3072, %v3069
        %v3178 = vpack.c.b16 %v3073, %v3070
        %v3179 = vpack.c.b16 %v3077, %v3074
        %v3180 = vpack.c.b16 %v3078, %v3075
        %v3181 = vpack.c.b16 %v3079, %v3076
        %v3182 = vpack.c.b16 %v3083, %v3080
        %v3183 = vpack.c.b16 %v3084, %v3081
        %v3184 = vpack.c.b16 %v3085, %v3082
        %v3185 = vpack.c.b16 %v3089, %v3086
        %v3186 = vpack.c.b16 %v3090, %v3087
        %v3187 = vpack.c.b16 %v3091, %v3088
        %3284 = vmatprep.subr.bf16.mxu0 %v3114
        %3285 = vmatpush1.bf16.msra.mxu0 %v3113
        %3286 = vmatprep.subr.bf16.mxu0 %v3111
        %3287 = vmatpush1.bf16.msra.mxu0 %v3110
        %3288 = vmatprep.subr.bf16.mxu0 %v3108
        %3289 = vmatpush1.bf16.msra.mxu0 %v3107
        %3290 = vmatprep.subr.bf16.mxu0 %v3105
        %3291 = vmatpush1.bf16.msra.mxu0 %v3104
        %3292 = vmatprep.subr.bf16.mxu0 %v3102
        %3293 = vmatpush1.bf16.msra.mxu0 %v3101
        %3294 = vmatprep.subr.bf16.mxu0 %v3099
        %3295 = vmatpush1.bf16.msra.mxu0 %v3098
        %3296 = vmatprep.subr.bf16.mxu0 %v3096
        %3297 = vmatpush1.bf16.msra.mxu0 %v3095
        %3298 = vmatprep.subr.bf16.mxu0 %v3093
        %3299 = vmatpush1.bf16.msra.mxu0 %v3092
        %3300 = vmatprep.subr.bf16.mxu0 %v3138
        %3301 = vmatpush2.bf16.msra.mxu0 %v3137
        %3302 = vmatprep.subr.bf16.mxu0 %v3135
        %3303 = vmatpush2.bf16.msra.mxu0 %v3134
        %3304 = vmatprep.subr.bf16.mxu0 %v3132
        %3305 = vmatpush2.bf16.msra.mxu0 %v3131
        %3306 = vmatprep.subr.bf16.mxu0 %v3129
        %3307 = vmatpush2.bf16.msra.mxu0 %v3128
        %3308 = vmatprep.subr.bf16.mxu0 %v3126
        %3309 = vmatpush2.bf16.msra.mxu0 %v3125
        %3310 = vmatprep.subr.bf16.mxu0 %v3123
        %3311 = vmatpush2.bf16.msra.mxu0 %v3122
        %3312 = vmatprep.subr.bf16.mxu0 %v3120
        %3313 = vmatpush2.bf16.msra.mxu0 %v3119
        %3314 = vmatprep.subr.bf16.mxu0 %v3117
        %3315 = vmatpush2.bf16.msra.mxu0 %v3116
        %3316 = vmatprep.mubr.bf16.mxu0 %v1197
        %3317 = vmatmul.mubr.bf16.gmra.mxu0 %v1196
        %v3318 = vpop.f32.mrf.mxu0
        %v3319 = vadd.f32 %v2686, %v3318
        %v3320 = vpop.f32.mrf.mxu0
        %v3321 = vadd.f32 %v2688, %v3320
        %v3322 = vpop.f32.mrf.mxu0
        %v3323 = vpop.f32.mrf.mxu0
        %3324 = vdwg.mxu0
        %3325 = vmatprep.subr.bf16.mxu0 %v3162
        %3326 = vmatpush1.bf16.msra.mxu0 %v3161
        %3327 = vmatprep.subr.bf16.mxu0 %v3159
        %3328 = vmatpush1.bf16.msra.mxu0 %v3158
        %3329 = vmatprep.subr.bf16.mxu0 %v3156
        %3330 = vmatpush1.bf16.msra.mxu0 %v3155
        %3331 = vmatprep.subr.bf16.mxu0 %v3153
        %3332 = vmatpush1.bf16.msra.mxu0 %v3152
        %3333 = vmatprep.subr.bf16.mxu0 %v3150
        %3334 = vmatpush1.bf16.msra.mxu0 %v3149
        %3335 = vmatprep.subr.bf16.mxu0 %v3147
        %3336 = vmatpush1.bf16.msra.mxu0 %v3146
        %3337 = vmatprep.subr.bf16.mxu0 %v3144
        %3338 = vmatpush1.bf16.msra.mxu0 %v3143
        %3339 = vmatprep.subr.bf16.mxu0 %v3141
        %3340 = vmatpush1.bf16.msra.mxu0 %v3140
        %3341 = vmatprep.subr.bf16.mxu0 %v3186
        %3342 = vmatpush2.bf16.msra.mxu0 %v3185
        %3343 = vmatprep.subr.bf16.mxu0 %v3183
        %3344 = vmatpush2.bf16.msra.mxu0 %v3182
        %3345 = vmatprep.subr.bf16.mxu0 %v3180
        %3346 = vmatpush2.bf16.msra.mxu0 %v3179
        %3347 = vmatprep.subr.bf16.mxu0 %v3177
        %3348 = vmatpush2.bf16.msra.mxu0 %v3176
        %3349 = vmatprep.subr.bf16.mxu0 %v3174
        %3350 = vmatpush2.bf16.msra.mxu0 %v3173
        %3351 = vmatprep.subr.bf16.mxu0 %v3171
        %3352 = vmatpush2.bf16.msra.mxu0 %v3170
        %3353 = vmatprep.subr.bf16.mxu0 %v3168
        %3354 = vmatpush2.bf16.msra.mxu0 %v3167
        %3355 = vmatprep.subr.bf16.mxu0 %v3165
        %3356 = vmatpush2.bf16.msra.mxu0 %v3164
        %3357 = vmatprep.mubr.bf16.mxu0 %v1199
        %3358 = vmatmul.mubr.bf16.gmra.mxu0 %v1198
        %v3359 = vpop.f32.mrf.mxu0
        %v3360 = vadd.f32 %v3319, %v3359
        %v3361 = vpop.f32.mrf.mxu0
        %v3362 = vadd.f32 %v3321, %v3361
        %v3363 = vpop.f32.mrf.mxu0
        %v3364 = vpop.f32.mrf.mxu0
        %3365 = vdwg.mxu0
        %3366 = vmatprep.subr.bf16.mxu0 0
        %3367 = vmatpush1.bf16.msra.mxu0 %v3115
        %3368 = vmatprep.subr.bf16.mxu0 0
        %3369 = vmatpush1.bf16.msra.mxu0 %v3112
        %3370 = vmatprep.subr.bf16.mxu0 0
        %3371 = vmatpush1.bf16.msra.mxu0 %v3109
        %3372 = vmatprep.subr.bf16.mxu0 0
        %3373 = vmatpush1.bf16.msra.mxu0 %v3106
        %3374 = vmatprep.subr.bf16.mxu0 0
        %3375 = vmatpush1.bf16.msra.mxu0 %v3103
        %3376 = vmatprep.subr.bf16.mxu0 0
        %3377 = vmatpush1.bf16.msra.mxu0 %v3100
        %3378 = vmatprep.subr.bf16.mxu0 0
        %3379 = vmatpush1.bf16.msra.mxu0 %v3097
        %3380 = vmatprep.subr.bf16.mxu0 0
        %3381 = vmatpush1.bf16.msra.mxu0 %v3094
        %3382 = vmatprep.subr.bf16.mxu0 0
        %3383 = vmatpush2.bf16.msra.mxu0 %v3139
        %3384 = vmatprep.subr.bf16.mxu0 0
        %3385 = vmatpush2.bf16.msra.mxu0 %v3136
        %3386 = vmatprep.subr.bf16.mxu0 0
        %3387 = vmatpush2.bf16.msra.mxu0 %v3133
        %3388 = vmatprep.subr.bf16.mxu0 0
        %3389 = vmatpush2.bf16.msra.mxu0 %v3130
        %3390 = vmatprep.subr.bf16.mxu0 0
        %3391 = vmatpush2.bf16.msra.mxu0 %v3127
        %3392 = vmatprep.subr.bf16.mxu0 0
        %3393 = vmatpush2.bf16.msra.mxu0 %v3124
        %3394 = vmatprep.subr.bf16.mxu0 0
        %3395 = vmatpush2.bf16.msra.mxu0 %v3121
        %3396 = vmatprep.subr.bf16.mxu0 0
        %3397 = vmatpush2.bf16.msra.mxu0 %v3118
        %3398 = vmatprep.mubr.bf16.mxu0 %v1197
        %3399 = vmatmul.mubr.bf16.gmra.mxu0 %v1196
        %v3400 = vpop.f32.mrf.mxu0
        %v3401 = vadd.f32 %v2767, %v3400
        %v3402 = vpop.f32.mrf.mxu0
        %v3403 = vpop.f32.mrf.mxu0
        %v3404 = vpop.f32.mrf.mxu0
        %3405 = vdwg.mxu0
        %3406 = vmatprep.subr.bf16.mxu0 0
        %3407 = vmatpush1.bf16.msra.mxu0 %v3163
        %3408 = vmatprep.subr.bf16.mxu0 0
        %3409 = vmatpush1.bf16.msra.mxu0 %v3160
        %3410 = vmatprep.subr.bf16.mxu0 0
        %3411 = vmatpush1.bf16.msra.mxu0 %v3157
        %3412 = vmatprep.subr.bf16.mxu0 0
        %3413 = vmatpush1.bf16.msra.mxu0 %v3154
        %3414 = vmatprep.subr.bf16.mxu0 0
        %3415 = vmatpush1.bf16.msra.mxu0 %v3151
        %3416 = vmatprep.subr.bf16.mxu0 0
        %3417 = vmatpush1.bf16.msra.mxu0 %v3148
        %3418 = vmatprep.subr.bf16.mxu0 0
        %3419 = vmatpush1.bf16.msra.mxu0 %v3145
        %3420 = vmatprep.subr.bf16.mxu0 0
        %3421 = vmatpush1.bf16.msra.mxu0 %v3142
        %3422 = vmatprep.subr.bf16.mxu0 0
        %3423 = vmatpush2.bf16.msra.mxu0 %v3187
        %3424 = vmatprep.subr.bf16.mxu0 0
        %3425 = vmatpush2.bf16.msra.mxu0 %v3184
        %3426 = vmatprep.subr.bf16.mxu0 0
        %3427 = vmatpush2.bf16.msra.mxu0 %v3181
        %3428 = vmatprep.subr.bf16.mxu0 0
        %3429 = vmatpush2.bf16.msra.mxu0 %v3178
        %3430 = vmatprep.subr.bf16.mxu0 0
        %3431 = vmatpush2.bf16.msra.mxu0 %v3175
        %3432 = vmatprep.subr.bf16.mxu0 0
        %3433 = vmatpush2.bf16.msra.mxu0 %v3172
        %3434 = vmatprep.subr.bf16.mxu0 0
        %3435 = vmatpush2.bf16.msra.mxu0 %v3169
        %3436 = vmatprep.subr.bf16.mxu0 0
        %3437 = vmatpush2.bf16.msra.mxu0 %v3166
        %3438 = vmatprep.mubr.bf16.mxu0 %v1199
        %3439 = vmatmul.mubr.bf16.gmra.mxu0 %v1198
        %v3440 = vpop.f32.mrf.mxu0
        %v3441 = vadd.f32 %v3401, %v3440
        %v3442 = vpop.f32.mrf.mxu0
        %v3443 = vpop.f32.mrf.mxu0
        %v3444 = vpop.f32.mrf.mxu0
        %3445 = vdwg.mxu0
        %v3446 = vld [vmem:[#allocation5 + $0x20] sm:$0xff]
        %v3447 = vld [vmem:[#allocation5 + $0x28] sm:$0xff]
        %v3448 = vld [vmem:[#allocation5 + $0x50] sm:$0xff]
        %v3449 = vld [vmem:[#allocation5 + $0x58] sm:$0xff]
        %v3450 = vld [vmem:[#allocation5 + $0x80] sm:$0xff]
        %v3451 = vld [vmem:[#allocation5 + $0x88] sm:$0xff]
        %v3452 = vld [vmem:[#allocation5 + $0xb0] sm:$0xff]
        %v3453 = vld [vmem:[#allocation5 + $0xb8] sm:$0xff]
        %v3454 = vld [vmem:[#allocation5 + $0xe0] sm:$0xff]
        %v3455 = vld [vmem:[#allocation5 + $0xe8] sm:$0xff]
        %v3456 = vld [vmem:[#allocation5 + $0x110] sm:$0xff]
        %v3457 = vld [vmem:[#allocation5 + $0x118] sm:$0xff]
        %v3458 = vld [vmem:[#allocation5 + $0x140] sm:$0xff]
        %v3459 = vld [vmem:[#allocation5 + $0x148] sm:$0xff]
        %v3460 = vld [vmem:[#allocation5 + $0x170] sm:$0xff]
        %v3461 = vld [vmem:[#allocation5 + $0x178] sm:$0xff]
        %v3462 = vld [vmem:[#allocation5 + $0x1a0] sm:$0xff]
        %v3463 = vld [vmem:[#allocation5 + $0x1a8] sm:$0xff]
        %v3464 = vld [vmem:[#allocation5 + $0x1d0] sm:$0xff]
        %v3465 = vld [vmem:[#allocation5 + $0x1d8] sm:$0xff]
        %v3466 = vld [vmem:[#allocation5 + $0x200] sm:$0xff]
        %v3467 = vld [vmem:[#allocation5 + $0x208] sm:$0xff]
        %v3468 = vld [vmem:[#allocation5 + $0x230] sm:$0xff]
        %v3469 = vld [vmem:[#allocation5 + $0x238] sm:$0xff]
        %v3470 = vld [vmem:[#allocation5 + $0x260] sm:$0xff]
        %v3471 = vld [vmem:[#allocation5 + $0x268] sm:$0xff]
        %v3472 = vld [vmem:[#allocation5 + $0x290] sm:$0xff]
        %v3473 = vld [vmem:[#allocation5 + $0x298] sm:$0xff]
        %v3474 = vld [vmem:[#allocation5 + $0x2c0] sm:$0xff]
        %v3475 = vld [vmem:[#allocation5 + $0x2c8] sm:$0xff]
        %v3476 = vld [vmem:[#allocation5 + $0x2f0] sm:$0xff]
        %v3477 = vld [vmem:[#allocation5 + $0x2f8] sm:$0xff]
        %v3478 = vld [vmem:[#allocation5 + $0x320] sm:$0xff]
        %v3479 = vld [vmem:[#allocation5 + $0x328] sm:$0xff]
        %v3480 = vld [vmem:[#allocation5 + $0x350] sm:$0xff]
        %v3481 = vld [vmem:[#allocation5 + $0x358] sm:$0xff]
        %v3482 = vld [vmem:[#allocation5 + $0x380] sm:$0xff]
        %v3483 = vld [vmem:[#allocation5 + $0x388] sm:$0xff]
        %v3484 = vld [vmem:[#allocation5 + $0x3b0] sm:$0xff]
        %v3485 = vld [vmem:[#allocation5 + $0x3b8] sm:$0xff]
        %v3486 = vld [vmem:[#allocation5 + $0x3e0] sm:$0xff]
        %v3487 = vld [vmem:[#allocation5 + $0x3e8] sm:$0xff]
        %v3488 = vld [vmem:[#allocation5 + $0x410] sm:$0xff]
        %v3489 = vld [vmem:[#allocation5 + $0x418] sm:$0xff]
        %v3490 = vld [vmem:[#allocation5 + $0x440] sm:$0xff]
        %v3491 = vld [vmem:[#allocation5 + $0x448] sm:$0xff]
        %v3492 = vld [vmem:[#allocation5 + $0x470] sm:$0xff]
        %v3493 = vld [vmem:[#allocation5 + $0x478] sm:$0xff]
        %v3494 = vld [vmem:[#allocation5 + $0x4a0] sm:$0xff]
        %v3495 = vld [vmem:[#allocation5 + $0x4a8] sm:$0xff]
        %v3496 = vld [vmem:[#allocation5 + $0x4d0] sm:$0xff]
        %v3497 = vld [vmem:[#allocation5 + $0x4d8] sm:$0xff]
        %v3498 = vld [vmem:[#allocation5 + $0x500] sm:$0xff]
        %v3499 = vld [vmem:[#allocation5 + $0x508] sm:$0xff]
        %v3500 = vld [vmem:[#allocation5 + $0x530] sm:$0xff]
        %v3501 = vld [vmem:[#allocation5 + $0x538] sm:$0xff]
        %v3502 = vld [vmem:[#allocation5 + $0x560] sm:$0xff]
        %v3503 = vld [vmem:[#allocation5 + $0x568] sm:$0xff]
        %v3504 = vld [vmem:[#allocation5 + $0x590] sm:$0xff]
        %v3505 = vld [vmem:[#allocation5 + $0x598] sm:$0xff]
        %v3506 = vld [vmem:[#allocation5 + $0x5c0] sm:$0xff]
        %v3507 = vld [vmem:[#allocation5 + $0x5c8] sm:$0xff]
        %v3508 = vld [vmem:[#allocation5 + $0x5f0] sm:$0xff]
        %v3509 = vld [vmem:[#allocation5 + $0x5f8] sm:$0xff]
        %v3510 = vld [vmem:[#allocation5 + $0x620] sm:$0xff]
        %v3511 = vld [vmem:[#allocation5 + $0x628] sm:$0xff]
        %v3512 = vld [vmem:[#allocation5 + $0x650] sm:$0xff]
        %v3513 = vld [vmem:[#allocation5 + $0x658] sm:$0xff]
        %v3514 = vld [vmem:[#allocation5 + $0x680] sm:$0xff]
        %v3515 = vld [vmem:[#allocation5 + $0x688] sm:$0xff]
        %v3516 = vld [vmem:[#allocation5 + $0x6b0] sm:$0xff]
        %v3517 = vld [vmem:[#allocation5 + $0x6b8] sm:$0xff]
        %v3518 = vld [vmem:[#allocation5 + $0x6e0] sm:$0xff]
        %v3519 = vld [vmem:[#allocation5 + $0x6e8] sm:$0xff]
        %v3520 = vld [vmem:[#allocation5 + $0x710] sm:$0xff]
        %v3521 = vld [vmem:[#allocation5 + $0x718] sm:$0xff]
        %v3522 = vld [vmem:[#allocation5 + $0x740] sm:$0xff]
        %v3523 = vld [vmem:[#allocation5 + $0x748] sm:$0xff]
        %v3524 = vld [vmem:[#allocation5 + $0x770] sm:$0xff]
        %v3525 = vld [vmem:[#allocation5 + $0x778] sm:$0xff]
        %v3526 = vld [vmem:[#allocation5 + $0x7a0] sm:$0xff]
        %v3527 = vld [vmem:[#allocation5 + $0x7a8] sm:$0xff]
        %v3528 = vld [vmem:[#allocation5 + $0x7d0] sm:$0xff]
        %v3529 = vld [vmem:[#allocation5 + $0x7d8] sm:$0xff]
        %v3530 = vld [vmem:[#allocation5 + $0x800] sm:$0xff]
        %v3531 = vld [vmem:[#allocation5 + $0x808] sm:$0xff]
        %v3532 = vld [vmem:[#allocation5 + $0x830] sm:$0xff]
        %v3533 = vld [vmem:[#allocation5 + $0x838] sm:$0xff]
        %v3534 = vld [vmem:[#allocation5 + $0x860] sm:$0xff]
        %v3535 = vld [vmem:[#allocation5 + $0x868] sm:$0xff]
        %v3536 = vld [vmem:[#allocation5 + $0x890] sm:$0xff]
        %v3537 = vld [vmem:[#allocation5 + $0x898] sm:$0xff]
        %v3538 = vld [vmem:[#allocation5 + $0x8c0] sm:$0xff]
        %v3539 = vld [vmem:[#allocation5 + $0x8c8] sm:$0xff]
        %v3540 = vld [vmem:[#allocation5 + $0x8f0] sm:$0xff]
        %v3541 = vld [vmem:[#allocation5 + $0x8f8] sm:$0xff]
        %v3542 = vld [vmem:[#allocation7 + $0x8] sm:$0xf]
        %v3543 = vld [vmem:[#allocation8 + $0x600] sm:$0xff]
        %v3544 = vld [vmem:[#allocation8 + $0x608] sm:$0xf]
        %v3545 = vld [vmem:[#allocation8 + $0x60c] sm:$0xff]
        %v3546 = vld [vmem:[#allocation8 + $0x614] sm:$0xf]
        %v3547 = vld [vmem:[#allocation8 + $0x618] sm:$0xff]
        %v3548 = vld [vmem:[#allocation8 + $0x620] sm:$0xf]
        %v3549 = vld [vmem:[#allocation8 + $0x624] sm:$0xff]
        %v3550 = vld [vmem:[#allocation8 + $0x62c] sm:$0xf]
        %v3551 = vld [vmem:[#allocation8 + $0x630] sm:$0xff]
        %v3552 = vld [vmem:[#allocation8 + $0x638] sm:$0xf]
        %v3553 = vld [vmem:[#allocation8 + $0x63c] sm:$0xff]
        %v3554 = vld [vmem:[#allocation8 + $0x644] sm:$0xf]
        %v3555 = vld [vmem:[#allocation8 + $0x648] sm:$0xff]
        %v3556 = vld [vmem:[#allocation8 + $0x650] sm:$0xf]
        %v3557 = vld [vmem:[#allocation8 + $0x654] sm:$0xff]
        %v3558 = vld [vmem:[#allocation8 + $0x65c] sm:$0xf]
        %v3559 = vld [vmem:[#allocation8 + $0x660] sm:$0xff]
        %v3560 = vld [vmem:[#allocation8 + $0x668] sm:$0xf]
        %v3561 = vld [vmem:[#allocation8 + $0x66c] sm:$0xff]
        %v3562 = vld [vmem:[#allocation8 + $0x674] sm:$0xf]
        %v3563 = vld [vmem:[#allocation8 + $0x678] sm:$0xff]
        %v3564 = vld [vmem:[#allocation8 + $0x680] sm:$0xf]
        %v3565 = vld [vmem:[#allocation8 + $0x684] sm:$0xff]
        %v3566 = vld [vmem:[#allocation8 + $0x68c] sm:$0xf]
        %v3567 = vld [vmem:[#allocation8 + $0x690] sm:$0xff]
        %v3568 = vld [vmem:[#allocation8 + $0x698] sm:$0xf]
        %v3569 = vld [vmem:[#allocation8 + $0x69c] sm:$0xff]
        %v3570 = vld [vmem:[#allocation8 + $0x6a4] sm:$0xf]
        %v3571 = vld [vmem:[#allocation8 + $0x6a8] sm:$0xff]
        %v3572 = vld [vmem:[#allocation8 + $0x6b0] sm:$0xf]
        %v3573 = vld [vmem:[#allocation8 + $0x6b4] sm:$0xff]
        %v3574 = vld [vmem:[#allocation8 + $0x6bc] sm:$0xf]
        %v3575 = vld [vmem:[#allocation8 + $0x6c0] sm:$0xff]
        %v3576 = vld [vmem:[#allocation8 + $0x6c8] sm:$0xf]
        %v3577 = vld [vmem:[#allocation8 + $0x6cc] sm:$0xff]
        %v3578 = vld [vmem:[#allocation8 + $0x6d4] sm:$0xf]
        %v3579 = vld [vmem:[#allocation8 + $0x6d8] sm:$0xff]
        %v3580 = vld [vmem:[#allocation8 + $0x6e0] sm:$0xf]
        %v3581 = vld [vmem:[#allocation8 + $0x6e4] sm:$0xff]
        %v3582 = vld [vmem:[#allocation8 + $0x6ec] sm:$0xf]
        %v3583 = vld [vmem:[#allocation8 + $0x6f0] sm:$0xff]
        %v3584 = vld [vmem:[#allocation8 + $0x6f8] sm:$0xf]
        %v3585 = vld [vmem:[#allocation8 + $0x6fc] sm:$0xff]
        %v3586 = vld [vmem:[#allocation8 + $0x704] sm:$0xf]
        %v3587 = vld [vmem:[#allocation8 + $0x708] sm:$0xff]
        %v3588 = vld [vmem:[#allocation8 + $0x710] sm:$0xf]
        %v3589 = vld [vmem:[#allocation8 + $0x714] sm:$0xff]
        %v3590 = vld [vmem:[#allocation8 + $0x71c] sm:$0xf]
        %v3591 = vld [vmem:[#allocation8 + $0x720] sm:$0xff]
        %v3592 = vld [vmem:[#allocation8 + $0x728] sm:$0xf]
        %v3593 = vld [vmem:[#allocation8 + $0x72c] sm:$0xff]
        %v3594 = vld [vmem:[#allocation8 + $0x734] sm:$0xf]
        %v3595 = vld [vmem:[#allocation8 + $0x738] sm:$0xff]
        %v3596 = vld [vmem:[#allocation8 + $0x740] sm:$0xf]
        %v3597 = vld [vmem:[#allocation8 + $0x744] sm:$0xff]
        %v3598 = vld [vmem:[#allocation8 + $0x74c] sm:$0xf]
        %v3599 = vld [vmem:[#allocation8 + $0x750] sm:$0xff]
        %v3600 = vld [vmem:[#allocation8 + $0x758] sm:$0xf]
        %v3601 = vld [vmem:[#allocation8 + $0x75c] sm:$0xff]
        %v3602 = vld [vmem:[#allocation8 + $0x764] sm:$0xf]
        %v3603 = vld [vmem:[#allocation8 + $0x768] sm:$0xff]
        %v3604 = vld [vmem:[#allocation8 + $0x770] sm:$0xf]
        %v3605 = vld [vmem:[#allocation8 + $0x774] sm:$0xff]
        %v3606 = vld [vmem:[#allocation8 + $0x77c] sm:$0xf]
        %v3607 = vld [vmem:[#allocation8 + $0x780] sm:$0xff]
        %v3608 = vld [vmem:[#allocation8 + $0x788] sm:$0xf]
        %v3609 = vld [vmem:[#allocation8 + $0x78c] sm:$0xff]
        %v3610 = vld [vmem:[#allocation8 + $0x794] sm:$0xf]
        %v3611 = vld [vmem:[#allocation8 + $0x798] sm:$0xff]
        %v3612 = vld [vmem:[#allocation8 + $0x7a0] sm:$0xf]
        %v3613 = vld [vmem:[#allocation8 + $0x7a4] sm:$0xff]
        %v3614 = vld [vmem:[#allocation8 + $0x7ac] sm:$0xf]
        %v3615 = vld [vmem:[#allocation8 + $0x7b0] sm:$0xff]
        %v3616 = vld [vmem:[#allocation8 + $0x7b8] sm:$0xf]
        %v3617 = vld [vmem:[#allocation8 + $0x7bc] sm:$0xff]
        %v3618 = vld [vmem:[#allocation8 + $0x7c4] sm:$0xf]
        %v3619 = vld [vmem:[#allocation8 + $0x7c8] sm:$0xff]
        %v3620 = vld [vmem:[#allocation8 + $0x7d0] sm:$0xf]
        %v3621 = vld [vmem:[#allocation8 + $0x7d4] sm:$0xff]
        %v3622 = vld [vmem:[#allocation8 + $0x7dc] sm:$0xf]
        %v3623 = vld [vmem:[#allocation8 + $0x7e0] sm:$0xff]
        %v3624 = vld [vmem:[#allocation8 + $0x7e8] sm:$0xf]
        %v3625 = vld [vmem:[#allocation8 + $0x7ec] sm:$0xff]
        %v3626 = vld [vmem:[#allocation8 + $0x7f4] sm:$0xf]
        %v3627 = vld [vmem:[#allocation8 + $0x7f8] sm:$0xff]
        %v3628 = vld [vmem:[#allocation8 + $0x800] sm:$0xf]
        %v3629 = vld [vmem:[#allocation8 + $0x804] sm:$0xff]
        %v3630 = vld [vmem:[#allocation8 + $0x80c] sm:$0xf]
        %v3631 = vld [vmem:[#allocation8 + $0x810] sm:$0xff]
        %v3632 = vld [vmem:[#allocation8 + $0x818] sm:$0xf]
        %v3633 = vld [vmem:[#allocation8 + $0x81c] sm:$0xff]
        %v3634 = vld [vmem:[#allocation8 + $0x824] sm:$0xf]
        %v3635 = vld [vmem:[#allocation8 + $0x828] sm:$0xff]
        %v3636 = vld [vmem:[#allocation8 + $0x830] sm:$0xf]
        %v3637 = vld [vmem:[#allocation8 + $0x834] sm:$0xff]
        %v3638 = vld [vmem:[#allocation8 + $0x83c] sm:$0xf]
        %v3639 = vld [vmem:[#allocation8 + $0x840] sm:$0xff]
        %v3640 = vld [vmem:[#allocation8 + $0x848] sm:$0xf]
        %v3641 = vld [vmem:[#allocation8 + $0x84c] sm:$0xff]
        %v3642 = vld [vmem:[#allocation8 + $0x854] sm:$0xf]
        %v3643 = vld [vmem:[#allocation8 + $0x858] sm:$0xff]
        %v3644 = vld [vmem:[#allocation8 + $0x860] sm:$0xf]
        %v3645 = vld [vmem:[#allocation8 + $0x864] sm:$0xff]
        %v3646 = vld [vmem:[#allocation8 + $0x86c] sm:$0xf]
        %v3647 = vld [vmem:[#allocation8 + $0x870] sm:$0xff]
        %v3648 = vld [vmem:[#allocation8 + $0x878] sm:$0xf]
        %v3649 = vld [vmem:[#allocation8 + $0x87c] sm:$0xff]
        %v3650 = vld [vmem:[#allocation8 + $0x884] sm:$0xf]
        %v3651 = vld [vmem:[#allocation8 + $0x888] sm:$0xff]
        %v3652 = vld [vmem:[#allocation8 + $0x890] sm:$0xf]
        %v3653 = vld [vmem:[#allocation8 + $0x894] sm:$0xff]
        %v3654 = vld [vmem:[#allocation8 + $0x89c] sm:$0xf]
        %v3655 = vld [vmem:[#allocation8 + $0x8a0] sm:$0xff]
        %v3656 = vld [vmem:[#allocation8 + $0x8a8] sm:$0xf]
        %v3657 = vld [vmem:[#allocation8 + $0x8ac] sm:$0xff]
        %v3658 = vld [vmem:[#allocation8 + $0x8b4] sm:$0xf]
        %v3659 = vld [vmem:[#allocation8 + $0x8b8] sm:$0xff]
        %v3660 = vld [vmem:[#allocation8 + $0x8c0] sm:$0xf]
        %v3661 = vld [vmem:[#allocation8 + $0x8c4] sm:$0xff]
        %v3662 = vld [vmem:[#allocation8 + $0x8cc] sm:$0xf]
        %v3663 = vld [vmem:[#allocation8 + $0x8d0] sm:$0xff]
        %v3664 = vld [vmem:[#allocation8 + $0x8d8] sm:$0xf]
        %v3665 = vld [vmem:[#allocation8 + $0x8dc] sm:$0xff]
        %v3666 = vld [vmem:[#allocation8 + $0x8e4] sm:$0xf]
        %v3667 = vld [vmem:[#allocation8 + $0x8e8] sm:$0xff]
        %v3668 = vld [vmem:[#allocation8 + $0x8f0] sm:$0xf]
        %v3669 = vld [vmem:[#allocation8 + $0x8f4] sm:$0xff]
        %v3670 = vld [vmem:[#allocation8 + $0x8fc] sm:$0xf]
        %v3672 = vlaneseq
        %v3673 = vshrl.u32 %v3672, 7
        %v3674 = vsub.s32 0, %v3673
        %v3675 = vrot.slane %v3542, %v3674
        %v3676 = vlaneseq
        %v3677 = vshrl.u32 %v3676, 7
        %v3678 = vsub.s32 1, %v3677
        %v3679 = vrot.slane %v3542, %v3678
        %v3680 = vlaneseq
        %v3681 = vshrl.u32 %v3680, 7
        %v3682 = vsub.s32 2, %v3681
        %v3683 = vrot.slane %v3542, %v3682
        %v3684 = vlaneseq
        %v3685 = vshrl.u32 %v3684, 7
        %v3686 = vsub.s32 3, %v3685
        %v3687 = vrot.slane %v3542, %v3686
        %v3788 = vunpack.c.l.b16 %v3446
        %v3789 = vunpack.c.h.b16 %v3446
        %v3790 = vunpack.c.l.b16 %v3447
        %v3791 = vunpack.c.h.b16 %v3447
        %v3792 = vunpack.c.l.b16 %v3448
        %v3793 = vunpack.c.h.b16 %v3448
        %v3794 = vunpack.c.l.b16 %v3449
        %v3795 = vunpack.c.h.b16 %v3449
        %v3796 = vunpack.c.l.b16 %v3450
        %v3797 = vunpack.c.h.b16 %v3450
        %v3798 = vunpack.c.l.b16 %v3451
        %v3799 = vunpack.c.h.b16 %v3451
        %v3800 = vunpack.c.l.b16 %v3452
        %v3801 = vunpack.c.h.b16 %v3452
        %v3802 = vunpack.c.l.b16 %v3453
        %v3803 = vunpack.c.h.b16 %v3453
        %v3804 = vunpack.c.l.b16 %v3454
        %v3805 = vunpack.c.h.b16 %v3454
        %v3806 = vunpack.c.l.b16 %v3455
        %v3807 = vunpack.c.h.b16 %v3455
        %v3808 = vunpack.c.l.b16 %v3456
        %v3809 = vunpack.c.h.b16 %v3456
        %v3810 = vunpack.c.l.b16 %v3457
        %v3811 = vunpack.c.h.b16 %v3457
        %v3812 = vunpack.c.l.b16 %v3458
        %v3813 = vunpack.c.h.b16 %v3458
        %v3814 = vunpack.c.l.b16 %v3459
        %v3815 = vunpack.c.h.b16 %v3459
        %v3816 = vunpack.c.l.b16 %v3460
        %v3817 = vunpack.c.h.b16 %v3460
        %v3818 = vunpack.c.l.b16 %v3461
        %v3819 = vunpack.c.h.b16 %v3461
        %v3820 = vunpack.c.l.b16 %v3462
        %v3821 = vunpack.c.h.b16 %v3462
        %v3822 = vunpack.c.l.b16 %v3463
        %v3823 = vunpack.c.h.b16 %v3463
        %v3824 = vunpack.c.l.b16 %v3464
        %v3825 = vunpack.c.h.b16 %v3464
        %v3826 = vunpack.c.l.b16 %v3465
        %v3827 = vunpack.c.h.b16 %v3465
        %v3828 = vunpack.c.l.b16 %v3466
        %v3829 = vunpack.c.h.b16 %v3466
        %v3830 = vunpack.c.l.b16 %v3467
        %v3831 = vunpack.c.h.b16 %v3467
        %v3832 = vunpack.c.l.b16 %v3468
        %v3833 = vunpack.c.h.b16 %v3468
        %v3834 = vunpack.c.l.b16 %v3469
        %v3835 = vunpack.c.h.b16 %v3469
        %v3836 = vunpack.c.l.b16 %v3470
        %v3837 = vunpack.c.h.b16 %v3470
        %v3838 = vunpack.c.l.b16 %v3471
        %v3839 = vunpack.c.h.b16 %v3471
        %v3840 = vunpack.c.l.b16 %v3472
        %v3841 = vunpack.c.h.b16 %v3472
        %v3842 = vunpack.c.l.b16 %v3473
        %v3843 = vunpack.c.h.b16 %v3473
        %v3844 = vunpack.c.l.b16 %v3474
        %v3845 = vunpack.c.h.b16 %v3474
        %v3846 = vunpack.c.l.b16 %v3475
        %v3847 = vunpack.c.h.b16 %v3475
        %v3848 = vunpack.c.l.b16 %v3476
        %v3849 = vunpack.c.h.b16 %v3476
        %v3850 = vunpack.c.l.b16 %v3477
        %v3851 = vunpack.c.h.b16 %v3477
        %v3852 = vunpack.c.l.b16 %v3478
        %v3853 = vunpack.c.h.b16 %v3478
        %v3854 = vunpack.c.l.b16 %v3479
        %v3855 = vunpack.c.h.b16 %v3479
        %v3856 = vunpack.c.l.b16 %v3480
        %v3857 = vunpack.c.h.b16 %v3480
        %v3858 = vunpack.c.l.b16 %v3481
        %v3859 = vunpack.c.h.b16 %v3481
        %v3860 = vunpack.c.l.b16 %v3482
        %v3861 = vunpack.c.h.b16 %v3482
        %v3862 = vunpack.c.l.b16 %v3483
        %v3863 = vunpack.c.h.b16 %v3483
        %v3864 = vunpack.c.l.b16 %v3484
        %v3865 = vunpack.c.h.b16 %v3484
        %v3866 = vunpack.c.l.b16 %v3485
        %v3867 = vunpack.c.h.b16 %v3485
        %v3868 = vunpack.c.l.b16 %v3486
        %v3869 = vunpack.c.h.b16 %v3486
        %v3870 = vunpack.c.l.b16 %v3487
        %v3871 = vunpack.c.h.b16 %v3487
        %v3872 = vunpack.c.l.b16 %v3488
        %v3873 = vunpack.c.h.b16 %v3488
        %v3874 = vunpack.c.l.b16 %v3489
        %v3875 = vunpack.c.h.b16 %v3489
        %v3876 = vunpack.c.l.b16 %v3490
        %v3877 = vunpack.c.h.b16 %v3490
        %v3878 = vunpack.c.l.b16 %v3491
        %v3879 = vunpack.c.h.b16 %v3491
        %v3880 = vunpack.c.l.b16 %v3492
        %v3881 = vunpack.c.h.b16 %v3492
        %v3882 = vunpack.c.l.b16 %v3493
        %v3883 = vunpack.c.h.b16 %v3493
        %v3884 = vunpack.c.l.b16 %v3494
        %v3885 = vunpack.c.h.b16 %v3494
        %v3886 = vunpack.c.l.b16 %v3495
        %v3887 = vunpack.c.h.b16 %v3495
        %v3888 = vunpack.c.l.b16 %v3496
        %v3889 = vunpack.c.h.b16 %v3496
        %v3890 = vunpack.c.l.b16 %v3497
        %v3891 = vunpack.c.h.b16 %v3497
        %v3892 = vunpack.c.l.b16 %v3498
        %v3893 = vunpack.c.h.b16 %v3498
        %v3894 = vunpack.c.l.b16 %v3499
        %v3895 = vunpack.c.h.b16 %v3499
        %v3896 = vunpack.c.l.b16 %v3500
        %v3897 = vunpack.c.h.b16 %v3500
        %v3898 = vunpack.c.l.b16 %v3501
        %v3899 = vunpack.c.h.b16 %v3501
        %v3900 = vunpack.c.l.b16 %v3502
        %v3901 = vunpack.c.h.b16 %v3502
        %v3902 = vunpack.c.l.b16 %v3503
        %v3903 = vunpack.c.h.b16 %v3503
        %v3904 = vunpack.c.l.b16 %v3504
        %v3905 = vunpack.c.h.b16 %v3504
        %v3906 = vunpack.c.l.b16 %v3505
        %v3907 = vunpack.c.h.b16 %v3505
        %v3908 = vunpack.c.l.b16 %v3506
        %v3909 = vunpack.c.h.b16 %v3506
        %v3910 = vunpack.c.l.b16 %v3507
        %v3911 = vunpack.c.h.b16 %v3507
        %v3912 = vunpack.c.l.b16 %v3508
        %v3913 = vunpack.c.h.b16 %v3508
        %v3914 = vunpack.c.l.b16 %v3509
        %v3915 = vunpack.c.h.b16 %v3509
        %v3916 = vunpack.c.l.b16 %v3510
        %v3917 = vunpack.c.h.b16 %v3510
        %v3918 = vunpack.c.l.b16 %v3511
        %v3919 = vunpack.c.h.b16 %v3511
        %v3920 = vunpack.c.l.b16 %v3512
        %v3921 = vunpack.c.h.b16 %v3512
        %v3922 = vunpack.c.l.b16 %v3513
        %v3923 = vunpack.c.h.b16 %v3513
        %v3924 = vunpack.c.l.b16 %v3514
        %v3925 = vunpack.c.h.b16 %v3514
        %v3926 = vunpack.c.l.b16 %v3515
        %v3927 = vunpack.c.h.b16 %v3515
        %v3928 = vunpack.c.l.b16 %v3516
        %v3929 = vunpack.c.h.b16 %v3516
        %v3930 = vunpack.c.l.b16 %v3517
        %v3931 = vunpack.c.h.b16 %v3517
        %v3932 = vunpack.c.l.b16 %v3518
        %v3933 = vunpack.c.h.b16 %v3518
        %v3934 = vunpack.c.l.b16 %v3519
        %v3935 = vunpack.c.h.b16 %v3519
        %v3936 = vunpack.c.l.b16 %v3520
        %v3937 = vunpack.c.h.b16 %v3520
        %v3938 = vunpack.c.l.b16 %v3521
        %v3939 = vunpack.c.h.b16 %v3521
        %v3940 = vunpack.c.l.b16 %v3522
        %v3941 = vunpack.c.h.b16 %v3522
        %v3942 = vunpack.c.l.b16 %v3523
        %v3943 = vunpack.c.h.b16 %v3523
        %v3944 = vunpack.c.l.b16 %v3524
        %v3945 = vunpack.c.h.b16 %v3524
        %v3946 = vunpack.c.l.b16 %v3525
        %v3947 = vunpack.c.h.b16 %v3525
        %v3948 = vunpack.c.l.b16 %v3526
        %v3949 = vunpack.c.h.b16 %v3526
        %v3950 = vunpack.c.l.b16 %v3527
        %v3951 = vunpack.c.h.b16 %v3527
        %v3952 = vunpack.c.l.b16 %v3528
        %v3953 = vunpack.c.h.b16 %v3528
        %v3954 = vunpack.c.l.b16 %v3529
        %v3955 = vunpack.c.h.b16 %v3529
        %v3956 = vunpack.c.l.b16 %v3530
        %v3957 = vunpack.c.h.b16 %v3530
        %v3958 = vunpack.c.l.b16 %v3531
        %v3959 = vunpack.c.h.b16 %v3531
        %v3960 = vunpack.c.l.b16 %v3532
        %v3961 = vunpack.c.h.b16 %v3532
        %v3962 = vunpack.c.l.b16 %v3533
        %v3963 = vunpack.c.h.b16 %v3533
        %v3964 = vunpack.c.l.b16 %v3534
        %v3965 = vunpack.c.h.b16 %v3534
        %v3966 = vunpack.c.l.b16 %v3535
        %v3967 = vunpack.c.h.b16 %v3535
        %v3968 = vunpack.c.l.b16 %v3536
        %v3969 = vunpack.c.h.b16 %v3536
        %v3970 = vunpack.c.l.b16 %v3537
        %v3971 = vunpack.c.h.b16 %v3537
        %v3972 = vunpack.c.l.b16 %v3538
        %v3973 = vunpack.c.h.b16 %v3538
        %v3974 = vunpack.c.l.b16 %v3539
        %v3975 = vunpack.c.h.b16 %v3539
        %v3976 = vunpack.c.l.b16 %v3540
        %v3977 = vunpack.c.h.b16 %v3540
        %v3978 = vunpack.c.l.b16 %v3541
        %v3979 = vunpack.c.h.b16 %v3541
        %v3980 = vpack.c.b16 %v3792, %v3788
        %v3981 = vpack.c.b16 %v3793, %v3789
        %v3982 = vpack.c.b16 %v3794, %v3790
        %v3983 = vpack.c.b16 %v3795, %v3791
        %v3984 = vpack.c.b16 %v3800, %v3796
        %v3985 = vpack.c.b16 %v3801, %v3797
        %v3986 = vpack.c.b16 %v3802, %v3798
        %v3987 = vpack.c.b16 %v3803, %v3799
        %v3988 = vpack.c.b16 %v3808, %v3804
        %v3989 = vpack.c.b16 %v3809, %v3805
        %v3990 = vpack.c.b16 %v3810, %v3806
        %v3991 = vpack.c.b16 %v3811, %v3807
        %v3992 = vpack.c.b16 %v3816, %v3812
        %v3993 = vpack.c.b16 %v3817, %v3813
        %v3994 = vpack.c.b16 %v3818, %v3814
        %v3995 = vpack.c.b16 %v3819, %v3815
        %v3996 = vpack.c.b16 %v3824, %v3820
        %v3997 = vpack.c.b16 %v3825, %v3821
        %v3998 = vpack.c.b16 %v3826, %v3822
        %v3999 = vpack.c.b16 %v3827, %v3823
        %v4000 = vpack.c.b16 %v3832, %v3828
        %v4001 = vpack.c.b16 %v3833, %v3829
        %v4002 = vpack.c.b16 %v3834, %v3830
        %v4003 = vpack.c.b16 %v3835, %v3831
        %v4004 = vpack.c.b16 %v3840, %v3836
        %v4005 = vpack.c.b16 %v3841, %v3837
        %v4006 = vpack.c.b16 %v3842, %v3838
        %v4007 = vpack.c.b16 %v3843, %v3839
        %v4008 = vpack.c.b16 %v3848, %v3844
        %v4009 = vpack.c.b16 %v3849, %v3845
        %v4010 = vpack.c.b16 %v3850, %v3846
        %v4011 = vpack.c.b16 %v3851, %v3847
        %v4012 = vpack.c.b16 %v3856, %v3852
        %v4013 = vpack.c.b16 %v3857, %v3853
        %v4014 = vpack.c.b16 %v3858, %v3854
        %v4015 = vpack.c.b16 %v3859, %v3855
        %v4016 = vpack.c.b16 %v3864, %v3860
        %v4017 = vpack.c.b16 %v3865, %v3861
        %v4018 = vpack.c.b16 %v3866, %v3862
        %v4019 = vpack.c.b16 %v3867, %v3863
        %v4020 = vpack.c.b16 %v3872, %v3868
        %v4021 = vpack.c.b16 %v3873, %v3869
        %v4022 = vpack.c.b16 %v3874, %v3870
        %v4023 = vpack.c.b16 %v3875, %v3871
        %v4024 = vpack.c.b16 %v3880, %v3876
        %v4025 = vpack.c.b16 %v3881, %v3877
        %v4026 = vpack.c.b16 %v3882, %v3878
        %v4027 = vpack.c.b16 %v3883, %v3879
        %v4028 = vpack.c.b16 %v3888, %v3884
        %v4029 = vpack.c.b16 %v3889, %v3885
        %v4030 = vpack.c.b16 %v3890, %v3886
        %v4031 = vpack.c.b16 %v3891, %v3887
        %v4032 = vpack.c.b16 %v3896, %v3892
        %v4033 = vpack.c.b16 %v3897, %v3893
        %v4034 = vpack.c.b16 %v3898, %v3894
        %v4035 = vpack.c.b16 %v3899, %v3895
        %v4036 = vpack.c.b16 %v3904, %v3900
        %v4037 = vpack.c.b16 %v3905, %v3901
        %v4038 = vpack.c.b16 %v3906, %v3902
        %v4039 = vpack.c.b16 %v3907, %v3903
        %v4040 = vpack.c.b16 %v3912, %v3908
        %v4041 = vpack.c.b16 %v3913, %v3909
        %v4042 = vpack.c.b16 %v3914, %v3910
        %v4043 = vpack.c.b16 %v3915, %v3911
        %v4044 = vpack.c.b16 %v3920, %v3916
        %v4045 = vpack.c.b16 %v3921, %v3917
        %v4046 = vpack.c.b16 %v3922, %v3918
        %v4047 = vpack.c.b16 %v3923, %v3919
        %v4048 = vpack.c.b16 %v3928, %v3924
        %v4049 = vpack.c.b16 %v3929, %v3925
        %v4050 = vpack.c.b16 %v3930, %v3926
        %v4051 = vpack.c.b16 %v3931, %v3927
        %v4052 = vpack.c.b16 %v3936, %v3932
        %v4053 = vpack.c.b16 %v3937, %v3933
        %v4054 = vpack.c.b16 %v3938, %v3934
        %v4055 = vpack.c.b16 %v3939, %v3935
        %v4056 = vpack.c.b16 %v3944, %v3940
        %v4057 = vpack.c.b16 %v3945, %v3941
        %v4058 = vpack.c.b16 %v3946, %v3942
        %v4059 = vpack.c.b16 %v3947, %v3943
        %v4060 = vpack.c.b16 %v3952, %v3948
        %v4061 = vpack.c.b16 %v3953, %v3949
        %v4062 = vpack.c.b16 %v3954, %v3950
        %v4063 = vpack.c.b16 %v3955, %v3951
        %v4064 = vpack.c.b16 %v3960, %v3956
        %v4065 = vpack.c.b16 %v3961, %v3957
        %v4066 = vpack.c.b16 %v3962, %v3958
        %v4067 = vpack.c.b16 %v3963, %v3959
        %v4068 = vpack.c.b16 %v3968, %v3964
        %v4069 = vpack.c.b16 %v3969, %v3965
        %v4070 = vpack.c.b16 %v3970, %v3966
        %v4071 = vpack.c.b16 %v3971, %v3967
        %v4072 = vpack.c.b16 %v3976, %v3972
        %v4073 = vpack.c.b16 %v3977, %v3973
        %v4074 = vpack.c.b16 %v3978, %v3974
        %v4075 = vpack.c.b16 %v3979, %v3975
        %4172 = vmatprep.subr.bf16.mxu0 %v4009
        %4173 = vmatpush1.bf16.msra.mxu0 %v4008
        %4174 = vmatprep.subr.bf16.mxu0 %v4005
        %4175 = vmatpush1.bf16.msra.mxu0 %v4004
        %4176 = vmatprep.subr.bf16.mxu0 %v4001
        %4177 = vmatpush1.bf16.msra.mxu0 %v4000
        %4178 = vmatprep.subr.bf16.mxu0 %v3997
        %4179 = vmatpush1.bf16.msra.mxu0 %v3996
        %4180 = vmatprep.subr.bf16.mxu0 %v3993
        %4181 = vmatpush1.bf16.msra.mxu0 %v3992
        %4182 = vmatprep.subr.bf16.mxu0 %v3989
        %4183 = vmatpush1.bf16.msra.mxu0 %v3988
        %4184 = vmatprep.subr.bf16.mxu0 %v3985
        %4185 = vmatpush1.bf16.msra.mxu0 %v3984
        %4186 = vmatprep.subr.bf16.mxu0 %v3981
        %4187 = vmatpush1.bf16.msra.mxu0 %v3980
        %4188 = vmatprep.subr.bf16.mxu0 %v4041
        %4189 = vmatpush2.bf16.msra.mxu0 %v4040
        %4190 = vmatprep.subr.bf16.mxu0 %v4037
        %4191 = vmatpush2.bf16.msra.mxu0 %v4036
        %4192 = vmatprep.subr.bf16.mxu0 %v4033
        %4193 = vmatpush2.bf16.msra.mxu0 %v4032
        %4194 = vmatprep.subr.bf16.mxu0 %v4029
        %4195 = vmatpush2.bf16.msra.mxu0 %v4028
        %4196 = vmatprep.subr.bf16.mxu0 %v4025
        %4197 = vmatpush2.bf16.msra.mxu0 %v4024
        %4198 = vmatprep.subr.bf16.mxu0 %v4021
        %4199 = vmatpush2.bf16.msra.mxu0 %v4020
        %4200 = vmatprep.subr.bf16.mxu0 %v4017
        %4201 = vmatpush2.bf16.msra.mxu0 %v4016
        %4202 = vmatprep.subr.bf16.mxu0 %v4013
        %4203 = vmatpush2.bf16.msra.mxu0 %v4012
        %4204 = vmatprep.mubr.bf16.mxu0 %v300
        %4205 = vmatmul.mubr.bf16.gmra.mxu0 %v299
        %v4206 = vpop.f32.mrf.mxu0
        %v4207 = vadd.f32 %v3675, %v4206
        %v4208 = vpop.f32.mrf.mxu0
        %v4209 = vadd.f32 %v3679, %v4208
        %v4210 = vpop.f32.mrf.mxu0
        %v4211 = vpop.f32.mrf.mxu0
        %4212 = vdwg.mxu0
        %4213 = vmatprep.subr.bf16.mxu0 %v4073
        %4214 = vmatpush1.bf16.msra.mxu0 %v4072
        %4215 = vmatprep.subr.bf16.mxu0 %v4069
        %4216 = vmatpush1.bf16.msra.mxu0 %v4068
        %4217 = vmatprep.subr.bf16.mxu0 %v4065
        %4218 = vmatpush1.bf16.msra.mxu0 %v4064
        %4219 = vmatprep.subr.bf16.mxu0 %v4061
        %4220 = vmatpush1.bf16.msra.mxu0 %v4060
        %4221 = vmatprep.subr.bf16.mxu0 %v4057
        %4222 = vmatpush1.bf16.msra.mxu0 %v4056
        %4223 = vmatprep.subr.bf16.mxu0 %v4053
        %4224 = vmatpush1.bf16.msra.mxu0 %v4052
        %4225 = vmatprep.subr.bf16.mxu0 %v4049
        %4226 = vmatpush1.bf16.msra.mxu0 %v4048
        %4227 = vmatprep.subr.bf16.mxu0 %v4045
        %4228 = vmatpush1.bf16.msra.mxu0 %v4044
        %4229 = vmatprep.subr.bf16.mxu0 0
        %4230 = vmatpush2.bf16.msra.mxu0 0
        %4231 = vmatprep.subr.bf16.mxu0 0
        %4232 = vmatpush2.bf16.msra.mxu0 0
        %4233 = vmatprep.subr.bf16.mxu0 0
        %4234 = vmatpush2.bf16.msra.mxu0 0
        %4235 = vmatprep.subr.bf16.mxu0 0
        %4236 = vmatpush2.bf16.msra.mxu0 0
        %4237 = vmatprep.subr.bf16.mxu0 0
        %4238 = vmatpush2.bf16.msra.mxu0 0
        %4239 = vmatprep.subr.bf16.mxu0 0
        %4240 = vmatpush2.bf16.msra.mxu0 0
        %4241 = vmatprep.subr.bf16.mxu0 0
        %4242 = vmatpush2.bf16.msra.mxu0 0
        %4243 = vmatprep.subr.bf16.mxu0 0
        %4244 = vmatpush2.bf16.msra.mxu0 0
        %4245 = vmatprep.mubr.bf16.mxu0 0
        %4246 = vmatmul.mubr.bf16.gmra.mxu0 %v301
        %v4247 = vpop.f32.mrf.mxu0
        %v4248 = vadd.f32 %v4207, %v4247
        %v4249 = vpop.f32.mrf.mxu0
        %v4250 = vadd.f32 %v4209, %v4249
        %v4251 = vpop.f32.mrf.mxu0
        %v4252 = vpop.f32.mrf.mxu0
        %4253 = vdwg.mxu0
        %4254 = vmatprep.subr.bf16.mxu0 %v4011
        %4255 = vmatpush1.bf16.msra.mxu0 %v4010
        %4256 = vmatprep.subr.bf16.mxu0 %v4007
        %4257 = vmatpush1.bf16.msra.mxu0 %v4006
        %4258 = vmatprep.subr.bf16.mxu0 %v4003
        %4259 = vmatpush1.bf16.msra.mxu0 %v4002
        %4260 = vmatprep.subr.bf16.mxu0 %v3999
        %4261 = vmatpush1.bf16.msra.mxu0 %v3998
        %4262 = vmatprep.subr.bf16.mxu0 %v3995
        %4263 = vmatpush1.bf16.msra.mxu0 %v3994
        %4264 = vmatprep.subr.bf16.mxu0 %v3991
        %4265 = vmatpush1.bf16.msra.mxu0 %v3990
        %4266 = vmatprep.subr.bf16.mxu0 %v3987
        %4267 = vmatpush1.bf16.msra.mxu0 %v3986
        %4268 = vmatprep.subr.bf16.mxu0 %v3983
        %4269 = vmatpush1.bf16.msra.mxu0 %v3982
        %4270 = vmatprep.subr.bf16.mxu0 %v4043
        %4271 = vmatpush2.bf16.msra.mxu0 %v4042
        %4272 = vmatprep.subr.bf16.mxu0 %v4039
        %4273 = vmatpush2.bf16.msra.mxu0 %v4038
        %4274 = vmatprep.subr.bf16.mxu0 %v4035
        %4275 = vmatpush2.bf16.msra.mxu0 %v4034
        %4276 = vmatprep.subr.bf16.mxu0 %v4031
        %4277 = vmatpush2.bf16.msra.mxu0 %v4030
        %4278 = vmatprep.subr.bf16.mxu0 %v4027
        %4279 = vmatpush2.bf16.msra.mxu0 %v4026
        %4280 = vmatprep.subr.bf16.mxu0 %v4023
        %4281 = vmatpush2.bf16.msra.mxu0 %v4022
        %4282 = vmatprep.subr.bf16.mxu0 %v4019
        %4283 = vmatpush2.bf16.msra.mxu0 %v4018
        %4284 = vmatprep.subr.bf16.mxu0 %v4015
        %4285 = vmatpush2.bf16.msra.mxu0 %v4014
        %4286 = vmatprep.mubr.bf16.mxu0 %v300
        %4287 = vmatmul.mubr.bf16.gmra.mxu0 %v299
        %v4288 = vpop.f32.mrf.mxu0
        %v4289 = vadd.f32 %v3683, %v4288
        %v4290 = vpop.f32.mrf.mxu0
        %v4291 = vadd.f32 %v3687, %v4290
        %v4292 = vpop.f32.mrf.mxu0
        %v4293 = vpop.f32.mrf.mxu0
        %4294 = vdwg.mxu0
        %4295 = vmatprep.subr.bf16.mxu0 %v4075
        %4296 = vmatpush1.bf16.msra.mxu0 %v4074
        %4297 = vmatprep.subr.bf16.mxu0 %v4071
        %4298 = vmatpush1.bf16.msra.mxu0 %v4070
        %4299 = vmatprep.subr.bf16.mxu0 %v4067
        %4300 = vmatpush1.bf16.msra.mxu0 %v4066
        %4301 = vmatprep.subr.bf16.mxu0 %v4063
        %4302 = vmatpush1.bf16.msra.mxu0 %v4062
        %4303 = vmatprep.subr.bf16.mxu0 %v4059
        %4304 = vmatpush1.bf16.msra.mxu0 %v4058
        %4305 = vmatprep.subr.bf16.mxu0 %v4055
        %4306 = vmatpush1.bf16.msra.mxu0 %v4054
        %4307 = vmatprep.subr.bf16.mxu0 %v4051
        %4308 = vmatpush1.bf16.msra.mxu0 %v4050
        %4309 = vmatprep.subr.bf16.mxu0 %v4047
        %4310 = vmatpush1.bf16.msra.mxu0 %v4046
        %4311 = vmatprep.subr.bf16.mxu0 0
        %4312 = vmatpush2.bf16.msra.mxu0 0
        %4313 = vmatprep.subr.bf16.mxu0 0
        %4314 = vmatpush2.bf16.msra.mxu0 0
        %4315 = vmatprep.subr.bf16.mxu0 0
        %4316 = vmatpush2.bf16.msra.mxu0 0
        %4317 = vmatprep.subr.bf16.mxu0 0
        %4318 = vmatpush2.bf16.msra.mxu0 0
        %4319 = vmatprep.subr.bf16.mxu0 0
        %4320 = vmatpush2.bf16.msra.mxu0 0
        %4321 = vmatprep.subr.bf16.mxu0 0
        %4322 = vmatpush2.bf16.msra.mxu0 0
        %4323 = vmatprep.subr.bf16.mxu0 0
        %4324 = vmatpush2.bf16.msra.mxu0 0
        %4325 = vmatprep.subr.bf16.mxu0 0
        %4326 = vmatpush2.bf16.msra.mxu0 0
        %4327 = vmatprep.mubr.bf16.mxu0 0
        %4328 = vmatmul.mubr.bf16.gmra.mxu0 %v301
        %v4329 = vpop.f32.mrf.mxu0
        %v4330 = vadd.f32 %v4289, %v4329
        %v4331 = vpop.f32.mrf.mxu0
        %v4332 = vadd.f32 %v4291, %v4331
        %v4333 = vpop.f32.mrf.mxu0
        %v4334 = vpop.f32.mrf.mxu0
        %4335 = vdwg.mxu0
        %v4336 = vmax.f32 %v4248, 0.0
        %v4337 = vmax.f32 %v4250, 0.0
        %v4338 = vmax.f32 %v4330, 0.0
        %v4339 = vmax.f32 %v4332, 0.0
        %v4340 = vpack.c.bf16 %v4336, %v4336
        %v4341 = vpack.c.bf16 %v4337, %v4337
        %v4342 = vpack.c.bf16 %v4338, %v4338
        %v4343 = vpack.c.bf16 %v4339, %v4339
        %v4472 = vunpack.c.l.b16 %v3543
        %v4473 = vunpack.c.h.b16 %v3543
        %v4474 = vunpack.c.l.b16 %v3544
        %v4475 = vunpack.c.l.b16 %v3545
        %v4476 = vunpack.c.h.b16 %v3545
        %v4477 = vunpack.c.l.b16 %v3546
        %v4478 = vunpack.c.l.b16 %v3547
        %v4479 = vunpack.c.h.b16 %v3547
        %v4480 = vunpack.c.l.b16 %v3548
        %v4481 = vunpack.c.l.b16 %v3549
        %v4482 = vunpack.c.h.b16 %v3549
        %v4483 = vunpack.c.l.b16 %v3550
        %v4484 = vunpack.c.l.b16 %v3551
        %v4485 = vunpack.c.h.b16 %v3551
        %v4486 = vunpack.c.l.b16 %v3552
        %v4487 = vunpack.c.l.b16 %v3553
        %v4488 = vunpack.c.h.b16 %v3553
        %v4489 = vunpack.c.l.b16 %v3554
        %v4490 = vunpack.c.l.b16 %v3555
        %v4491 = vunpack.c.h.b16 %v3555
        %v4492 = vunpack.c.l.b16 %v3556
        %v4493 = vunpack.c.l.b16 %v3557
        %v4494 = vunpack.c.h.b16 %v3557
        %v4495 = vunpack.c.l.b16 %v3558
        %v4496 = vunpack.c.l.b16 %v3559
        %v4497 = vunpack.c.h.b16 %v3559
        %v4498 = vunpack.c.l.b16 %v3560
        %v4499 = vunpack.c.l.b16 %v3561
        %v4500 = vunpack.c.h.b16 %v3561
        %v4501 = vunpack.c.l.b16 %v3562
        %v4502 = vunpack.c.l.b16 %v3563
        %v4503 = vunpack.c.h.b16 %v3563
        %v4504 = vunpack.c.l.b16 %v3564
        %v4505 = vunpack.c.l.b16 %v3565
        %v4506 = vunpack.c.h.b16 %v3565
        %v4507 = vunpack.c.l.b16 %v3566
        %v4508 = vunpack.c.l.b16 %v3567
        %v4509 = vunpack.c.h.b16 %v3567
        %v4510 = vunpack.c.l.b16 %v3568
        %v4511 = vunpack.c.l.b16 %v3569
        %v4512 = vunpack.c.h.b16 %v3569
        %v4513 = vunpack.c.l.b16 %v3570
        %v4514 = vunpack.c.l.b16 %v3571
        %v4515 = vunpack.c.h.b16 %v3571
        %v4516 = vunpack.c.l.b16 %v3572
        %v4517 = vunpack.c.l.b16 %v3573
        %v4518 = vunpack.c.h.b16 %v3573
        %v4519 = vunpack.c.l.b16 %v3574
        %v4520 = vunpack.c.l.b16 %v3575
        %v4521 = vunpack.c.h.b16 %v3575
        %v4522 = vunpack.c.l.b16 %v3576
        %v4523 = vunpack.c.l.b16 %v3577
        %v4524 = vunpack.c.h.b16 %v3577
        %v4525 = vunpack.c.l.b16 %v3578
        %v4526 = vunpack.c.l.b16 %v3579
        %v4527 = vunpack.c.h.b16 %v3579
        %v4528 = vunpack.c.l.b16 %v3580
        %v4529 = vunpack.c.l.b16 %v3581
        %v4530 = vunpack.c.h.b16 %v3581
        %v4531 = vunpack.c.l.b16 %v3582
        %v4532 = vunpack.c.l.b16 %v3583
        %v4533 = vunpack.c.h.b16 %v3583
        %v4534 = vunpack.c.l.b16 %v3584
        %v4535 = vunpack.c.l.b16 %v3585
        %v4536 = vunpack.c.h.b16 %v3585
        %v4537 = vunpack.c.l.b16 %v3586
        %v4538 = vunpack.c.l.b16 %v3587
        %v4539 = vunpack.c.h.b16 %v3587
        %v4540 = vunpack.c.l.b16 %v3588
        %v4541 = vunpack.c.l.b16 %v3589
        %v4542 = vunpack.c.h.b16 %v3589
        %v4543 = vunpack.c.l.b16 %v3590
        %v4544 = vunpack.c.l.b16 %v3591
        %v4545 = vunpack.c.h.b16 %v3591
        %v4546 = vunpack.c.l.b16 %v3592
        %v4547 = vunpack.c.l.b16 %v3593
        %v4548 = vunpack.c.h.b16 %v3593
        %v4549 = vunpack.c.l.b16 %v3594
        %v4550 = vunpack.c.l.b16 %v3595
        %v4551 = vunpack.c.h.b16 %v3595
        %v4552 = vunpack.c.l.b16 %v3596
        %v4553 = vunpack.c.l.b16 %v3597
        %v4554 = vunpack.c.h.b16 %v3597
        %v4555 = vunpack.c.l.b16 %v3598
        %v4556 = vunpack.c.l.b16 %v3599
        %v4557 = vunpack.c.h.b16 %v3599
        %v4558 = vunpack.c.l.b16 %v3600
        %v4559 = vunpack.c.l.b16 %v3601
        %v4560 = vunpack.c.h.b16 %v3601
        %v4561 = vunpack.c.l.b16 %v3602
        %v4562 = vunpack.c.l.b16 %v3603
        %v4563 = vunpack.c.h.b16 %v3603
        %v4564 = vunpack.c.l.b16 %v3604
        %v4565 = vunpack.c.l.b16 %v3605
        %v4566 = vunpack.c.h.b16 %v3605
        %v4567 = vunpack.c.l.b16 %v3606
        %v4568 = vunpack.c.l.b16 %v3607
        %v4569 = vunpack.c.h.b16 %v3607
        %v4570 = vunpack.c.l.b16 %v3608
        %v4571 = vunpack.c.l.b16 %v3609
        %v4572 = vunpack.c.h.b16 %v3609
        %v4573 = vunpack.c.l.b16 %v3610
        %v4574 = vunpack.c.l.b16 %v3611
        %v4575 = vunpack.c.h.b16 %v3611
        %v4576 = vunpack.c.l.b16 %v3612
        %v4577 = vunpack.c.l.b16 %v3613
        %v4578 = vunpack.c.h.b16 %v3613
        %v4579 = vunpack.c.l.b16 %v3614
        %v4580 = vunpack.c.l.b16 %v3615
        %v4581 = vunpack.c.h.b16 %v3615
        %v4582 = vunpack.c.l.b16 %v3616
        %v4583 = vunpack.c.l.b16 %v3617
        %v4584 = vunpack.c.h.b16 %v3617
        %v4585 = vunpack.c.l.b16 %v3618
        %v4586 = vunpack.c.l.b16 %v3619
        %v4587 = vunpack.c.h.b16 %v3619
        %v4588 = vunpack.c.l.b16 %v3620
        %v4589 = vunpack.c.l.b16 %v3621
        %v4590 = vunpack.c.h.b16 %v3621
        %v4591 = vunpack.c.l.b16 %v3622
        %v4592 = vunpack.c.l.b16 %v3623
        %v4593 = vunpack.c.h.b16 %v3623
        %v4594 = vunpack.c.l.b16 %v3624
        %v4595 = vunpack.c.l.b16 %v3625
        %v4596 = vunpack.c.h.b16 %v3625
        %v4597 = vunpack.c.l.b16 %v3626
        %v4598 = vunpack.c.l.b16 %v3627
        %v4599 = vunpack.c.h.b16 %v3627
        %v4600 = vunpack.c.l.b16 %v3628
        %v4601 = vunpack.c.l.b16 %v3629
        %v4602 = vunpack.c.h.b16 %v3629
        %v4603 = vunpack.c.l.b16 %v3630
        %v4604 = vunpack.c.l.b16 %v3631
        %v4605 = vunpack.c.h.b16 %v3631
        %v4606 = vunpack.c.l.b16 %v3632
        %v4607 = vunpack.c.l.b16 %v3633
        %v4608 = vunpack.c.h.b16 %v3633
        %v4609 = vunpack.c.l.b16 %v3634
        %v4610 = vunpack.c.l.b16 %v3635
        %v4611 = vunpack.c.h.b16 %v3635
        %v4612 = vunpack.c.l.b16 %v3636
        %v4613 = vunpack.c.l.b16 %v3637
        %v4614 = vunpack.c.h.b16 %v3637
        %v4615 = vunpack.c.l.b16 %v3638
        %v4616 = vunpack.c.l.b16 %v3639
        %v4617 = vunpack.c.h.b16 %v3639
        %v4618 = vunpack.c.l.b16 %v3640
        %v4619 = vunpack.c.l.b16 %v3641
        %v4620 = vunpack.c.h.b16 %v3641
        %v4621 = vunpack.c.l.b16 %v3642
        %v4622 = vunpack.c.l.b16 %v3643
        %v4623 = vunpack.c.h.b16 %v3643
        %v4624 = vunpack.c.l.b16 %v3644
        %v4625 = vunpack.c.l.b16 %v3645
        %v4626 = vunpack.c.h.b16 %v3645
        %v4627 = vunpack.c.l.b16 %v3646
        %v4628 = vunpack.c.l.b16 %v3647
        %v4629 = vunpack.c.h.b16 %v3647
        %v4630 = vunpack.c.l.b16 %v3648
        %v4631 = vunpack.c.l.b16 %v3649
        %v4632 = vunpack.c.h.b16 %v3649
        %v4633 = vunpack.c.l.b16 %v3650
        %v4634 = vunpack.c.l.b16 %v3651
        %v4635 = vunpack.c.h.b16 %v3651
        %v4636 = vunpack.c.l.b16 %v3652
        %v4637 = vunpack.c.l.b16 %v3653
        %v4638 = vunpack.c.h.b16 %v3653
        %v4639 = vunpack.c.l.b16 %v3654
        %v4640 = vunpack.c.l.b16 %v3655
        %v4641 = vunpack.c.h.b16 %v3655
        %v4642 = vunpack.c.l.b16 %v3656
        %v4643 = vunpack.c.l.b16 %v3657
        %v4644 = vunpack.c.h.b16 %v3657
        %v4645 = vunpack.c.l.b16 %v3658
        %v4646 = vunpack.c.l.b16 %v3659
        %v4647 = vunpack.c.h.b16 %v3659
        %v4648 = vunpack.c.l.b16 %v3660
        %v4649 = vunpack.c.l.b16 %v3661
        %v4650 = vunpack.c.h.b16 %v3661
        %v4651 = vunpack.c.l.b16 %v3662
        %v4652 = vunpack.c.l.b16 %v3663
        %v4653 = vunpack.c.h.b16 %v3663
        %v4654 = vunpack.c.l.b16 %v3664
        %v4655 = vunpack.c.l.b16 %v3665
        %v4656 = vunpack.c.h.b16 %v3665
        %v4657 = vunpack.c.l.b16 %v3666
        %v4658 = vunpack.c.l.b16 %v3667
        %v4659 = vunpack.c.h.b16 %v3667
        %v4660 = vunpack.c.l.b16 %v3668
        %v4661 = vunpack.c.l.b16 %v3669
        %v4662 = vunpack.c.h.b16 %v3669
        %v4663 = vunpack.c.l.b16 %v3670
        %v4664 = vpack.c.b16 %v4475, %v4472
        %v4665 = vpack.c.b16 %v4476, %v4473
        %v4666 = vpack.c.b16 %v4477, %v4474
        %v4667 = vpack.c.b16 %v4481, %v4478
        %v4668 = vpack.c.b16 %v4482, %v4479
        %v4669 = vpack.c.b16 %v4483, %v4480
        %v4670 = vpack.c.b16 %v4487, %v4484
        %v4671 = vpack.c.b16 %v4488, %v4485
        %v4672 = vpack.c.b16 %v4489, %v4486
        %v4673 = vpack.c.b16 %v4493, %v4490
        %v4674 = vpack.c.b16 %v4494, %v4491
        %v4675 = vpack.c.b16 %v4495, %v4492
        %v4676 = vpack.c.b16 %v4499, %v4496
        %v4677 = vpack.c.b16 %v4500, %v4497
        %v4678 = vpack.c.b16 %v4501, %v4498
        %v4679 = vpack.c.b16 %v4505, %v4502
        %v4680 = vpack.c.b16 %v4506, %v4503
        %v4681 = vpack.c.b16 %v4507, %v4504
        %v4682 = vpack.c.b16 %v4511, %v4508
        %v4683 = vpack.c.b16 %v4512, %v4509
        %v4684 = vpack.c.b16 %v4513, %v4510
        %v4685 = vpack.c.b16 %v4517, %v4514
        %v4686 = vpack.c.b16 %v4518, %v4515
        %v4687 = vpack.c.b16 %v4519, %v4516
        %v4688 = vpack.c.b16 %v4523, %v4520
        %v4689 = vpack.c.b16 %v4524, %v4521
        %v4690 = vpack.c.b16 %v4525, %v4522
        %v4691 = vpack.c.b16 %v4529, %v4526
        %v4692 = vpack.c.b16 %v4530, %v4527
        %v4693 = vpack.c.b16 %v4531, %v4528
        %v4694 = vpack.c.b16 %v4535, %v4532
        %v4695 = vpack.c.b16 %v4536, %v4533
        %v4696 = vpack.c.b16 %v4537, %v4534
        %v4697 = vpack.c.b16 %v4541, %v4538
        %v4698 = vpack.c.b16 %v4542, %v4539
        %v4699 = vpack.c.b16 %v4543, %v4540
        %v4700 = vpack.c.b16 %v4547, %v4544
        %v4701 = vpack.c.b16 %v4548, %v4545
        %v4702 = vpack.c.b16 %v4549, %v4546
        %v4703 = vpack.c.b16 %v4553, %v4550
        %v4704 = vpack.c.b16 %v4554, %v4551
        %v4705 = vpack.c.b16 %v4555, %v4552
        %v4706 = vpack.c.b16 %v4559, %v4556
        %v4707 = vpack.c.b16 %v4560, %v4557
        %v4708 = vpack.c.b16 %v4561, %v4558
        %v4709 = vpack.c.b16 %v4565, %v4562
        %v4710 = vpack.c.b16 %v4566, %v4563
        %v4711 = vpack.c.b16 %v4567, %v4564
        %v4712 = vpack.c.b16 %v4571, %v4568
        %v4713 = vpack.c.b16 %v4572, %v4569
        %v4714 = vpack.c.b16 %v4573, %v4570
        %v4715 = vpack.c.b16 %v4577, %v4574
        %v4716 = vpack.c.b16 %v4578, %v4575
        %v4717 = vpack.c.b16 %v4579, %v4576
        %v4718 = vpack.c.b16 %v4583, %v4580
        %v4719 = vpack.c.b16 %v4584, %v4581
        %v4720 = vpack.c.b16 %v4585, %v4582
        %v4721 = vpack.c.b16 %v4589, %v4586
        %v4722 = vpack.c.b16 %v4590, %v4587
        %v4723 = vpack.c.b16 %v4591, %v4588
        %v4724 = vpack.c.b16 %v4595, %v4592
        %v4725 = vpack.c.b16 %v4596, %v4593
        %v4726 = vpack.c.b16 %v4597, %v4594
        %v4727 = vpack.c.b16 %v4601, %v4598
        %v4728 = vpack.c.b16 %v4602, %v4599
        %v4729 = vpack.c.b16 %v4603, %v4600
        %v4730 = vpack.c.b16 %v4607, %v4604
        %v4731 = vpack.c.b16 %v4608, %v4605
        %v4732 = vpack.c.b16 %v4609, %v4606
        %v4733 = vpack.c.b16 %v4613, %v4610
        %v4734 = vpack.c.b16 %v4614, %v4611
        %v4735 = vpack.c.b16 %v4615, %v4612
        %v4736 = vpack.c.b16 %v4619, %v4616
        %v4737 = vpack.c.b16 %v4620, %v4617
        %v4738 = vpack.c.b16 %v4621, %v4618
        %v4739 = vpack.c.b16 %v4625, %v4622
        %v4740 = vpack.c.b16 %v4626, %v4623
        %v4741 = vpack.c.b16 %v4627, %v4624
        %v4742 = vpack.c.b16 %v4631, %v4628
        %v4743 = vpack.c.b16 %v4632, %v4629
        %v4744 = vpack.c.b16 %v4633, %v4630
        %v4745 = vpack.c.b16 %v4637, %v4634
        %v4746 = vpack.c.b16 %v4638, %v4635
        %v4747 = vpack.c.b16 %v4639, %v4636
        %v4748 = vpack.c.b16 %v4643, %v4640
        %v4749 = vpack.c.b16 %v4644, %v4641
        %v4750 = vpack.c.b16 %v4645, %v4642
        %v4751 = vpack.c.b16 %v4649, %v4646
        %v4752 = vpack.c.b16 %v4650, %v4647
        %v4753 = vpack.c.b16 %v4651, %v4648
        %v4754 = vpack.c.b16 %v4655, %v4652
        %v4755 = vpack.c.b16 %v4656, %v4653
        %v4756 = vpack.c.b16 %v4657, %v4654
        %v4757 = vpack.c.b16 %v4661, %v4658
        %v4758 = vpack.c.b16 %v4662, %v4659
        %v4759 = vpack.c.b16 %v4663, %v4660
        %4856 = vmatprep.subr.bf16.mxu0 %v4686
        %4857 = vmatpush1.bf16.msra.mxu0 %v4685
        %4858 = vmatprep.subr.bf16.mxu0 %v4683
        %4859 = vmatpush1.bf16.msra.mxu0 %v4682
        %4860 = vmatprep.subr.bf16.mxu0 %v4680
        %4861 = vmatpush1.bf16.msra.mxu0 %v4679
        %4862 = vmatprep.subr.bf16.mxu0 %v4677
        %4863 = vmatpush1.bf16.msra.mxu0 %v4676
        %4864 = vmatprep.subr.bf16.mxu0 %v4674
        %4865 = vmatpush1.bf16.msra.mxu0 %v4673
        %4866 = vmatprep.subr.bf16.mxu0 %v4671
        %4867 = vmatpush1.bf16.msra.mxu0 %v4670
        %4868 = vmatprep.subr.bf16.mxu0 %v4668
        %4869 = vmatpush1.bf16.msra.mxu0 %v4667
        %4870 = vmatprep.subr.bf16.mxu0 %v4665
        %4871 = vmatpush1.bf16.msra.mxu0 %v4664
        %4872 = vmatprep.subr.bf16.mxu0 %v4710
        %4873 = vmatpush2.bf16.msra.mxu0 %v4709
        %4874 = vmatprep.subr.bf16.mxu0 %v4707
        %4875 = vmatpush2.bf16.msra.mxu0 %v4706
        %4876 = vmatprep.subr.bf16.mxu0 %v4704
        %4877 = vmatpush2.bf16.msra.mxu0 %v4703
        %4878 = vmatprep.subr.bf16.mxu0 %v4701
        %4879 = vmatpush2.bf16.msra.mxu0 %v4700
        %4880 = vmatprep.subr.bf16.mxu0 %v4698
        %4881 = vmatpush2.bf16.msra.mxu0 %v4697
        %4882 = vmatprep.subr.bf16.mxu0 %v4695
        %4883 = vmatpush2.bf16.msra.mxu0 %v4694
        %4884 = vmatprep.subr.bf16.mxu0 %v4692
        %4885 = vmatpush2.bf16.msra.mxu0 %v4691
        %4886 = vmatprep.subr.bf16.mxu0 %v4689
        %4887 = vmatpush2.bf16.msra.mxu0 %v4688
        %4888 = vmatprep.mubr.bf16.mxu0 %v4341
        %4889 = vmatmul.mubr.bf16.gmra.mxu0 %v4340
        %v4890 = vpop.f32.mrf.mxu0
        %v4891 = vadd.f32 0.0, %v4890
        %v4892 = vpop.f32.mrf.mxu0
        %v4893 = vadd.f32 0.0, %v4892
        %v4894 = vpop.f32.mrf.mxu0
        %v4895 = vpop.f32.mrf.mxu0
        %4896 = vdwg.mxu0
        %4897 = vmatprep.subr.bf16.mxu0 %v4734
        %4898 = vmatpush1.bf16.msra.mxu0 %v4733
        %4899 = vmatprep.subr.bf16.mxu0 %v4731
        %4900 = vmatpush1.bf16.msra.mxu0 %v4730
        %4901 = vmatprep.subr.bf16.mxu0 %v4728
        %4902 = vmatpush1.bf16.msra.mxu0 %v4727
        %4903 = vmatprep.subr.bf16.mxu0 %v4725
        %4904 = vmatpush1.bf16.msra.mxu0 %v4724
        %4905 = vmatprep.subr.bf16.mxu0 %v4722
        %4906 = vmatpush1.bf16.msra.mxu0 %v4721
        %4907 = vmatprep.subr.bf16.mxu0 %v4719
        %4908 = vmatpush1.bf16.msra.mxu0 %v4718
        %4909 = vmatprep.subr.bf16.mxu0 %v4716
        %4910 = vmatpush1.bf16.msra.mxu0 %v4715
        %4911 = vmatprep.subr.bf16.mxu0 %v4713
        %4912 = vmatpush1.bf16.msra.mxu0 %v4712
        %4913 = vmatprep.subr.bf16.mxu0 %v4758
        %4914 = vmatpush2.bf16.msra.mxu0 %v4757
        %4915 = vmatprep.subr.bf16.mxu0 %v4755
        %4916 = vmatpush2.bf16.msra.mxu0 %v4754
        %4917 = vmatprep.subr.bf16.mxu0 %v4752
        %4918 = vmatpush2.bf16.msra.mxu0 %v4751
        %4919 = vmatprep.subr.bf16.mxu0 %v4749
        %4920 = vmatpush2.bf16.msra.mxu0 %v4748
        %4921 = vmatprep.subr.bf16.mxu0 %v4746
        %4922 = vmatpush2.bf16.msra.mxu0 %v4745
        %4923 = vmatprep.subr.bf16.mxu0 %v4743
        %4924 = vmatpush2.bf16.msra.mxu0 %v4742
        %4925 = vmatprep.subr.bf16.mxu0 %v4740
        %4926 = vmatpush2.bf16.msra.mxu0 %v4739
        %4927 = vmatprep.subr.bf16.mxu0 %v4737
        %4928 = vmatpush2.bf16.msra.mxu0 %v4736
        %4929 = vmatprep.mubr.bf16.mxu0 %v4343
        %4930 = vmatmul.mubr.bf16.gmra.mxu0 %v4342
        %v4931 = vpop.f32.mrf.mxu0
        %v4932 = vadd.f32 %v4891, %v4931
        %v4933 = vpop.f32.mrf.mxu0
        %v4934 = vadd.f32 %v4893, %v4933
        %v4935 = vpop.f32.mrf.mxu0
        %v4936 = vpop.f32.mrf.mxu0
        %4937 = vdwg.mxu0
        %4938 = vmatprep.subr.bf16.mxu0 0
        %4939 = vmatpush1.bf16.msra.mxu0 %v4687
        %4940 = vmatprep.subr.bf16.mxu0 0
        %4941 = vmatpush1.bf16.msra.mxu0 %v4684
        %4942 = vmatprep.subr.bf16.mxu0 0
        %4943 = vmatpush1.bf16.msra.mxu0 %v4681
        %4944 = vmatprep.subr.bf16.mxu0 0
        %4945 = vmatpush1.bf16.msra.mxu0 %v4678
        %4946 = vmatprep.subr.bf16.mxu0 0
        %4947 = vmatpush1.bf16.msra.mxu0 %v4675
        %4948 = vmatprep.subr.bf16.mxu0 0
        %4949 = vmatpush1.bf16.msra.mxu0 %v4672
        %4950 = vmatprep.subr.bf16.mxu0 0
        %4951 = vmatpush1.bf16.msra.mxu0 %v4669
        %4952 = vmatprep.subr.bf16.mxu0 0
        %4953 = vmatpush1.bf16.msra.mxu0 %v4666
        %4954 = vmatprep.subr.bf16.mxu0 0
        %4955 = vmatpush2.bf16.msra.mxu0 %v4711
        %4956 = vmatprep.subr.bf16.mxu0 0
        %4957 = vmatpush2.bf16.msra.mxu0 %v4708
        %4958 = vmatprep.subr.bf16.mxu0 0
        %4959 = vmatpush2.bf16.msra.mxu0 %v4705
        %4960 = vmatprep.subr.bf16.mxu0 0
        %4961 = vmatpush2.bf16.msra.mxu0 %v4702
        %4962 = vmatprep.subr.bf16.mxu0 0
        %4963 = vmatpush2.bf16.msra.mxu0 %v4699
        %4964 = vmatprep.subr.bf16.mxu0 0
        %4965 = vmatpush2.bf16.msra.mxu0 %v4696
        %4966 = vmatprep.subr.bf16.mxu0 0
        %4967 = vmatpush2.bf16.msra.mxu0 %v4693
        %4968 = vmatprep.subr.bf16.mxu0 0
        %4969 = vmatpush2.bf16.msra.mxu0 %v4690
        %4970 = vmatprep.mubr.bf16.mxu0 %v4341
        %4971 = vmatmul.mubr.bf16.gmra.mxu0 %v4340
        %v4972 = vpop.f32.mrf.mxu0
        %v4973 = vadd.f32 0.0, %v4972
        %v4974 = vpop.f32.mrf.mxu0
        %v4975 = vpop.f32.mrf.mxu0
        %v4976 = vpop.f32.mrf.mxu0
        %4977 = vdwg.mxu0
        %4978 = vmatprep.subr.bf16.mxu0 0
        %4979 = vmatpush1.bf16.msra.mxu0 %v4735
        %4980 = vmatprep.subr.bf16.mxu0 0
        %4981 = vmatpush1.bf16.msra.mxu0 %v4732
        %4982 = vmatprep.subr.bf16.mxu0 0
        %4983 = vmatpush1.bf16.msra.mxu0 %v4729
        %4984 = vmatprep.subr.bf16.mxu0 0
        %4985 = vmatpush1.bf16.msra.mxu0 %v4726
        %4986 = vmatprep.subr.bf16.mxu0 0
        %4987 = vmatpush1.bf16.msra.mxu0 %v4723
        %4988 = vmatprep.subr.bf16.mxu0 0
        %4989 = vmatpush1.bf16.msra.mxu0 %v4720
        %4990 = vmatprep.subr.bf16.mxu0 0
        %4991 = vmatpush1.bf16.msra.mxu0 %v4717
        %4992 = vmatprep.subr.bf16.mxu0 0
        %4993 = vmatpush1.bf16.msra.mxu0 %v4714
        %4994 = vmatprep.subr.bf16.mxu0 0
        %4995 = vmatpush2.bf16.msra.mxu0 %v4759
        %4996 = vmatprep.subr.bf16.mxu0 0
        %4997 = vmatpush2.bf16.msra.mxu0 %v4756
        %4998 = vmatprep.subr.bf16.mxu0 0
        %4999 = vmatpush2.bf16.msra.mxu0 %v4753
        %5000 = vmatprep.subr.bf16.mxu0 0
        %5001 = vmatpush2.bf16.msra.mxu0 %v4750
        %5002 = vmatprep.subr.bf16.mxu0 0
        %5003 = vmatpush2.bf16.msra.mxu0 %v4747
        %5004 = vmatprep.subr.bf16.mxu0 0
        %5005 = vmatpush2.bf16.msra.mxu0 %v4744
        %5006 = vmatprep.subr.bf16.mxu0 0
        %5007 = vmatpush2.bf16.msra.mxu0 %v4741
        %5008 = vmatprep.subr.bf16.mxu0 0
        %5009 = vmatpush2.bf16.msra.mxu0 %v4738
        %5010 = vmatprep.mubr.bf16.mxu0 %v4343
        %5011 = vmatmul.mubr.bf16.gmra.mxu0 %v4342
        %v5012 = vpop.f32.mrf.mxu0
        %v5013 = vadd.f32 %v4973, %v5012
        %v5014 = vpop.f32.mrf.mxu0
        %v5015 = vpop.f32.mrf.mxu0
        %v5016 = vpop.f32.mrf.mxu0
        %5017 = vdwg.mxu0
        %v5018 = vadd.f32 %v3360, %v4932
        %v5019 = vadd.f32 %v3362, %v4934
        %v5020 = vadd.f32 %v3441, %v5013
        %v5021 = vld [vmem:[#allocation10] sm:$0x7]
        %v5023 = vlaneseq
        %v5024 = vshrl.u32 %v5023, 7
        %v5025 = vsub.s32 0, %v5024
        %v5026 = vrot.slane %v5021, %v5025
        %v5027 = vlaneseq
        %v5028 = vshrl.u32 %v5027, 7
        %v5029 = vsub.s32 1, %v5028
        %v5030 = vrot.slane %v5021, %v5029
        %v5031 = vlaneseq
        %v5032 = vshrl.u32 %v5031, 7
        %v5033 = vsub.s32 2, %v5032
        %v5034 = vrot.slane %v5021, %v5033
        %v5038 = vadd.f32 %v5018, %v5026
        %v5039 = vadd.f32 %v5019, %v5030
        %v5040 = vadd.f32 %v5020, %v5034
        %5041 = vst [vmem:[%s294] sm:$0xff] %v5038
        %5042 = vst [vmem:[%s294 + $0x8] sm:$0xff] %v5039
        %5043 = vst [vmem:[%s294 + $0x10] sm:$0xff] %v5040
        %s5044 = sand.u32 %s142, 1
        %s5045 = scalar_lea.sflag [#allocation4], %s5044
        %s5046 = sand.u32 %s142, 1
        %s5047 = smul.addr %s5046, 24
        %s5048 = scalar_lea.vmem [#allocation11], %s5047
        // Predicated region
        $region61: #{tpu_custom_call.1} parent=39 // pred_check
          %p5049 = pneg %p152
        $region62: #{tpu_custom_call.1} parent=39 // pred_check_branch
          %5051 = sbr.rel (%p5049) target = $region64
        $region63: #{tpu_custom_call.1} parent=39 // pred_region
          %s5053 = ssub.s32 384, 384
          %5054 = vsyncadd %s5045, %s5053
          %s5055 = smul.addr %s24, 3
          %s5056 = smul.addr %s5055, 128
          %s5057 = scalar_lea.hbm %s5, %s5056
          %s5059 = sshll.u32 %s5048, 4
          %s5060 = int_to_ptr.vmem [resolvable:$true] %s5059
          %5062 = dma.vmem_to_hbm [thread:$0]  %s5060, 384, %s5057, %s5045
        $region64: #{tpu_custom_call.1} parent=39 // pred_fallthru
          _
      $region40: #{tpu_custom_call.1} parent=5 // pred_fallthru
        _
      %p5063 = scmp.le.s32.totalorder 2, %s19
      // Predicated region
      $region65: #{tpu_custom_call.1} parent=5 // pred_check
        %p5064 = pneg %p5063
      $region66: #{tpu_custom_call.1} parent=5 // pred_check_branch
        %5066 = sbr.rel (%p5064) target = $region68
      $region67: #{tpu_custom_call.1} parent=5 // pred_region
        %s5067 = ssub.s32 %s19, 2
        // Predicated region
        $region69: #{tpu_custom_call.1} parent=67 // pred_check
          %p5068 = pneg %p158
        $region70: #{tpu_custom_call.1} parent=67 // pred_check_branch
          %5070 = sbr.rel (%p5068) target = $region72
        $region71: #{tpu_custom_call.1} parent=67 // pred_region
          %s5071 = sand.u32 %s143, 1
          %s5072 = scalar_lea.sflag [#allocation4], %s5071
          %s5073 = sand.u32 %s143, 1
          %s5074 = smul.addr %s5073, 24
          %s5075 = scalar_lea.vmem [#allocation11], %s5074
          %5076 = dma.done %s5072, 384
        $region72: #{tpu_custom_call.1} parent=67 // pred_fallthru
          _
      $region68: #{tpu_custom_call.1} parent=5 // pred_fallthru
        _
    $region6: #{tpu_custom_call.1} parent=1 // loop_footer
      %s23 = sadd.s32 1, %s19
    $region7: #{tpu_custom_call.1} parent=1 // loop_footer_branch
      %18 = sbr.rel target = $region3
    $region8: #{tpu_custom_call.1} parent=1 // loop_exit
      _
    %5077 = vsyncpa [#allocation3], 1
    %s5078 = scalar_lea.sflag [#allocation3], 1
    %5079 = vsyncpa %s5078, 1
    %5080 = vsyncpa [#allocation6], 1
    %5081 = vsyncpa [#allocation9], 1
    %5082 = vsyncpa [#allocation4], 1
    %s5083 = scalar_lea.sflag [#allocation4], 1
    %5084 = vsyncpa %s5083, 1

</llo_original>
